<compile_context>
chip_gen: v5e
topology: v5e:2x2
jax: 0.10.0
libtpu: 0.0.40
codegen_flags: <defaults>
</compile_context>

<pallas_src>
import math
import functools

import jax
import jax.numpy as jnp
from jax import lax
from jax.experimental import pallas as pl
from jax.experimental.pallas import tpu as pltpu


def _pick_head_group(n_heads, head_dim, max_cols=512):
    """Largest divisor g of n_heads with g*head_dim <= max_cols (MXU fill)."""
    g = 1
    for cand in range(1, n_heads + 1):
        if n_heads % cand == 0 and cand * head_dim <= max_cols:
            g = cand
    return g


def _pick_block_q(Lq, requested):
    """Largest multiple-of-8 divisor of Lq <= requested, else the full Lq."""
    bq = min(requested, Lq)
    bq -= bq % 8
    while bq >= 8 and Lq % bq != 0:
        bq -= 8
    if bq < 8 or Lq % bq != 0:
        bq = Lq          # single full tile (block dim == full array dim is legal)
    return bq


def _mha_kernel(q_ref, k_ref, v_ref,
                wq_ref, bq_ref, wk_ref, bk_ref, wv_ref, bv_ref,
                wo_ref, bo_ref,
                x_ref, attn_ref,
                acc_ref, kc_ref, vc_ref,
                *, heads_per_group, head_dim):
    """One grid step = (batch b, query tile qi, head-group hg)."""
    qi = pl.program_id(1)
    hg = pl.program_id(2)
    last_hg = pl.num_programs(2) - 1

    # Grouped Q projection (bf16 MXU, f32 accumulate).  fc_q's weight/bias
    # already carry the 1/sqrt(head_dim) softmax scale (folded in the wrapper).
    Qg = (jnp.dot(q_ref[0], wq_ref[0], preferred_element_type=jnp.float32)
          + bq_ref[0])                                      # (block_q, G*hd) f32
    Qg = Qg.astype(jnp.bfloat16)

    # K/V projections: computed once per (batch, head-group) and cached in
    # persistent bf16 VMEM scratch; query tiles qi > 0 just reuse the cache.
    @pl.when(qi == 0)
    def _():
        Kg = (jnp.dot(k_ref[0], wk_ref[0], preferred_element_type=jnp.float32)
              + bk_ref[0])                                  # (Lk, G*hd) f32
        Vg = (jnp.dot(v_ref[0], wv_ref[0], preferred_element_type=jnp.float32)
              + bv_ref[0])
        kc_ref[hg] = Kg.astype(kc_ref.dtype)
        vc_ref[hg] = Vg.astype(vc_ref.dtype)

    Kg = kc_ref[hg]                                         # (Lk, G*hd) bf16
    Vg = vc_ref[hg]                                         # (Lk, G*hd) bf16

    @pl.when(hg == 0)
    def _():
        acc_ref[...] = jnp.zeros_like(acc_ref)

    # Per-head softmax + context inside the group (short unrolled loop).
    ctx_parts = []
    for g in range(heads_per_group):
        sl = slice(g * head_dim, (g + 1) * head_dim)
        # energy_h = Qh @ Kh^T, contracting the last dims (no K transpose).
        energy = lax.dot_general(
            Qg[:, sl], Kg[:, sl],
            dimension_numbers=(((1,), (1,)), ((), ())),
            preferred_element_type=jnp.float32)             # (block_q, Lk) f32
        # Numerically stable softmax in f32; reciprocal on the (idle) EUP.
        m = jnp.max(energy, axis=-1, keepdims=True)
        p = jnp.exp(energy - m)
        denom = jnp.sum(p, axis=-1, keepdims=True)
        attn = p * pl.reciprocal(denom, approx=True)        # (block_q, Lk) f32
        attn_ref[0, g] = attn.astype(attn_ref.dtype)
        ctx = jnp.dot(attn.astype(jnp.bfloat16), Vg[:, sl],
                      preferred_element_type=jnp.float32)   # (block_q, hd) f32
        ctx_parts.append(ctx.astype(jnp.bfloat16))

    # Fused output projection for the whole group: one well-filled
    # (block_q, G*hd) @ (G*hd, D) matmul accumulated across head groups.
    if heads_per_group == 1:
        ctx_group = ctx_parts[0]
    else:
        ctx_group = jnp.concatenate(ctx_parts, axis=-1)     # (block_q, G*hd) bf16
    acc_ref[...] += jnp.dot(ctx_group, wo_ref[0],
                            preferred_element_type=jnp.float32)

    @pl.when(hg == last_hg)
    def _():
        x_ref[0] = (acc_ref[...] + bo_ref[...]).astype(x_ref.dtype)


def multi_head_attention(query, key, value, params, *, n_heads,
                         block_q=256, attn_dtype=jnp.float32):
    """query: [B, Lq, D], key/value: [B, Lk, D]. Returns (x, attention)."""
    B, Lq, D = query.shape
    Lk = key.shape[1]
    assert D % n_heads == 0
    hd = D // n_heads

    wq, bq, wk, bk, wv, bv, wo, bo = params   # weights [in, out], biases [1, D]

    G = _pick_head_group(n_heads, hd)         # heads per grid step
    n_groups = n_heads // G
    Ghd = G * hd

    inv_scale = 1.0 / math.sqrt(float(hd))
    compute_dtype = jnp.bfloat16

    # Split weights into per-head-group slabs; cast to bf16 for the MXU.
    def split_out_groups(w):                  # (D, D) -> (n_groups, D, Ghd)
        return w.reshape(D, n_groups, Ghd).transpose(1, 0, 2).astype(compute_dtype)

    def split_bias(b):                        # (1, D) -> (n_groups, 1, Ghd) f32
        return b.reshape(n_groups, Ghd)[:, None, :].astype(jnp.float32)

    # Fold the softmax scale into fc_q (weight AND bias) — free VPU savings.
    wq_g = split_out_groups(wq * inv_scale)
    wk_g = split_out_groups(wk)
    wv_g = split_out_groups(wv)
    bq_g = split_bias(bq * inv_scale)
    bk_g = split_bias(bk)
    bv_g = split_bias(bv)
    wo_g = wo.reshape(n_groups, Ghd, D).astype(compute_dtype)  # fc_o in-dim is head-major
    bo_f = bo.astype(jnp.float32)

    block_q = _pick_block_q(Lq, block_q)
    nq = Lq // block_q

    q_in = query.astype(compute_dtype)
    k_in = key.astype(compute_dtype)
    v_in = value.astype(compute_dtype)

    kernel = functools.partial(_mha_kernel, heads_per_group=G, head_dim=hd)

    w_spec = pl.BlockSpec((1, D, Ghd), lambda b, qi, hg: (hg, 0, 0))
    b_spec = pl.BlockSpec((1, 1, Ghd), lambda b, qi, hg: (hg, 0, 0))

    out_shapes = (
        jax.ShapeDtypeStruct((B, Lq, D), query.dtype),
        jax.ShapeDtypeStruct((B, n_heads, Lq, Lk), attn_dtype),
    )

    # --- VMEM budget: double-buffered pipeline blocks + persistent scratch.
    attn_isz = jnp.dtype(attn_dtype).itemsize
    x_isz = jnp.dtype(query.dtype).itemsize
    blk_bytes = (block_q * D * 2                 # q tile (bf16)
                 + 2 * Lk * D * 2                # k, v (bf16)
                 + 4 * D * Ghd * 2               # wq/wk/wv/wo group slabs (bf16)
                 + 3 * Ghd * 4 + D * 4           # biases (f32)
                 + block_q * D * x_isz           # x out block
                 + G * block_q * Lk * attn_isz)  # attention out block
    scratch_bytes = block_q * D * 4 + 2 * n_groups * Lk * Ghd * 2
    vmem_limit = int(min(64 << 20,
                         max(2 * blk_bytes + scratch_bytes + (2 << 20), 8 << 20)))

    # Advisory cost estimate (weights counted once — matches the grid-invariant
    # per-group DMA pattern; K/V projections counted once per batch).
    flops = (2 * B * D * D * (Lq + 2 * Lk)       # q/k/v projections
             + 4 * B * Lq * Lk * D               # QK^T + attn@V over all heads
             + 2 * B * Lq * D * D)               # output projection
    transcendentals = B * n_heads * Lq * Lk
    bytes_accessed = ((B * Lq * D + 2 * B * Lk * D) * 2       # bf16 activations
                      + 4 * D * D * 2 + 4 * D * 4             # weights + biases
                      + B * Lq * D * x_isz
                      + B * n_heads * Lq * Lk * attn_isz)
    cost = pl.CostEstimate(flops=int(flops),
                           transcendentals=int(transcendentals),
                           bytes_accessed=int(bytes_accessed))

    # The persistent K/V cache is reused across q tiles, so that axis must be
    # sequential ("arbitrary") whenever nq > 1; batch stays "parallel".
    q_axis_sem = "parallel" if nq == 1 else "arbitrary"

    return pl.pallas_call(
        kernel,
        out_shape=out_shapes,
        grid_spec=pltpu.PrefetchScalarGridSpec(
            num_scalar_prefetch=0,
            grid=(B, nq, n_groups),
            in_specs=[
                pl.BlockSpec((1, block_q, D), lambda b, qi, hg: (b, qi, 0)),  # query
                pl.BlockSpec((1, Lk, D), lambda b, qi, hg: (b, 0, 0)),        # key
                pl.BlockSpec((1, Lk, D), lambda b, qi, hg: (b, 0, 0)),        # value
                w_spec, b_spec,                                               # fc_q
                w_spec, b_spec,                                               # fc_k
                w_spec, b_spec,                                               # fc_v
                pl.BlockSpec((1, Ghd, D), lambda b, qi, hg: (hg, 0, 0)),      # fc_o W
                pl.BlockSpec((1, D), lambda b, qi, hg: (0, 0)),               # fc_o b
            ],
            out_specs=[
                pl.BlockSpec((1, block_q, D), lambda b, qi, hg: (b, qi, 0)),
                pl.BlockSpec((1, G, block_q, Lk), lambda b, qi, hg: (b, hg, qi, 0)),
            ],
            scratch_shapes=[
                pltpu.VMEM((block_q, D), jnp.float32),            # fc_o accumulator
                pltpu.VMEM((n_groups, Lk, Ghd), compute_dtype),   # cached K projections
                pltpu.VMEM((n_groups, Lk, Ghd), compute_dtype),   # cached V projections
            ],
        ),
        compiler_params=pltpu.CompilerParams(
            dimension_semantics=("parallel", q_axis_sem, "arbitrary"),
            vmem_limit_bytes=vmem_limit),
        cost_estimate=cost,
    )(q_in, k_in, v_in,
      wq_g, bq_g, wk_g, bk_g, wv_g, bv_g, wo_g, bo_f)


def _reference(query, key, value, params, *, n_heads):
    """Plain-JAX f32 reference mirroring the PyTorch forward (eval, mask=None)."""
    wq, bq, wk, bk, wv, bv, wo, bo = params
    B, Lq, D = query.shape
    Lk = key.shape[1]
    hd = D // n_heads
    scale = math.sqrt(hd)

    Q = query @ wq + bq
    K = key @ wk + bk
    V = value @ wv + bv
    Q = Q.reshape(B, Lq, n_heads, hd).transpose(0, 2, 1, 3)
    K = K.reshape(B, Lk, n_heads, hd).transpose(0, 2, 1, 3)
    V = V.reshape(B, Lk, n_heads, hd).transpose(0, 2, 1, 3)
    energy = jnp.einsum("bhqd,bhkd->bhqk", Q, K) / scale
    attention = jax.nn.softmax(energy, axis=-1)
    x = jnp.einsum("bhqk,bhkd->bhqd", attention, V)
    x = x.transpose(0, 2, 1, 3).reshape(B, Lq, D)
    x = x @ wo + bo
    return x, attention


def _init_linear(key, in_dim, out_dim):
    """Deterministic init mimicking torch.nn.Linear defaults (uniform ±1/sqrt(in))."""
    k_w, k_b = jax.random.split(key)
    bound = 1.0 / math.sqrt(in_dim)
    # Stored already transposed: [in, out] so the kernel does x @ W + b.
    w = jax.random.uniform(k_w, (in_dim, out_dim), jnp.float32, -bound, bound)
    b = jax.random.uniform(k_b, (1, out_dim), jnp.float32, -bound, bound)
    return w, b


if __name__ == "__main__":
    # Small but (8,128)-aligned, lane-dense demo shapes; B*nq >= 2 for megacore.
    B, Lq, Lk = 2, 128, 128
    hid_dim, n_heads = 128, 4

    root = jax.random.PRNGKey(0)
    keys = jax.random.split(root, 8)

    query = jax.random.normal(keys[0], (B, Lq, hid_dim), jnp.float32)
    key_in = jax.random.normal(keys[1], (B, Lk, hid_dim), jnp.float32)
    value = jax.random.normal(keys[2], (B, Lk, hid_dim), jnp.float32)

    wq, bq = _init_linear(keys[3], hid_dim, hid_dim)
    wk, bk = _init_linear(keys[4], hid_dim, hid_dim)
    wv, bv = _init_linear(keys[5], hid_dim, hid_dim)
    wo, bo = _init_linear(keys[6], hid_dim, hid_dim)
    params = (wq, bq, wk, bk, wv, bv, wo, bo)

    x_out, attn_out = multi_head_attention(query, key_in, value, params,
                                           n_heads=n_heads)
    jax.block_until_ready((x_out, attn_out))

    x_ref, attn_ref = _reference(query, key_in, value, params, n_heads=n_heads)
    assert x_out.shape == (B, Lq, hid_dim)
    assert attn_out.shape == (B, n_heads, Lq, Lk)
    # Tolerances account for bf16 MXU operands and the approximate (EUP)
    # reciprocal in the softmax; estimated errors are ~1e-3 absolute.
    assert jnp.allclose(x_out, x_ref, atol=1e-2, rtol=1e-2)
    assert jnp.allclose(attn_out, attn_ref, atol=5e-3, rtol=5e-3)

    print("KERNEL_OK")
</pallas_src>

<mosaic_0001>
module attributes {stable_mosaic.version = 11 : i64} {
  func.func @_mha_kernel(%arg0: i32, %arg1: i32, %arg2: i32, %arg3: memref<1x128x128xbf16, #tpu.memory_space<vmem>>, %arg4: memref<1x128x128xbf16, #tpu.memory_space<vmem>>, %arg5: memref<1x128x128xbf16, #tpu.memory_space<vmem>>, %arg6: memref<1x128x128xbf16, #tpu.memory_space<vmem>>, %arg7: memref<1x1x128xf32, #tpu.memory_space<vmem>>, %arg8: memref<1x128x128xbf16, #tpu.memory_space<vmem>>, %arg9: memref<1x1x128xf32, #tpu.memory_space<vmem>>, %arg10: memref<1x128x128xbf16, #tpu.memory_space<vmem>>, %arg11: memref<1x1x128xf32, #tpu.memory_space<vmem>>, %arg12: memref<1x128x128xbf16, #tpu.memory_space<vmem>>, %arg13: memref<1x128xf32, #tpu.memory_space<vmem>>, %arg14: memref<1x128x128xf32, #tpu.memory_space<vmem>>, %arg15: memref<1x4x128x128xf32, #tpu.memory_space<vmem>>, %arg16: memref<128x128xf32, #tpu.memory_space<vmem>>, %arg17: memref<1x128x128xbf16, #tpu.memory_space<vmem>>, %arg18: memref<1x128x128xbf16, #tpu.memory_space<vmem>>) attributes {dimension_semantics = [#tpu.dimension_semantics<parallel>, #tpu.dimension_semantics<parallel>, #tpu.dimension_semantics<arbitrary>], iteration_bounds = array<i64: 2, 1, 1>, scalar_prefetch = 0 : i64, scratch_operands = 3 : i64, tpu.core_type = #tpu.core_type<tc>, window_params = [{transform_indices = @transform_0, window_bounds = array<i64: 1, 128, 128>}, {transform_indices = @transform_1, window_bounds = array<i64: 1, 128, 128>}, {transform_indices = @transform_2, window_bounds = array<i64: 1, 128, 128>}, {transform_indices = @transform_3, window_bounds = array<i64: 1, 128, 128>}, {transform_indices = @transform_4, window_bounds = array<i64: 1, 1, 128>}, {transform_indices = @transform_5, window_bounds = array<i64: 1, 128, 128>}, {transform_indices = @transform_6, window_bounds = array<i64: 1, 1, 128>}, {transform_indices = @transform_7, window_bounds = array<i64: 1, 128, 128>}, {transform_indices = @transform_8, window_bounds = array<i64: 1, 1, 128>}, {transform_indices = @transform_9, window_bounds = array<i64: 1, 128, 128>}, {pipeline_mode = #tpu.pipeline_mode<synchronous>, transform_indices = @transform_10, window_bounds = array<i64: 1, 128>}, {transform_indices = @transform_11, window_bounds = array<i64: 1, 128, 128>}, {transform_indices = @transform_12, window_bounds = array<i64: 1, 4, 128, 128>}]} {
    %c0 = arith.constant 0 : index
    %c0_0 = arith.constant 0 : index
    %c0_1 = arith.constant 0 : index
    %0 = vector.load %arg3[%c0, %c0_0, %c0_1] : memref<1x128x128xbf16, #tpu.memory_space<vmem>>, vector<1x128x128xbf16>
    %1 = vector.shape_cast %0 : vector<1x128x128xbf16> to vector<128x128xbf16>
    %c0_2 = arith.constant 0 : index
    %c0_3 = arith.constant 0 : index
    %c0_4 = arith.constant 0 : index
    %2 = vector.load %arg6[%c0_2, %c0_3, %c0_4] : memref<1x128x128xbf16, #tpu.memory_space<vmem>>, vector<1x128x128xbf16>
    %3 = vector.shape_cast %2 : vector<1x128x128xbf16> to vector<128x128xbf16>
    %cst = arith.constant dense<0.000000e+00> : vector<128x128xf32>
    %4 = tpu.matmul %1, %3, %cst {dimension_numbers = #tpu.dot_dimension_numbers<[1], [0], [0], [1], [0, 0, 1, 1], [], []>} : vector<128x128xbf16>, vector<128x128xbf16>, vector<128x128xf32> -> vector<128x128xf32>
    %c0_5 = arith.constant 0 : index
    %c0_6 = arith.constant 0 : index
    %c0_7 = arith.constant 0 : index
    %5 = vector.load %arg7[%c0_5, %c0_6, %c0_7] : memref<1x1x128xf32, #tpu.memory_space<vmem>>, vector<1x1x128xf32>
    %6 = vector.shape_cast %5 : vector<1x1x128xf32> to vector<1x128xf32>
    %7 = vector.broadcast %6 : vector<1x128xf32> to vector<128x128xf32>
    %8 = arith.addf %4, %7 : vector<128x128xf32>
    %9 = arith.truncf %8 : vector<128x128xf32> to vector<128x128xbf16>
    %c0_i32 = arith.constant 0 : i32
    %10 = arith.cmpi eq, %arg1, %c0_i32 : i32
    %11 = arith.extui %10 : i1 to i32
    %c0_i32_8 = arith.constant 0 : i32
    %12 = arith.cmpi ne, %11, %c0_i32_8 : i32
    scf.if %12 {
      %c0_54 = arith.constant 0 : index
      %c0_55 = arith.constant 0 : index
      %c0_56 = arith.constant 0 : index
      %112 = vector.load %arg4[%c0_54, %c0_55, %c0_56] : memref<1x128x128xbf16, #tpu.memory_space<vmem>>, vector<1x128x128xbf16>
      %113 = vector.shape_cast %112 : vector<1x128x128xbf16> to vector<128x128xbf16>
      %c0_57 = arith.constant 0 : index
      %c0_58 = arith.constant 0 : index
      %c0_59 = arith.constant 0 : index
      %114 = vector.load %arg8[%c0_57, %c0_58, %c0_59] : memref<1x128x128xbf16, #tpu.memory_space<vmem>>, vector<1x128x128xbf16>
      %115 = vector.shape_cast %114 : vector<1x128x128xbf16> to vector<128x128xbf16>
      %cst_60 = arith.constant dense<0.000000e+00> : vector<128x128xf32>
      %116 = tpu.matmul %113, %115, %cst_60 {dimension_numbers = #tpu.dot_dimension_numbers<[1], [0], [0], [1], [0, 0, 1, 1], [], []>} : vector<128x128xbf16>, vector<128x128xbf16>, vector<128x128xf32> -> vector<128x128xf32>
      %c0_61 = arith.constant 0 : index
      %c0_62 = arith.constant 0 : index
      %c0_63 = arith.constant 0 : index
      %117 = vector.load %arg9[%c0_61, %c0_62, %c0_63] : memref<1x1x128xf32, #tpu.memory_space<vmem>>, vector<1x1x128xf32>
      %118 = vector.shape_cast %117 : vector<1x1x128xf32> to vector<1x128xf32>
      %119 = vector.broadcast %118 : vector<1x128xf32> to vector<128x128xf32>
      %120 = arith.addf %116, %119 : vector<128x128xf32>
      %c0_64 = arith.constant 0 : index
      %c0_65 = arith.constant 0 : index
      %c0_66 = arith.constant 0 : index
      %121 = vector.load %arg5[%c0_64, %c0_65, %c0_66] : memref<1x128x128xbf16, #tpu.memory_space<vmem>>, vector<1x128x128xbf16>
      %122 = vector.shape_cast %121 : vector<1x128x128xbf16> to vector<128x128xbf16>
      %c0_67 = arith.constant 0 : index
      %c0_68 = arith.constant 0 : index
      %c0_69 = arith.constant 0 : index
      %123 = vector.load %arg10[%c0_67, %c0_68, %c0_69] : memref<1x128x128xbf16, #tpu.memory_space<vmem>>, vector<1x128x128xbf16>
      %124 = vector.shape_cast %123 : vector<1x128x128xbf16> to vector<128x128xbf16>
      %cst_70 = arith.constant dense<0.000000e+00> : vector<128x128xf32>
      %125 = tpu.matmul %122, %124, %cst_70 {dimension_numbers = #tpu.dot_dimension_numbers<[1], [0], [0], [1], [0, 0, 1, 1], [], []>} : vector<128x128xbf16>, vector<128x128xbf16>, vector<128x128xf32> -> vector<128x128xf32>
      %c0_71 = arith.constant 0 : index
      %c0_72 = arith.constant 0 : index
      %c0_73 = arith.constant 0 : index
      %126 = vector.load %arg11[%c0_71, %c0_72, %c0_73] : memref<1x1x128xf32, #tpu.memory_space<vmem>>, vector<1x1x128xf32>
      %127 = vector.shape_cast %126 : vector<1x1x128xf32> to vector<1x128xf32>
      %128 = vector.broadcast %127 : vector<1x128xf32> to vector<128x128xf32>
      %129 = arith.addf %125, %128 : vector<128x128xf32>
      %130 = arith.truncf %120 : vector<128x128xf32> to vector<128x128xbf16>
      %131 = arith.index_cast %arg2 : i32 to index
      %c0_74 = arith.constant 0 : index
      %c0_75 = arith.constant 0 : index
      %132 = vector.load %arg17[%131, %c0_74, %c0_75] : memref<1x128x128xbf16, #tpu.memory_space<vmem>>, vector<1x128x128xbf16>
      %133 = vector.shape_cast %132 : vector<1x128x128xbf16> to vector<128x128xbf16>
      %134 = vector.shape_cast %130 : vector<128x128xbf16> to vector<1x128x128xbf16>
      tpu.vector_store %arg17[%131, %c0_74, %c0_75], %134 {strides = array<i32>} : memref<1x128x128xbf16, #tpu.memory_space<vmem>>, vector<1x128x128xbf16>,
      %135 = arith.truncf %129 : vector<128x128xf32> to vector<128x128xbf16>
      %136 = arith.index_cast %arg2 : i32 to index
      %c0_76 = arith.constant 0 : index
      %c0_77 = arith.constant 0 : index
      %137 = vector.load %arg18[%136, %c0_76, %c0_77] : memref<1x128x128xbf16, #tpu.memory_space<vmem>>, vector<1x128x128xbf16>
      %138 = vector.shape_cast %137 : vector<1x128x128xbf16> to vector<128x128xbf16>
      %139 = vector.shape_cast %135 : vector<128x128xbf16> to vector<1x128x128xbf16>
      tpu.vector_store %arg18[%136, %c0_76, %c0_77], %139 {strides = array<i32>} : memref<1x128x128xbf16, #tpu.memory_space<vmem>>, vector<1x128x128xbf16>,
    } else {
    }
    %13 = arith.index_cast %arg2 : i32 to index
    %c0_9 = arith.constant 0 : index
    %c0_10 = arith.constant 0 : index
    %14 = vector.load %arg17[%13, %c0_9, %c0_10] : memref<1x128x128xbf16, #tpu.memory_space<vmem>>, vector<1x128x128xbf16>
    %15 = vector.shape_cast %14 : vector<1x128x128xbf16> to vector<128x128xbf16>
    %16 = arith.index_cast %arg2 : i32 to index
    %c0_11 = arith.constant 0 : index
    %c0_12 = arith.constant 0 : index
    %17 = vector.load %arg18[%16, %c0_11, %c0_12] : memref<1x128x128xbf16, #tpu.memory_space<vmem>>, vector<1x128x128xbf16>
    %18 = vector.shape_cast %17 : vector<1x128x128xbf16> to vector<128x128xbf16>
    %c0_i32_13 = arith.constant 0 : i32
    %19 = arith.cmpi eq, %arg2, %c0_i32_13 : i32
    %20 = arith.extui %19 : i1 to i32
    %c0_i32_14 = arith.constant 0 : i32
    %21 = arith.cmpi ne, %20, %c0_i32_14 : i32
    scf.if %21 {
      %cst_54 = arith.constant 0.000000e+00 : f32
      %112 = vector.broadcast %cst_54 : f32 to vector<128x128xf32>
      %c0_55 = arith.constant 0 : index
      %c0_56 = arith.constant 0 : index
      %113 = vector.load %arg16[%c0_55, %c0_56] : memref<128x128xf32, #tpu.memory_space<vmem>>, vector<128x128xf32>
      tpu.vector_store %arg16[%c0_55, %c0_56], %112 {strides = array<i32>} : memref<128x128xf32, #tpu.memory_space<vmem>>, vector<128x128xf32>,
    } else {
    }
    %22 = vector.extract_strided_slice %9 {offsets = [0, 0], sizes = [128, 32], strides = [1, 1]} : vector<128x128xbf16> to vector<128x32xbf16>
    %23 = vector.extract_strided_slice %15 {offsets = [0, 0], sizes = [128, 32], strides = [1, 1]} : vector<128x128xbf16> to vector<128x32xbf16>
    %cst_15 = arith.constant dense<0.000000e+00> : vector<128x128xf32>
    %24 = tpu.matmul %22, %23, %cst_15 {dimension_numbers = #tpu.dot_dimension_numbers<[1], [1], [0], [0], [0, 0, 1, 0], [], []>} : vector<128x32xbf16>, vector<128x32xbf16>, vector<128x128xf32> -> vector<128x128xf32>
    %cst_16 = arith.constant dense<0xFF800000> : vector<128xf32>
    %25 = vector.multi_reduction <maximumf>, %24, %cst_16 [1] : vector<128x128xf32> to vector<128xf32>
    %26 = vector.shape_cast %25 : vector<128xf32> to vector<128x1xf32>
    %27 = vector.broadcast %26 : vector<128x1xf32> to vector<128x128xf32>
    %28 = arith.subf %24, %27 : vector<128x128xf32>
    %29 = math.exp %28 : vector<128x128xf32>
    %cst_17 = arith.constant dense<0.000000e+00> : vector<128xf32>
    %30 = vector.multi_reduction <add>, %29, %cst_17 [1] : vector<128x128xf32> to vector<128xf32>
    %31 = vector.shape_cast %30 : vector<128xf32> to vector<128x1xf32>
    %32 = tpu.reciprocal %31 {approx = true} : vector<128x1xf32> -> vector<128x1xf32>
    %33 = vector.broadcast %32 : vector<128x1xf32> to vector<128x128xf32>
    %34 = arith.mulf %29, %33 : vector<128x128xf32>
    %c0_18 = arith.constant 0 : index
    %c0_19 = arith.constant 0 : index
    %c0_20 = arith.constant 0 : index
    %c0_21 = arith.constant 0 : index
    %35 = vector.load %arg15[%c0_18, %c0_19, %c0_20, %c0_21] : memref<1x4x128x128xf32, #tpu.memory_space<vmem>>, vector<1x1x128x128xf32>
    %36 = vector.shape_cast %35 : vector<1x1x128x128xf32> to vector<128x128xf32>
    %37 = vector.shape_cast %34 : vector<128x128xf32> to vector<1x1x128x128xf32>
    tpu.vector_store %arg15[%c0_18, %c0_19, %c0_20, %c0_21], %37 {strides = array<i32>} : memref<1x4x128x128xf32, #tpu.memory_space<vmem>>, vector<1x1x128x128xf32>,
    %38 = arith.truncf %34 : vector<128x128xf32> to vector<128x128xbf16>
    %39 = vector.extract_strided_slice %18 {offsets = [0, 0], sizes = [128, 32], strides = [1, 1]} : vector<128x128xbf16> to vector<128x32xbf16>
    %cst_22 = arith.constant dense<0.000000e+00> : vector<128x32xf32>
    %40 = tpu.matmul %38, %39, %cst_22 {dimension_numbers = #tpu.dot_dimension_numbers<[1], [0], [0], [1], [0, 0, 1, 1], [], []>} : vector<128x128xbf16>, vector<128x32xbf16>, vector<128x32xf32> -> vector<128x32xf32>
    %41 = arith.truncf %40 : vector<128x32xf32> to vector<128x32xbf16>
    %42 = vector.extract_strided_slice %9 {offsets = [0, 32], sizes = [128, 32], strides = [1, 1]} : vector<128x128xbf16> to vector<128x32xbf16>
    %43 = vector.extract_strided_slice %15 {offsets = [0, 32], sizes = [128, 32], strides = [1, 1]} : vector<128x128xbf16> to vector<128x32xbf16>
    %cst_23 = arith.constant dense<0.000000e+00> : vector<128x128xf32>
    %44 = tpu.matmul %42, %43, %cst_23 {dimension_numbers = #tpu.dot_dimension_numbers<[1], [1], [0], [0], [0, 0, 1, 0], [], []>} : vector<128x32xbf16>, vector<128x32xbf16>, vector<128x128xf32> -> vector<128x128xf32>
    %cst_24 = arith.constant dense<0xFF800000> : vector<128xf32>
    %45 = vector.multi_reduction <maximumf>, %44, %cst_24 [1] : vector<128x128xf32> to vector<128xf32>
    %46 = vector.shape_cast %45 : vector<128xf32> to vector<128x1xf32>
    %47 = vector.broadcast %46 : vector<128x1xf32> to vector<128x128xf32>
    %48 = arith.subf %44, %47 : vector<128x128xf32>
    %49 = math.exp %48 : vector<128x128xf32>
    %cst_25 = arith.constant dense<0.000000e+00> : vector<128xf32>
    %50 = vector.multi_reduction <add>, %49, %cst_25 [1] : vector<128x128xf32> to vector<128xf32>
    %51 = vector.shape_cast %50 : vector<128xf32> to vector<128x1xf32>
    %52 = tpu.reciprocal %51 {approx = true} : vector<128x1xf32> -> vector<128x1xf32>
    %53 = vector.broadcast %52 : vector<128x1xf32> to vector<128x128xf32>
    %54 = arith.mulf %49, %53 : vector<128x128xf32>
    %c0_26 = arith.constant 0 : index
    %c1 = arith.constant 1 : index
    %c0_27 = arith.constant 0 : index
    %c0_28 = arith.constant 0 : index
    %55 = vector.load %arg15[%c0_26, %c1, %c0_27, %c0_28] : memref<1x4x128x128xf32, #tpu.memory_space<vmem>>, vector<1x1x128x128xf32>
    %56 = vector.shape_cast %55 : vector<1x1x128x128xf32> to vector<128x128xf32>
    %57 = vector.shape_cast %54 : vector<128x128xf32> to vector<1x1x128x128xf32>
    tpu.vector_store %arg15[%c0_26, %c1, %c0_27, %c0_28], %57 {strides = array<i32>} : memref<1x4x128x128xf32, #tpu.memory_space<vmem>>, vector<1x1x128x128xf32>,
    %58 = arith.truncf %54 : vector<128x128xf32> to vector<128x128xbf16>
    %59 = vector.extract_strided_slice %18 {offsets = [0, 32], sizes = [128, 32], strides = [1, 1]} : vector<128x128xbf16> to vector<128x32xbf16>
    %cst_29 = arith.constant dense<0.000000e+00> : vector<128x32xf32>
    %60 = tpu.matmul %58, %59, %cst_29 {dimension_numbers = #tpu.dot_dimension_numbers<[1], [0], [0], [1], [0, 0, 1, 1], [], []>} : vector<128x128xbf16>, vector<128x32xbf16>, vector<128x32xf32> -> vector<128x32xf32>
    %61 = arith.truncf %60 : vector<128x32xf32> to vector<128x32xbf16>
    %62 = vector.extract_strided_slice %9 {offsets = [0, 64], sizes = [128, 32], strides = [1, 1]} : vector<128x128xbf16> to vector<128x32xbf16>
    %63 = vector.extract_strided_slice %15 {offsets = [0, 64], sizes = [128, 32], strides = [1, 1]} : vector<128x128xbf16> to vector<128x32xbf16>
    %cst_30 = arith.constant dense<0.000000e+00> : vector<128x128xf32>
    %64 = tpu.matmul %62, %63, %cst_30 {dimension_numbers = #tpu.dot_dimension_numbers<[1], [1], [0], [0], [0, 0, 1, 0], [], []>} : vector<128x32xbf16>, vector<128x32xbf16>, vector<128x128xf32> -> vector<128x128xf32>
    %cst_31 = arith.constant dense<0xFF800000> : vector<128xf32>
    %65 = vector.multi_reduction <maximumf>, %64, %cst_31 [1] : vector<128x128xf32> to vector<128xf32>
    %66 = vector.shape_cast %65 : vector<128xf32> to vector<128x1xf32>
    %67 = vector.broadcast %66 : vector<128x1xf32> to vector<128x128xf32>
    %68 = arith.subf %64, %67 : vector<128x128xf32>
    %69 = math.exp %68 : vector<128x128xf32>
    %cst_32 = arith.constant dense<0.000000e+00> : vector<128xf32>
    %70 = vector.multi_reduction <add>, %69, %cst_32 [1] : vector<128x128xf32> to vector<128xf32>
    %71 = vector.shape_cast %70 : vector<128xf32> to vector<128x1xf32>
    %72 = tpu.reciprocal %71 {approx = true} : vector<128x1xf32> -> vector<128x1xf32>
    %73 = vector.broadcast %72 : vector<128x1xf32> to vector<128x128xf32>
    %74 = arith.mulf %69, %73 : vector<128x128xf32>
    %c0_33 = arith.constant 0 : index
    %c2 = arith.constant 2 : index
    %c0_34 = arith.constant 0 : index
    %c0_35 = arith.constant 0 : index
    %75 = vector.load %arg15[%c0_33, %c2, %c0_34, %c0_35] : memref<1x4x128x128xf32, #tpu.memory_space<vmem>>, vector<1x1x128x128xf32>
    %76 = vector.shape_cast %75 : vector<1x1x128x128xf32> to vector<128x128xf32>
    %77 = vector.shape_cast %74 : vector<128x128xf32> to vector<1x1x128x128xf32>
    tpu.vector_store %arg15[%c0_33, %c2, %c0_34, %c0_35], %77 {strides = array<i32>} : memref<1x4x128x128xf32, #tpu.memory_space<vmem>>, vector<1x1x128x128xf32>,
    %78 = arith.truncf %74 : vector<128x128xf32> to vector<128x128xbf16>
    %79 = vector.extract_strided_slice %18 {offsets = [0, 64], sizes = [128, 32], strides = [1, 1]} : vector<128x128xbf16> to vector<128x32xbf16>
    %cst_36 = arith.constant dense<0.000000e+00> : vector<128x32xf32>
    %80 = tpu.matmul %78, %79, %cst_36 {dimension_numbers = #tpu.dot_dimension_numbers<[1], [0], [0], [1], [0, 0, 1, 1], [], []>} : vector<128x128xbf16>, vector<128x32xbf16>, vector<128x32xf32> -> vector<128x32xf32>
    %81 = arith.truncf %80 : vector<128x32xf32> to vector<128x32xbf16>
    %82 = vector.extract_strided_slice %9 {offsets = [0, 96], sizes = [128, 32], strides = [1, 1]} : vector<128x128xbf16> to vector<128x32xbf16>
    %83 = vector.extract_strided_slice %15 {offsets = [0, 96], sizes = [128, 32], strides = [1, 1]} : vector<128x128xbf16> to vector<128x32xbf16>
    %cst_37 = arith.constant dense<0.000000e+00> : vector<128x128xf32>
    %84 = tpu.matmul %82, %83, %cst_37 {dimension_numbers = #tpu.dot_dimension_numbers<[1], [1], [0], [0], [0, 0, 1, 0], [], []>} : vector<128x32xbf16>, vector<128x32xbf16>, vector<128x128xf32> -> vector<128x128xf32>
    %cst_38 = arith.constant dense<0xFF800000> : vector<128xf32>
    %85 = vector.multi_reduction <maximumf>, %84, %cst_38 [1] : vector<128x128xf32> to vector<128xf32>
    %86 = vector.shape_cast %85 : vector<128xf32> to vector<128x1xf32>
    %87 = vector.broadcast %86 : vector<128x1xf32> to vector<128x128xf32>
    %88 = arith.subf %84, %87 : vector<128x128xf32>
    %89 = math.exp %88 : vector<128x128xf32>
    %cst_39 = arith.constant dense<0.000000e+00> : vector<128xf32>
    %90 = vector.multi_reduction <add>, %89, %cst_39 [1] : vector<128x128xf32> to vector<128xf32>
    %91 = vector.shape_cast %90 : vector<128xf32> to vector<128x1xf32>
    %92 = tpu.reciprocal %91 {approx = true} : vector<128x1xf32> -> vector<128x1xf32>
    %93 = vector.broadcast %92 : vector<128x1xf32> to vector<128x128xf32>
    %94 = arith.mulf %89, %93 : vector<128x128xf32>
    %c0_40 = arith.constant 0 : index
    %c3 = arith.constant 3 : index
    %c0_41 = arith.constant 0 : index
    %c0_42 = arith.constant 0 : index
    %95 = vector.load %arg15[%c0_40, %c3, %c0_41, %c0_42] : memref<1x4x128x128xf32, #tpu.memory_space<vmem>>, vector<1x1x128x128xf32>
    %96 = vector.shape_cast %95 : vector<1x1x128x128xf32> to vector<128x128xf32>
    %97 = vector.shape_cast %94 : vector<128x128xf32> to vector<1x1x128x128xf32>
    tpu.vector_store %arg15[%c0_40, %c3, %c0_41, %c0_42], %97 {strides = array<i32>} : memref<1x4x128x128xf32, #tpu.memory_space<vmem>>, vector<1x1x128x128xf32>,
    %98 = arith.truncf %94 : vector<128x128xf32> to vector<128x128xbf16>
    %99 = vector.extract_strided_slice %18 {offsets = [0, 96], sizes = [128, 32], strides = [1, 1]} : vector<128x128xbf16> to vector<128x32xbf16>
    %cst_43 = arith.constant dense<0.000000e+00> : vector<128x32xf32>
    %100 = tpu.matmul %98, %99, %cst_43 {dimension_numbers = #tpu.dot_dimension_numbers<[1], [0], [0], [1], [0, 0, 1, 1], [], []>} : vector<128x128xbf16>, vector<128x32xbf16>, vector<128x32xf32> -> vector<128x32xf32>
    %101 = arith.truncf %100 : vector<128x32xf32> to vector<128x32xbf16>
    %102 = tpu.concatenate %41, %61, %81, %101 in 1 : vector<128x32xbf16>, vector<128x32xbf16>, vector<128x32xbf16>, vector<128x32xbf16> -> vector<128x128xbf16>
    %c0_44 = arith.constant 0 : index
    %c0_45 = arith.constant 0 : index
    %103 = vector.load %arg16[%c0_44, %c0_45] : memref<128x128xf32, #tpu.memory_space<vmem>>, vector<128x128xf32>
    %c0_46 = arith.constant 0 : index
    %c0_47 = arith.constant 0 : index
    %c0_48 = arith.constant 0 : index
    %104 = vector.load %arg12[%c0_46, %c0_47, %c0_48] : memref<1x128x128xbf16, #tpu.memory_space<vmem>>, vector<1x128x128xbf16>
    %105 = vector.shape_cast %104 : vector<1x128x128xbf16> to vector<128x128xbf16>
    %cst_49 = arith.constant dense<0.000000e+00> : vector<128x128xf32>
    %106 = tpu.matmul %102, %105, %cst_49 {dimension_numbers = #tpu.dot_dimension_numbers<[1], [0], [0], [1], [0, 0, 1, 1], [], []>} : vector<128x128xbf16>, vector<128x128xbf16>, vector<128x128xf32> -> vector<128x128xf32>
    %107 = arith.addf %103, %106 : vector<128x128xf32>
    %c0_50 = arith.constant 0 : index
    %c0_51 = arith.constant 0 : index
    %108 = vector.load %arg16[%c0_50, %c0_51] : memref<128x128xf32, #tpu.memory_space<vmem>>, vector<128x128xf32>
    tpu.vector_store %arg16[%c0_50, %c0_51], %107 {strides = array<i32>} : memref<128x128xf32, #tpu.memory_space<vmem>>, vector<128x128xf32>,
    %c0_i32_52 = arith.constant 0 : i32
    %109 = arith.cmpi eq, %arg2, %c0_i32_52 : i32
    %110 = arith.extui %109 : i1 to i32
    %c0_i32_53 = arith.constant 0 : i32
    %111 = arith.cmpi ne, %110, %c0_i32_53 : i32
    scf.if %111 {
      %c0_54 = arith.constant 0 : index
      %c0_55 = arith.constant 0 : index
      %112 = vector.load %arg16[%c0_54, %c0_55] : memref<128x128xf32, #tpu.memory_space<vmem>>, vector<128x128xf32>
      %c0_56 = arith.constant 0 : index
      %c0_57 = arith.constant 0 : index
      %113 = vector.load %arg13[%c0_56, %c0_57] : memref<1x128xf32, #tpu.memory_space<vmem>>, vector<1x128xf32>
      %114 = vector.broadcast %113 : vector<1x128xf32> to vector<128x128xf32>
      %115 = arith.addf %112, %114 : vector<128x128xf32>
      %c0_58 = arith.constant 0 : index
      %c0_59 = arith.constant 0 : index
      %c0_60 = arith.constant 0 : index
      %116 = vector.load %arg14[%c0_58, %c0_59, %c0_60] : memref<1x128x128xf32, #tpu.memory_space<vmem>>, vector<1x128x128xf32>
      %117 = vector.shape_cast %116 : vector<1x128x128xf32> to vector<128x128xf32>
      %118 = vector.shape_cast %115 : vector<128x128xf32> to vector<1x128x128xf32>
      tpu.vector_store %arg14[%c0_58, %c0_59, %c0_60], %118 {strides = array<i32>} : memref<1x128x128xf32, #tpu.memory_space<vmem>>, vector<1x128x128xf32>,
    } else {
    }
    return
  }
  func.func @transform_0(%arg0: i32, %arg1: i32, %arg2: i32) -> (i32, i32, i32) {
    %c0_i32 = arith.constant 0 : i32
    %c0_i32_0 = arith.constant 0 : i32
    return %arg0, %arg1, %c0_i32 : i32, i32, i32
  }
  func.func @transform_1(%arg0: i32, %arg1: i32, %arg2: i32) -> (i32, i32, i32) {
    %c0_i32 = arith.constant 0 : i32
    %c0_i32_0 = arith.constant 0 : i32
    %c0_i32_1 = arith.constant 0 : i32
    return %arg0, %c0_i32, %c0_i32_0 : i32, i32, i32
  }
  func.func @transform_2(%arg0: i32, %arg1: i32, %arg2: i32) -> (i32, i32, i32) {
    %c0_i32 = arith.constant 0 : i32
    %c0_i32_0 = arith.constant 0 : i32
    %c0_i32_1 = arith.constant 0 : i32
    return %arg0, %c0_i32, %c0_i32_0 : i32, i32, i32
  }
  func.func @transform_3(%arg0: i32, %arg1: i32, %arg2: i32) -> (i32, i32, i32) {
    %c0_i32 = arith.constant 0 : i32
    %c0_i32_0 = arith.constant 0 : i32
    %c0_i32_1 = arith.constant 0 : i32
    return %arg2, %c0_i32, %c0_i32_0 : i32, i32, i32
  }
  func.func @transform_4(%arg0: i32, %arg1: i32, %arg2: i32) -> (i32, i32, i32) {
    %c0_i32 = arith.constant 0 : i32
    %c0_i32_0 = arith.constant 0 : i32
    %c0_i32_1 = arith.constant 0 : i32
    return %arg2, %c0_i32, %c0_i32_0 : i32, i32, i32
  }
  func.func @transform_5(%arg0: i32, %arg1: i32, %arg2: i32) -> (i32, i32, i32) {
    %c0_i32 = arith.constant 0 : i32
    %c0_i32_0 = arith.constant 0 : i32
    %c0_i32_1 = arith.constant 0 : i32
    return %arg2, %c0_i32, %c0_i32_0 : i32, i32, i32
  }
  func.func @transform_6(%arg0: i32, %arg1: i32, %arg2: i32) -> (i32, i32, i32) {
    %c0_i32 = arith.constant 0 : i32
    %c0_i32_0 = arith.constant 0 : i32
    %c0_i32_1 = arith.constant 0 : i32
    return %arg2, %c0_i32, %c0_i32_0 : i32, i32, i32
  }
  func.func @transform_7(%arg0: i32, %arg1: i32, %arg2: i32) -> (i32, i32, i32) {
    %c0_i32 = arith.constant 0 : i32
    %c0_i32_0 = arith.constant 0 : i32
    %c0_i32_1 = arith.constant 0 : i32
    return %arg2, %c0_i32, %c0_i32_0 : i32, i32, i32
  }
  func.func @transform_8(%arg0: i32, %arg1: i32, %arg2: i32) -> (i32, i32, i32) {
    %c0_i32 = arith.constant 0 : i32
    %c0_i32_0 = arith.constant 0 : i32
    %c0_i32_1 = arith.constant 0 : i32
    return %arg2, %c0_i32, %c0_i32_0 : i32, i32, i32
  }
  func.func @transform_9(%arg0: i32, %arg1: i32, %arg2: i32) -> (i32, i32, i32) {
    %c0_i32 = arith.constant 0 : i32
    %c0_i32_0 = arith.constant 0 : i32
    %c0_i32_1 = arith.constant 0 : i32
    return %arg2, %c0_i32, %c0_i32_0 : i32, i32, i32
  }
  func.func @transform_10(%arg0: i32, %arg1: i32, %arg2: i32) -> (i32, i32) {
    %c0_i32 = arith.constant 0 : i32
    %c0_i32_0 = arith.constant 0 : i32
    %c0_i32_1 = arith.constant 0 : i32
    return %c0_i32, %c0_i32_0 : i32, i32
  }
  func.func @transform_11(%arg0: i32, %arg1: i32, %arg2: i32) -> (i32, i32, i32) {
    %c0_i32 = arith.constant 0 : i32
    %c0_i32_0 = arith.constant 0 : i32
    return %arg0, %arg1, %c0_i32 : i32, i32, i32
  }
  func.func @transform_12(%arg0: i32, %arg1: i32, %arg2: i32) -> (i32, i32, i32, i32) {
    %c0_i32 = arith.constant 0 : i32
    %c0_i32_0 = arith.constant 0 : i32
    return %arg0, %arg2, %arg1, %c0_i32 : i32, i32, i32, i32
  }
}

</mosaic_0001>

<llo_original>
// kernel: tpu_custom_call.1
$region0: #{tpu_custom_call.1}
  #allocation0 [shape = 'u32[]', space=smem, size = 0x4, offset = 0x4, fixed_abs, tag = 'smem constant byte address 0x4 - core index']
  #allocation1 [shape = 'u32[72,128]{1,0:T(1,128)}', space=vmem, size = 0x9000, scoped, tag = 'internal scratch']
  #allocation2 [shape = 'f32[128,128]{1,0:T(8,128)}', space=vmem, size = 0x10000, scoped, tag = 'scratch operand']
  #allocation3 [shape = 'bf16[1,128,128]{2,1,0:T(8,128)(2,1)}', space=vmem, size = 0x8000, scoped, tag = 'scratch operand']
  #allocation4 [shape = 'bf16[1,128,128]{2,1,0:T(8,128)(2,1)}', space=vmem, size = 0x8000, scoped, tag = 'scratch operand']
  %s0 = inlined_call_operand.hbm [shape: bf16[2,128,128], index: 0, kind: input, shape index: {}]
  %s1 = inlined_call_operand.hbm [shape: bf16[2,128,128], index: 1, kind: input, shape index: {}]
  %s2 = inlined_call_operand.hbm [shape: bf16[2,128,128], index: 2, kind: input, shape index: {}]
  %s3 = inlined_call_operand.hbm [shape: bf16[1,128,128], index: 3, kind: input, shape index: {}]
  %s4 = inlined_call_operand.vmem [shape: f32[1,1,128], index: 4, kind: input, shape index: {}]
  %s5 = inlined_call_operand.hbm [shape: bf16[1,128,128], index: 5, kind: input, shape index: {}]
  %s6 = inlined_call_operand.vmem [shape: f32[1,1,128], index: 6, kind: input, shape index: {}]
  %s7 = inlined_call_operand.hbm [shape: bf16[1,128,128], index: 7, kind: input, shape index: {}]
  %s8 = inlined_call_operand.vmem [shape: f32[1,1,128], index: 8, kind: input, shape index: {}]
  %s9 = inlined_call_operand.hbm [shape: bf16[1,128,128], index: 9, kind: input, shape index: {}]
  %s10 = inlined_call_operand.vmem [shape: f32[1,128], index: 10, kind: input, shape index: {}]
  %s11 = inlined_call_operand.hbm [shape: f32[2,128,128], index: 11, kind: output, shape index: {0}]
  %s12 = inlined_call_operand.hbm [shape: f32[2,4,128,128], index: 12, kind: output, shape index: {1}]
  %13 = xla_tuple %s11, %s12
  %s14 = sld [smem:[#allocation0]]
  $region125: #{tpu_custom_call.1} parent=0
    _
  %s16 = ssub.s32 1, %s14
  %s17 = scalar_select 0, %s16, %s14
  $region1: #{tpu_custom_call.1} parent=0
    #allocation5 [shape = 'u8[65536]{0}', space=vmem, size = 0x10000, scoped, tag = 'input window, operand 0']
    #allocation6 [shape = 's32[2]{0}', space=sflag, size = 0x8, scoped, tag = 'scoped memory for tpu_custom_call.1']
    #allocation7 [shape = 's32[2]{0}', space=sflag, size = 0x8, scoped, tag = 'scoped memory for tpu_custom_call.1']
    #allocation8 [shape = 'u8[65536]{0}', space=vmem, size = 0x10000, scoped, tag = 'input window, operand 1']
    #allocation9 [shape = 's32[2]{0}', space=sflag, size = 0x8, scoped, tag = 'scoped memory for tpu_custom_call.1']
    #allocation10 [shape = 'u8[65536]{0}', space=vmem, size = 0x10000, scoped, tag = 'input window, operand 2']
    #allocation11 [shape = 'u8[32768]{0}', space=vmem, size = 0x8000, scoped, tag = 'input window, operand 3, single buffered']
    #allocation12 [shape = 's32[1]{0}', space=sflag, size = 0x4, scoped, tag = 'scoped memory for tpu_custom_call.1']
    #allocation13 [shape = 'u8[32768]{0}', space=vmem, size = 0x8000, scoped, tag = 'input window, operand 5, single buffered']
    #allocation14 [shape = 'u8[32768]{0}', space=vmem, size = 0x8000, scoped, tag = 'input window, operand 7, single buffered']
    #allocation15 [shape = 's32[1]{0}', space=sflag, size = 0x4, scoped, tag = 'scoped memory for tpu_custom_call.1']
    #allocation16 [shape = 'u8[32768]{0}', space=vmem, size = 0x8000, scoped, tag = 'input window, operand 9, single buffered']
    #allocation17 [shape = 'u8[131072]{0}', space=vmem, size = 0x20000, scoped, tag = 'output window, operand 0']
    #allocation18 [shape = 'u8[524288]{0}', space=vmem, size = 0x80000, scoped, tag = 'output window, operand 1']
    #allocation19 [shape = 's32[2]{0}', space=sflag, size = 0x8, scoped, tag = 'scoped memory for tpu_custom_call.1']
    %18 = vsyncpa [#allocation6], 0
    %s19 = scalar_lea.sflag [#allocation6], 1
    %20 = vsyncpa %s19, 0
    %21 = vsyncpa [#allocation9], 0
    %s22 = scalar_lea.sflag [#allocation9], 1
    %23 = vsyncpa %s22, 0
    %24 = vsyncpa [#allocation12], 0
    %25 = vsyncpa [#allocation15], 0
    %26 = vsyncpa [#allocation7], 0
    %s27 = scalar_lea.sflag [#allocation7], 1
    %28 = vsyncpa %s27, 0
    %29 = vsyncpa [#allocation19], 0
    %s30 = scalar_lea.sflag [#allocation19], 1
    %31 = vsyncpa %s30, 0
    loop: start=0, step=1, limit=4
    $region2: #{tpu_custom_call.1} parent=1 // loop_pre_header
      _
    $region3: #{tpu_custom_call.1} parent=1 // loop_header
      %s33 = sphi 0, %s37
      %p34 = scmp.ge.s32.totalorder %s33, 4
      %s40 = sphi 0, %s59
      %s41 = sphi 0, %s55
      %s42 = sphi 0, %s51
      %s43 = sphi 0, %s40
      %s44 = sphi 0, %s41
      %s45 = sphi 0, %s42
      %s46 = sphi 0, %s43
      %s47 = sphi 0, %s44
      %s48 = sphi 0, %s45
      %s64 = sphi 0, %s66
      %s67 = sphi 0, %s64
      %s68 = sphi 0, %s67
      %s84 = sphi 0, %s68
      %s90 = sphi 0, %s92
      %s93 = sphi 0, %s90
      %s94 = sphi 0, %s93
      %s110 = sphi 0, %s94
      %s116 = sphi 0, %s118
      %s119 = sphi 0, %s116
      %s120 = sphi 0, %s119
      %s136 = sphi 0, %s120
      %s142 = sphi 0, %s144
      %s145 = sphi 0, %s142
      %s146 = sphi 0, %s145
      %s162 = sphi 0, %s146
      %s168 = sphi 0, %s170
      %s171 = sphi 0, %s168
      %s172 = sphi 0, %s171
      %s188 = sphi 0, %s172
      %s194 = sphi 0, %s196
      %s197 = sphi 0, %s194
      %s198 = sphi 0, %s197
      %s214 = sphi 0, %s198
      %s220 = sphi 0, %s222
      %s223 = sphi 0, %s220
      %s224 = sphi 0, %s223
      %s240 = sphi 0, %s224
      %s246 = sphi 0, %s248
      %s249 = sphi 0, %s246
      %s250 = sphi 0, %s249
      %s266 = sphi 0, %s250
      %s272 = sphi 0, %s274
      %s275 = sphi 0, %s272
      %s276 = sphi 0, %s275
      %s292 = sphi 0, %s276
      %s298 = sphi 0, %s300
      %s301 = sphi 0, %s298
      %s302 = sphi 0, %s301
      %s318 = sphi 0, %s302
      %s322 = sphi 0, %s322
      %s324 = sphi 0, %s322
      %s325 = sphi 0, %s324
      %s339 = sphi 0, %s325
      %s347 = sphi 0, %s349
      %s350 = sphi 0, %s347
      %s351 = sphi 0, %s350
      %s367 = sphi 0, %s351
      %s377 = sphi 0, %s379
      %s380 = sphi 0, %s377
      %s381 = sphi 0, %s380
      %s397 = sphi 0, %s381
    $region4: #{tpu_custom_call.1} parent=1 // loop_header_branch
      %36 = sbr.rel (%p34) target = $region8
    $region5: #{tpu_custom_call.1} parent=1 // loop_body
      %s38 = ssub.s32 %s33, 1
      %s39 = ssub.s32 %s33, 2
      %s49 = sadd.s32 1, %s42
      %p50 = scmp.ge.s32.totalorder %s49, 1
      %s51 = scalar_select %p50, 0, %s49
      %s52 = sadd.s32 1, %s41
      %s53 = scalar_select %p50, %s52, %s41
      %p54 = scmp.ge.s32.totalorder %s53, 1
      %s55 = scalar_select %p54, 0, %s53
      %s56 = sadd.s32 1, %s40
      %s57 = scalar_select %p54, %s56, %s40
      %p58 = scmp.ge.s32.totalorder %s57, 2
      %s59 = scalar_select %p58, 0, %s57
      %s60 = ssub.s32 %s40, %s59
      %s61 = ssub.s32 %s41, %s55
      %s62 = sor.u32 %s60, %s61
      %p63 = scmp.eq.s32.totalorder %s62, 0
      %s65 = sadd.s32 %s64, 1
      %s66 = scalar_select %p63, %s64, %s65
      %p69 = pneg %p63
      %p70 = scmp.eq.s32.totalorder %s33, 1
      %p71 = por %p69, %p70
      %p72 = scmp.ne.s32.totalorder %s64, %s67
      %p73 = scmp.eq.s32.totalorder %s33, 0
      %p74 = por %p72, %p73
      %p75 = scmp.ne.s32.totalorder %s64, %s67
      %p76 = scmp.eq.s32.totalorder %s38, 1
      %p77 = por %p75, %p76
      %p78 = scmp.ne.s32.totalorder %s67, %s68
      %p79 = scmp.eq.s32.totalorder %s38, 0
      %p80 = por %p78, %p79
      %p81 = scmp.ne.s32.totalorder %s67, %s68
      %p82 = scmp.eq.s32.totalorder %s39, 1
      %p83 = por %p81, %p82
      %p85 = scmp.ne.s32.totalorder %s68, %s84
      %p86 = scmp.eq.s32.totalorder %s39, 0
      %p87 = por %p85, %p86
      %s88 = ssub.s32 %s40, %s59
      %p89 = scmp.eq.s32.totalorder %s88, 0
      %s91 = sadd.s32 %s90, 1
      %s92 = scalar_select %p89, %s90, %s91
      %p95 = pneg %p89
      %p96 = scmp.eq.s32.totalorder %s33, 1
      %p97 = por %p95, %p96
      %p98 = scmp.ne.s32.totalorder %s90, %s93
      %p99 = scmp.eq.s32.totalorder %s33, 0
      %p100 = por %p98, %p99
      %p101 = scmp.ne.s32.totalorder %s90, %s93
      %p102 = scmp.eq.s32.totalorder %s38, 1
      %p103 = por %p101, %p102
      %p104 = scmp.ne.s32.totalorder %s93, %s94
      %p105 = scmp.eq.s32.totalorder %s38, 0
      %p106 = por %p104, %p105
      %p107 = scmp.ne.s32.totalorder %s93, %s94
      %p108 = scmp.eq.s32.totalorder %s39, 1
      %p109 = por %p107, %p108
      %p111 = scmp.ne.s32.totalorder %s94, %s110
      %p112 = scmp.eq.s32.totalorder %s39, 0
      %p113 = por %p111, %p112
      %s114 = ssub.s32 %s40, %s59
      %p115 = scmp.eq.s32.totalorder %s114, 0
      %s117 = sadd.s32 %s116, 1
      %s118 = scalar_select %p115, %s116, %s117
      %p121 = pneg %p115
      %p122 = scmp.eq.s32.totalorder %s33, 1
      %p123 = por %p121, %p122
      %p124 = scmp.ne.s32.totalorder %s116, %s119
      %p125 = scmp.eq.s32.totalorder %s33, 0
      %p126 = por %p124, %p125
      %p127 = scmp.ne.s32.totalorder %s116, %s119
      %p128 = scmp.eq.s32.totalorder %s38, 1
      %p129 = por %p127, %p128
      %p130 = scmp.ne.s32.totalorder %s119, %s120
      %p131 = scmp.eq.s32.totalorder %s38, 0
      %p132 = por %p130, %p131
      %p133 = scmp.ne.s32.totalorder %s119, %s120
      %p134 = scmp.eq.s32.totalorder %s39, 1
      %p135 = por %p133, %p134
      %p137 = scmp.ne.s32.totalorder %s120, %s136
      %p138 = scmp.eq.s32.totalorder %s39, 0
      %p139 = por %p137, %p138
      %s140 = ssub.s32 %s42, %s51
      %p141 = scmp.eq.s32.totalorder %s140, 0
      %s143 = sadd.s32 %s142, 1
      %s144 = scalar_select %p141, %s142, %s143
      %p147 = pneg %p141
      %p148 = scmp.eq.s32.totalorder %s33, 1
      %p149 = por %p147, %p148
      %p150 = scmp.ne.s32.totalorder %s142, %s145
      %p151 = scmp.eq.s32.totalorder %s33, 0
      %p152 = por %p150, %p151
      %p153 = scmp.ne.s32.totalorder %s142, %s145
      %p154 = scmp.eq.s32.totalorder %s38, 1
      %p155 = por %p153, %p154
      %p156 = scmp.ne.s32.totalorder %s145, %s146
      %p157 = scmp.eq.s32.totalorder %s38, 0
      %p158 = por %p156, %p157
      %p159 = scmp.ne.s32.totalorder %s145, %s146
      %p160 = scmp.eq.s32.totalorder %s39, 1
      %p161 = por %p159, %p160
      %p163 = scmp.ne.s32.totalorder %s146, %s162
      %p164 = scmp.eq.s32.totalorder %s39, 0
      %p165 = por %p163, %p164
      %s166 = ssub.s32 %s42, %s51
      %p167 = scmp.eq.s32.totalorder %s166, 0
      %s169 = sadd.s32 %s168, 1
      %s170 = scalar_select %p167, %s168, %s169
      %p173 = pneg %p167
      %p174 = scmp.eq.s32.totalorder %s33, 1
      %p175 = por %p173, %p174
      %p176 = scmp.ne.s32.totalorder %s168, %s171
      %p177 = scmp.eq.s32.totalorder %s33, 0
      %p178 = por %p176, %p177
      %p179 = scmp.ne.s32.totalorder %s168, %s171
      %p180 = scmp.eq.s32.totalorder %s38, 1
      %p181 = por %p179, %p180
      %p182 = scmp.ne.s32.totalorder %s171, %s172
      %p183 = scmp.eq.s32.totalorder %s38, 0
      %p184 = por %p182, %p183
      %p185 = scmp.ne.s32.totalorder %s171, %s172
      %p186 = scmp.eq.s32.totalorder %s39, 1
      %p187 = por %p185, %p186
      %p189 = scmp.ne.s32.totalorder %s172, %s188
      %p190 = scmp.eq.s32.totalorder %s39, 0
      %p191 = por %p189, %p190
      %s192 = ssub.s32 %s42, %s51
      %p193 = scmp.eq.s32.totalorder %s192, 0
      %s195 = sadd.s32 %s194, 1
      %s196 = scalar_select %p193, %s194, %s195
      %p199 = pneg %p193
      %p200 = scmp.eq.s32.totalorder %s33, 1
      %p201 = por %p199, %p200
      %p202 = scmp.ne.s32.totalorder %s194, %s197
      %p203 = scmp.eq.s32.totalorder %s33, 0
      %p204 = por %p202, %p203
      %p205 = scmp.ne.s32.totalorder %s194, %s197
      %p206 = scmp.eq.s32.totalorder %s38, 1
      %p207 = por %p205, %p206
      %p208 = scmp.ne.s32.totalorder %s197, %s198
      %p209 = scmp.eq.s32.totalorder %s38, 0
      %p210 = por %p208, %p209
      %p211 = scmp.ne.s32.totalorder %s197, %s198
      %p212 = scmp.eq.s32.totalorder %s39, 1
      %p213 = por %p211, %p212
      %p215 = scmp.ne.s32.totalorder %s198, %s214
      %p216 = scmp.eq.s32.totalorder %s39, 0
      %p217 = por %p215, %p216
      %s218 = ssub.s32 %s42, %s51
      %p219 = scmp.eq.s32.totalorder %s218, 0
      %s221 = sadd.s32 %s220, 1
      %s222 = scalar_select %p219, %s220, %s221
      %p225 = pneg %p219
      %p226 = scmp.eq.s32.totalorder %s33, 1
      %p227 = por %p225, %p226
      %p228 = scmp.ne.s32.totalorder %s220, %s223
      %p229 = scmp.eq.s32.totalorder %s33, 0
      %p230 = por %p228, %p229
      %p231 = scmp.ne.s32.totalorder %s220, %s223
      %p232 = scmp.eq.s32.totalorder %s38, 1
      %p233 = por %p231, %p232
      %p234 = scmp.ne.s32.totalorder %s223, %s224
      %p235 = scmp.eq.s32.totalorder %s38, 0
      %p236 = por %p234, %p235
      %p237 = scmp.ne.s32.totalorder %s223, %s224
      %p238 = scmp.eq.s32.totalorder %s39, 1
      %p239 = por %p237, %p238
      %p241 = scmp.ne.s32.totalorder %s224, %s240
      %p242 = scmp.eq.s32.totalorder %s39, 0
      %p243 = por %p241, %p242
      %s244 = ssub.s32 %s42, %s51
      %p245 = scmp.eq.s32.totalorder %s244, 0
      %s247 = sadd.s32 %s246, 1
      %s248 = scalar_select %p245, %s246, %s247
      %p251 = pneg %p245
      %p252 = scmp.eq.s32.totalorder %s33, 1
      %p253 = por %p251, %p252
      %p254 = scmp.ne.s32.totalorder %s246, %s249
      %p255 = scmp.eq.s32.totalorder %s33, 0
      %p256 = por %p254, %p255
      %p257 = scmp.ne.s32.totalorder %s246, %s249
      %p258 = scmp.eq.s32.totalorder %s38, 1
      %p259 = por %p257, %p258
      %p260 = scmp.ne.s32.totalorder %s249, %s250
      %p261 = scmp.eq.s32.totalorder %s38, 0
      %p262 = por %p260, %p261
      %p263 = scmp.ne.s32.totalorder %s249, %s250
      %p264 = scmp.eq.s32.totalorder %s39, 1
      %p265 = por %p263, %p264
      %p267 = scmp.ne.s32.totalorder %s250, %s266
      %p268 = scmp.eq.s32.totalorder %s39, 0
      %p269 = por %p267, %p268
      %s270 = ssub.s32 %s42, %s51
      %p271 = scmp.eq.s32.totalorder %s270, 0
      %s273 = sadd.s32 %s272, 1
      %s274 = scalar_select %p271, %s272, %s273
      %p277 = pneg %p271
      %p278 = scmp.eq.s32.totalorder %s33, 1
      %p279 = por %p277, %p278
      %p280 = scmp.ne.s32.totalorder %s272, %s275
      %p281 = scmp.eq.s32.totalorder %s33, 0
      %p282 = por %p280, %p281
      %p283 = scmp.ne.s32.totalorder %s272, %s275
      %p284 = scmp.eq.s32.totalorder %s38, 1
      %p285 = por %p283, %p284
      %p286 = scmp.ne.s32.totalorder %s275, %s276
      %p287 = scmp.eq.s32.totalorder %s38, 0
      %p288 = por %p286, %p287
      %p289 = scmp.ne.s32.totalorder %s275, %s276
      %p290 = scmp.eq.s32.totalorder %s39, 1
      %p291 = por %p289, %p290
      %p293 = scmp.ne.s32.totalorder %s276, %s292
      %p294 = scmp.eq.s32.totalorder %s39, 0
      %p295 = por %p293, %p294
      %s296 = ssub.s32 %s42, %s51
      %p297 = scmp.eq.s32.totalorder %s296, 0
      %s299 = sadd.s32 %s298, 1
      %s300 = scalar_select %p297, %s298, %s299
      %p303 = pneg %p297
      %p304 = scmp.eq.s32.totalorder %s33, 1
      %p305 = por %p303, %p304
      %p306 = scmp.ne.s32.totalorder %s298, %s301
      %p307 = scmp.eq.s32.totalorder %s33, 0
      %p308 = por %p306, %p307
      %p309 = scmp.ne.s32.totalorder %s298, %s301
      %p310 = scmp.eq.s32.totalorder %s38, 1
      %p311 = por %p309, %p310
      %p312 = scmp.ne.s32.totalorder %s301, %s302
      %p313 = scmp.eq.s32.totalorder %s38, 0
      %p314 = por %p312, %p313
      %p315 = scmp.ne.s32.totalorder %s301, %s302
      %p316 = scmp.eq.s32.totalorder %s39, 1
      %p317 = por %p315, %p316
      %p319 = scmp.ne.s32.totalorder %s302, %s318
      %p320 = scmp.eq.s32.totalorder %s39, 0
      %p321 = por %p319, %p320
      %s323 = sadd.s32 %s322, 1
      %p326 = scmp.eq.s32.totalorder %s33, 1
      %p327 = scmp.ne.s32.totalorder %s322, %s324
      %p328 = scmp.eq.s32.totalorder %s33, 0
      %p329 = por %p327, %p328
      %p330 = scmp.ne.s32.totalorder %s322, %s324
      %p331 = scmp.eq.s32.totalorder %s38, 1
      %p332 = por %p330, %p331
      %p333 = scmp.ne.s32.totalorder %s324, %s325
      %p334 = scmp.eq.s32.totalorder %s38, 0
      %p335 = por %p333, %p334
      %p336 = scmp.ne.s32.totalorder %s324, %s325
      %p337 = scmp.eq.s32.totalorder %s39, 1
      %p338 = por %p336, %p337
      %p340 = scmp.ne.s32.totalorder %s325, %s339
      %p341 = scmp.eq.s32.totalorder %s39, 0
      %p342 = por %p340, %p341
      %s343 = ssub.s32 %s40, %s59
      %s344 = ssub.s32 %s41, %s55
      %s345 = sor.u32 %s343, %s344
      %p346 = scmp.eq.s32.totalorder %s345, 0
      %s348 = sadd.s32 %s347, 1
      %s349 = scalar_select %p346, %s347, %s348
      %p352 = pneg %p346
      %p353 = scmp.eq.s32.totalorder %s33, 1
      %p354 = por %p352, %p353
      %p355 = scmp.ne.s32.totalorder %s347, %s350
      %p356 = scmp.eq.s32.totalorder %s33, 0
      %p357 = por %p355, %p356
      %p358 = scmp.ne.s32.totalorder %s347, %s350
      %p359 = scmp.eq.s32.totalorder %s38, 1
      %p360 = por %p358, %p359
      %p361 = scmp.ne.s32.totalorder %s350, %s351
      %p362 = scmp.eq.s32.totalorder %s38, 0
      %p363 = por %p361, %p362
      %p364 = scmp.ne.s32.totalorder %s350, %s351
      %p365 = scmp.eq.s32.totalorder %s39, 1
      %p366 = por %p364, %p365
      %p368 = scmp.ne.s32.totalorder %s351, %s367
      %p369 = scmp.eq.s32.totalorder %s39, 0
      %p370 = por %p368, %p369
      %s371 = ssub.s32 %s40, %s59
      %s372 = ssub.s32 %s42, %s51
      %s373 = sor.u32 %s371, %s372
      %s374 = ssub.s32 %s41, %s55
      %s375 = sor.u32 %s373, %s374
      %p376 = scmp.eq.s32.totalorder %s375, 0
      %s378 = sadd.s32 %s377, 1
      %s379 = scalar_select %p376, %s377, %s378
      %p382 = pneg %p376
      %p383 = scmp.eq.s32.totalorder %s33, 1
      %p384 = por %p382, %p383
      %p385 = scmp.ne.s32.totalorder %s377, %s380
      %p386 = scmp.eq.s32.totalorder %s33, 0
      %p387 = por %p385, %p386
      %p388 = scmp.ne.s32.totalorder %s377, %s380
      %p389 = scmp.eq.s32.totalorder %s38, 1
      %p390 = por %p388, %p389
      %p391 = scmp.ne.s32.totalorder %s380, %s381
      %p392 = scmp.eq.s32.totalorder %s38, 0
      %p393 = por %p391, %p392
      %p394 = scmp.ne.s32.totalorder %s380, %s381
      %p395 = scmp.eq.s32.totalorder %s39, 1
      %p396 = por %p394, %p395
      %p398 = scmp.ne.s32.totalorder %s381, %s397
      %p399 = scmp.eq.s32.totalorder %s39, 0
      %p400 = por %p398, %p399
      %p401 = scmp.le.s32.totalorder 1, %s33
      %p402 = scmp.lt.s32.totalorder %s33, 3
      %p403 = pnand %p401, %p402
      %p404 = pneg %p403
      // Predicated region
      $region9: #{tpu_custom_call.1} parent=5 // pred_check
        _
      $region10: #{tpu_custom_call.1} parent=5 // pred_check_branch
        %406 = sbr.rel (%p403) target = $region12
      $region11: #{tpu_custom_call.1} parent=5 // pred_region
        %s407 = ssub.s32 %s33, 1
        // Predicated region
        $region13: #{tpu_custom_call.1} parent=11 // pred_check
          %p408 = pneg %p158
        $region14: #{tpu_custom_call.1} parent=11 // pred_check_branch
          %410 = sbr.rel (%p408) target = $region16
        $region15: #{tpu_custom_call.1} parent=11 // pred_region
          %412 = vsyncadd [#allocation12], 0
          %s413 = smul.addr %s45, 16
          %s414 = smul.addr %s413, 4
          %s415 = scalar_lea.hbm %s3, %s414
          %s416 = sshll.u32 %s415, 4
          %s417 = int_to_ptr.hbm [resolvable:$true] %s416
          %s418 = sshll.u32 [#allocation11], 4
          %s419 = int_to_ptr.vmem [resolvable:$true] %s418
          %424 = dma.hbm_to_vmem [thread:$0]  %s417, 1024, %s419, [#allocation12], 64, 64, 4
        $region16: #{tpu_custom_call.1} parent=11 // pred_fallthru
          _
        // Predicated region
        $region17: #{tpu_custom_call.1} parent=11 // pred_check
          %p425 = pneg %p184
        $region18: #{tpu_custom_call.1} parent=11 // pred_check_branch
          %427 = sbr.rel (%p425) target = $region20
        $region19: #{tpu_custom_call.1} parent=11 // pred_region
          %p428 = scmp.lt.s32.totalorder %s45, 0
          %s429 = scalar_select %p428, %s45, 0
          %s430 = scalar_lea.vmem %s4, %s429
        $region20: #{tpu_custom_call.1} parent=11 // pred_fallthru
          _
        // Predicated region
        $region21: #{tpu_custom_call.1} parent=11 // pred_check
          %p431 = pneg %p210
        $region22: #{tpu_custom_call.1} parent=11 // pred_check_branch
          %433 = sbr.rel (%p431) target = $region24
        $region23: #{tpu_custom_call.1} parent=11 // pred_region
          %435 = vsyncadd [#allocation12], 0
          %s436 = smul.addr %s45, 16
          %s437 = smul.addr %s436, 4
          %s438 = scalar_lea.hbm %s5, %s437
          %s439 = sshll.u32 %s438, 4
          %s440 = int_to_ptr.hbm [resolvable:$true] %s439
          %s441 = sshll.u32 [#allocation13], 4
          %s442 = int_to_ptr.vmem [resolvable:$true] %s441
          %447 = dma.hbm_to_vmem [thread:$0]  %s440, 1024, %s442, [#allocation12], 64, 64, 4
        $region24: #{tpu_custom_call.1} parent=11 // pred_fallthru
          _
        // Predicated region
        $region25: #{tpu_custom_call.1} parent=11 // pred_check
          %p448 = pneg %p236
        $region26: #{tpu_custom_call.1} parent=11 // pred_check_branch
          %450 = sbr.rel (%p448) target = $region28
        $region27: #{tpu_custom_call.1} parent=11 // pred_region
          %p451 = scmp.lt.s32.totalorder %s45, 0
          %s452 = scalar_select %p451, %s45, 0
          %s453 = scalar_lea.vmem %s6, %s452
        $region28: #{tpu_custom_call.1} parent=11 // pred_fallthru
          _
        // Predicated region
        $region29: #{tpu_custom_call.1} parent=11 // pred_check
          %p454 = pneg %p262
        $region30: #{tpu_custom_call.1} parent=11 // pred_check_branch
          %456 = sbr.rel (%p454) target = $region32
        $region31: #{tpu_custom_call.1} parent=11 // pred_region
          %458 = vsyncadd [#allocation15], 0
          %s459 = smul.addr %s45, 16
          %s460 = smul.addr %s459, 4
          %s461 = scalar_lea.hbm %s7, %s460
          %s462 = sshll.u32 %s461, 4
          %s463 = int_to_ptr.hbm [resolvable:$true] %s462
          %s464 = sshll.u32 [#allocation14], 4
          %s465 = int_to_ptr.vmem [resolvable:$true] %s464
          %470 = dma.hbm_to_vmem [thread:$0]  %s463, 1024, %s465, [#allocation15], 64, 64, 4
        $region32: #{tpu_custom_call.1} parent=11 // pred_fallthru
          _
        // Predicated region
        $region33: #{tpu_custom_call.1} parent=11 // pred_check
          %p471 = pneg %p288
        $region34: #{tpu_custom_call.1} parent=11 // pred_check_branch
          %473 = sbr.rel (%p471) target = $region36
        $region35: #{tpu_custom_call.1} parent=11 // pred_region
          %p474 = scmp.lt.s32.totalorder %s45, 0
          %s475 = scalar_select %p474, %s45, 0
          %s476 = scalar_lea.vmem %s8, %s475
        $region36: #{tpu_custom_call.1} parent=11 // pred_fallthru
          _
        // Predicated region
        $region37: #{tpu_custom_call.1} parent=11 // pred_check
          %p477 = pneg %p314
        $region38: #{tpu_custom_call.1} parent=11 // pred_check_branch
          %479 = sbr.rel (%p477) target = $region40
        $region39: #{tpu_custom_call.1} parent=11 // pred_region
          %481 = vsyncadd [#allocation15], 0
          %s482 = smul.addr %s45, 16
          %s483 = smul.addr %s482, 4
          %s484 = scalar_lea.hbm %s9, %s483
          %s485 = sshll.u32 %s484, 4
          %s486 = int_to_ptr.hbm [resolvable:$true] %s485
          %s487 = sshll.u32 [#allocation16], 4
          %s488 = int_to_ptr.vmem [resolvable:$true] %s487
          %493 = dma.hbm_to_vmem [thread:$0]  %s486, 1024, %s488, [#allocation15], 64, 64, 4
        $region40: #{tpu_custom_call.1} parent=11 // pred_fallthru
          _
        // Predicated region
        $region41: #{tpu_custom_call.1} parent=11 // pred_check
          %p494 = pneg %p335
        $region42: #{tpu_custom_call.1} parent=11 // pred_check_branch
          %496 = sbr.rel (%p494) target = $region44
        $region43: #{tpu_custom_call.1} parent=11 // pred_region
          _
        $region44: #{tpu_custom_call.1} parent=11 // pred_fallthru
          _
      $region12: #{tpu_custom_call.1} parent=5 // pred_fallthru
        _
      %p497 = scmp.lt.s32.totalorder %s33, 2
      // Predicated region
      $region45: #{tpu_custom_call.1} parent=5 // pred_check
        %p498 = pneg %p497
      $region46: #{tpu_custom_call.1} parent=5 // pred_check_branch
        %500 = sbr.rel (%p498) target = $region48
      $region47: #{tpu_custom_call.1} parent=5 // pred_region
        // Predicated region
        $region49: #{tpu_custom_call.1} parent=47 // pred_check
          %p501 = pneg %p74
        $region50: #{tpu_custom_call.1} parent=47 // pred_check_branch
          %503 = sbr.rel (%p501) target = $region52
        $region51: #{tpu_custom_call.1} parent=47 // pred_region
          %s504 = sand.u32 %s64, 1
          %s505 = scalar_lea.sflag [#allocation6], %s504
          %s506 = sand.u32 %s64, 1
          %s507 = smul.addr %s506, 64
          %s508 = scalar_lea.vmem [#allocation5], %s507
          %s509 = smul.u32 16, %s41
          %511 = vsyncadd %s505, 0
          %s512 = smul.addr %s40, 16
          %s513 = sadd.s32 %s509, %s512
          %s514 = smul.addr %s513, 4
          %s515 = scalar_lea.hbm %s0, %s514
          %s516 = sshll.u32 %s515, 4
          %s517 = int_to_ptr.hbm [resolvable:$true] %s516
          %s518 = sshll.u32 %s508, 4
          %s519 = int_to_ptr.vmem [resolvable:$true] %s518
          %524 = dma.hbm_to_vmem [thread:$0]  %s517, 1024, %s519, %s505, 64, 64, 4
        $region52: #{tpu_custom_call.1} parent=47 // pred_fallthru
          _
        // Predicated region
        $region53: #{tpu_custom_call.1} parent=47 // pred_check
          %p525 = pneg %p100
        $region54: #{tpu_custom_call.1} parent=47 // pred_check_branch
          %527 = sbr.rel (%p525) target = $region56
        $region55: #{tpu_custom_call.1} parent=47 // pred_region
          %s528 = sand.u32 %s33, 1
          %s529 = scalar_lea.sflag [#allocation9], %s528
          %s530 = sand.u32 %s90, 1
          %s531 = smul.addr %s530, 64
          %s532 = scalar_lea.vmem [#allocation8], %s531
          %534 = vsyncadd %s529, 0
          %s535 = smul.addr %s40, 16
          %s536 = smul.addr %s535, 4
          %s537 = scalar_lea.hbm %s1, %s536
          %s538 = sshll.u32 %s537, 4
          %s539 = int_to_ptr.hbm [resolvable:$true] %s538
          %s540 = sshll.u32 %s532, 4
          %s541 = int_to_ptr.vmem [resolvable:$true] %s540
          %546 = dma.hbm_to_vmem [thread:$0]  %s539, 1024, %s541, %s529, 64, 64, 4
        $region56: #{tpu_custom_call.1} parent=47 // pred_fallthru
          _
        // Predicated region
        $region57: #{tpu_custom_call.1} parent=47 // pred_check
          %p547 = pneg %p126
        $region58: #{tpu_custom_call.1} parent=47 // pred_check_branch
          %549 = sbr.rel (%p547) target = $region60
        $region59: #{tpu_custom_call.1} parent=47 // pred_region
          %s550 = sand.u32 %s33, 1
          %s551 = scalar_lea.sflag [#allocation9], %s550
          %s552 = sand.u32 %s116, 1
          %s553 = smul.addr %s552, 64
          %s554 = scalar_lea.vmem [#allocation10], %s553
          %556 = vsyncadd %s551, 0
          %s557 = smul.addr %s40, 16
          %s558 = smul.addr %s557, 4
          %s559 = scalar_lea.hbm %s2, %s558
          %s560 = sshll.u32 %s559, 4
          %s561 = int_to_ptr.hbm [resolvable:$true] %s560
          %s562 = sshll.u32 %s554, 4
          %s563 = int_to_ptr.vmem [resolvable:$true] %s562
          %568 = dma.hbm_to_vmem [thread:$0]  %s561, 1024, %s563, %s551, 64, 64, 4
        $region60: #{tpu_custom_call.1} parent=47 // pred_fallthru
          _
      $region48: #{tpu_custom_call.1} parent=5 // pred_fallthru
        _
      %p569 = scmp.le.s32.totalorder 1, %s33
      %p570 = scmp.lt.s32.totalorder %s33, 3
      %p571 = pnand %p569, %p570
      %p572 = pneg %p571
      // Predicated region
      $region61: #{tpu_custom_call.1} parent=5 // pred_check
        _
      $region62: #{tpu_custom_call.1} parent=5 // pred_check_branch
        %574 = sbr.rel (%p571) target = $region64
      $region63: #{tpu_custom_call.1} parent=5 // pred_region
        %s575 = ssub.s32 %s33, 1
        %s576 = sand.u32 %s67, 1
        %s577 = scalar_lea.sflag [#allocation6], %s576
        %s578 = sand.u32 %s67, 1
        %s579 = smul.addr %s578, 64
        %s580 = scalar_lea.vmem [#allocation5], %s579
        // Predicated region
        $region65: #{tpu_custom_call.1} parent=63 // pred_check
          %p581 = pneg %p80
        $region66: #{tpu_custom_call.1} parent=63 // pred_check_branch
          %583 = sbr.rel (%p581) target = $region68
        $region67: #{tpu_custom_call.1} parent=63 // pred_region
          %585 = dma.done %s577, 1024
        $region68: #{tpu_custom_call.1} parent=63 // pred_fallthru
          _
        %s586 = sand.u32 %s38, 1
        %s587 = scalar_lea.sflag [#allocation9], %s586
        %s588 = sand.u32 %s93, 1
        %s589 = smul.addr %s588, 64
        %s590 = scalar_lea.vmem [#allocation8], %s589
        // Predicated region
        $region69: #{tpu_custom_call.1} parent=63 // pred_check
          %p591 = pneg %p106
        $region70: #{tpu_custom_call.1} parent=63 // pred_check_branch
          %593 = sbr.rel (%p591) target = $region72
        $region71: #{tpu_custom_call.1} parent=63 // pred_region
          %595 = dma.done %s587, 1024
        $region72: #{tpu_custom_call.1} parent=63 // pred_fallthru
          _
        %s596 = sand.u32 %s38, 1
        %s597 = scalar_lea.sflag [#allocation9], %s596
        %s598 = sand.u32 %s119, 1
        %s599 = smul.addr %s598, 64
        %s600 = scalar_lea.vmem [#allocation10], %s599
        // Predicated region
        $region73: #{tpu_custom_call.1} parent=63 // pred_check
          %p601 = pneg %p132
        $region74: #{tpu_custom_call.1} parent=63 // pred_check_branch
          %603 = sbr.rel (%p601) target = $region76
        $region75: #{tpu_custom_call.1} parent=63 // pred_region
          %605 = dma.done %s597, 1024
        $region76: #{tpu_custom_call.1} parent=63 // pred_fallthru
          _
        // Predicated region
        $region77: #{tpu_custom_call.1} parent=63 // pred_check
          %p606 = pneg %p158
        $region78: #{tpu_custom_call.1} parent=63 // pred_check_branch
          %608 = sbr.rel (%p606) target = $region80
        $region79: #{tpu_custom_call.1} parent=63 // pred_region
          %610 = dma.done [#allocation12], 1024
        $region80: #{tpu_custom_call.1} parent=63 // pred_fallthru
          _
        // Predicated region
        $region81: #{tpu_custom_call.1} parent=63 // pred_check
          %p611 = pneg %p210
        $region82: #{tpu_custom_call.1} parent=63 // pred_check_branch
          %613 = sbr.rel (%p611) target = $region84
        $region83: #{tpu_custom_call.1} parent=63 // pred_region
          %615 = dma.done [#allocation12], 1024
        $region84: #{tpu_custom_call.1} parent=63 // pred_fallthru
          _
        // Predicated region
        $region85: #{tpu_custom_call.1} parent=63 // pred_check
          %p616 = pneg %p262
        $region86: #{tpu_custom_call.1} parent=63 // pred_check_branch
          %618 = sbr.rel (%p616) target = $region88
        $region87: #{tpu_custom_call.1} parent=63 // pred_region
          %620 = dma.done [#allocation15], 1024
        $region88: #{tpu_custom_call.1} parent=63 // pred_fallthru
          _
        // Predicated region
        $region89: #{tpu_custom_call.1} parent=63 // pred_check
          %p621 = pneg %p314
        $region90: #{tpu_custom_call.1} parent=63 // pred_check_branch
          %623 = sbr.rel (%p621) target = $region92
        $region91: #{tpu_custom_call.1} parent=63 // pred_region
          %625 = dma.done [#allocation15], 1024
        $region92: #{tpu_custom_call.1} parent=63 // pred_fallthru
          _
        %s626 = sand.u32 %s67, 1
        %s627 = scalar_lea.sflag [#allocation6], %s626
        %s628 = sand.u32 %s67, 1
        %s629 = smul.addr %s628, 64
        %s630 = scalar_lea.vmem [#allocation5], %s629
        %p631 = pneg %p80
        %p632 = pneg %p77
        %s633 = sand.u32 %s38, 1
        %s634 = scalar_lea.sflag [#allocation9], %s633
        %s635 = sand.u32 %s93, 1
        %s636 = smul.addr %s635, 64
        %s637 = scalar_lea.vmem [#allocation8], %s636
        %p638 = pneg %p106
        %p639 = pneg %p103
        %s640 = sand.u32 %s38, 1
        %s641 = scalar_lea.sflag [#allocation9], %s640
        %s642 = sand.u32 %s119, 1
        %s643 = smul.addr %s642, 64
        %s644 = scalar_lea.vmem [#allocation10], %s643
        %p645 = pneg %p132
        %p646 = pneg %p129
        %p647 = pneg %p158
        %p648 = pneg %p155
        %p649 = scmp.lt.s32.totalorder %s45, 0
        %s650 = scalar_select %p649, %s45, 0
        %s651 = scalar_lea.vmem %s4, %s650
        %p652 = pneg %p184
        %p653 = pneg %p181
        %p654 = pneg %p210
        %p655 = pneg %p207
        %p656 = scmp.lt.s32.totalorder %s45, 0
        %s657 = scalar_select %p656, %s45, 0
        %s658 = scalar_lea.vmem %s6, %s657
        %p659 = pneg %p236
        %p660 = pneg %p233
        %p661 = pneg %p262
        %p662 = pneg %p259
        %p663 = scmp.lt.s32.totalorder %s45, 0
        %s664 = scalar_select %p663, %s45, 0
        %s665 = scalar_lea.vmem %s8, %s664
        %p666 = pneg %p288
        %p667 = pneg %p285
        %p668 = pneg %p314
        %p669 = pneg %p311
        %p670 = pneg %p335
        %p671 = pneg %p332
        %p672 = pneg %p363
        %p673 = pneg %p360
        %s674 = sand.u32 %s350, 1
        %s675 = scalar_lea.sflag [#allocation7], %s674
        %s676 = sand.u32 %s350, 1
        %s677 = smul.addr %s676, 128
        %s678 = scalar_lea.vmem [#allocation17], %s677
        %p679 = pneg %p393
        %p680 = pneg %p390
        %s681 = sand.u32 %s380, 1
        %s682 = scalar_lea.sflag [#allocation19], %s681
        %s683 = sand.u32 %s380, 1
        %s684 = smul.addr %s683, 512
        %s685 = scalar_lea.vmem [#allocation18], %s684
        %s686 = smul.u32 16, %s44
        %p687 = scmp.lt.s32.totalorder %s45, 0
        %s688 = scalar_select %p687, %s45, 0
        %s689 = scalar_lea.vmem %s4, %s688
        %p690 = scmp.lt.s32.totalorder %s45, 0
        %s691 = scalar_select %p690, %s45, 0
        %s692 = scalar_lea.vmem %s6, %s691
        %p693 = scmp.lt.s32.totalorder %s45, 0
        %s694 = scalar_select %p693, %s45, 0
        %s695 = scalar_lea.vmem %s8, %s694
        %s696 = smul.u32 16, %s44
        %s697 = smul.u32 4, %s45
        %s698 = smul.u32 16, %s44
        %v699 = vld [vmem:[%s580] sm:$0xf]
        %v700 = vld [vmem:[%s580 + $0x4] sm:$0xf]
        %v701 = vld [vmem:[%s580 + $0x8] sm:$0xf]
        %v702 = vld [vmem:[%s580 + $0xc] sm:$0xf]
        %v703 = vld [vmem:[%s580 + $0x10] sm:$0xf]
        %v704 = vld [vmem:[%s580 + $0x14] sm:$0xf]
        %v705 = vld [vmem:[%s580 + $0x18] sm:$0xf]
        %v706 = vld [vmem:[%s580 + $0x1c] sm:$0xf]
        %v707 = vld [vmem:[%s580 + $0x20] sm:$0xf]
        %v708 = vld [vmem:[%s580 + $0x24] sm:$0xf]
        %v709 = vld [vmem:[%s580 + $0x28] sm:$0xf]
        %v710 = vld [vmem:[%s580 + $0x2c] sm:$0xf]
        %v711 = vld [vmem:[%s580 + $0x30] sm:$0xf]
        %v712 = vld [vmem:[%s580 + $0x34] sm:$0xf]
        %v713 = vld [vmem:[%s580 + $0x38] sm:$0xf]
        %v714 = vld [vmem:[%s580 + $0x3c] sm:$0xf]
        %v715 = vld [vmem:[#allocation11] sm:$0xf]
        %v716 = vld [vmem:[#allocation11 + $0x4] sm:$0xf]
        %v717 = vld [vmem:[#allocation11 + $0x8] sm:$0xf]
        %v718 = vld [vmem:[#allocation11 + $0xc] sm:$0xf]
        %v719 = vld [vmem:[#allocation11 + $0x10] sm:$0xf]
        %v720 = vld [vmem:[#allocation11 + $0x14] sm:$0xf]
        %v721 = vld [vmem:[#allocation11 + $0x18] sm:$0xf]
        %v722 = vld [vmem:[#allocation11 + $0x1c] sm:$0xf]
        %v723 = vld [vmem:[#allocation11 + $0x20] sm:$0xf]
        %v724 = vld [vmem:[#allocation11 + $0x24] sm:$0xf]
        %v725 = vld [vmem:[#allocation11 + $0x28] sm:$0xf]
        %v726 = vld [vmem:[#allocation11 + $0x2c] sm:$0xf]
        %v727 = vld [vmem:[#allocation11 + $0x30] sm:$0xf]
        %v728 = vld [vmem:[#allocation11 + $0x34] sm:$0xf]
        %v729 = vld [vmem:[#allocation11 + $0x38] sm:$0xf]
        %v730 = vld [vmem:[#allocation11 + $0x3c] sm:$0xf]
        %v731 = vld [vmem:[%s689] sm:$0x1]
        %v733 = vperm.slane %v731, 0
        %v751 = vunpack.c.l.b16 %v699
        %v752 = vunpack.c.l.b16 %v700
        %v753 = vunpack.c.l.b16 %v701
        %v754 = vunpack.c.l.b16 %v702
        %v755 = vunpack.c.l.b16 %v703
        %v756 = vunpack.c.l.b16 %v704
        %v757 = vunpack.c.l.b16 %v705
        %v758 = vunpack.c.l.b16 %v706
        %v759 = vunpack.c.l.b16 %v707
        %v760 = vunpack.c.l.b16 %v708
        %v761 = vunpack.c.l.b16 %v709
        %v762 = vunpack.c.l.b16 %v710
        %v763 = vunpack.c.l.b16 %v711
        %v764 = vunpack.c.l.b16 %v712
        %v765 = vunpack.c.l.b16 %v713
        %v766 = vunpack.c.l.b16 %v714
        %v767 = vpack.c.b16 %v752, %v751
        %v768 = vpack.c.b16 %v754, %v753
        %v769 = vpack.c.b16 %v756, %v755
        %v770 = vpack.c.b16 %v758, %v757
        %v771 = vpack.c.b16 %v760, %v759
        %v772 = vpack.c.b16 %v762, %v761
        %v773 = vpack.c.b16 %v764, %v763
        %v774 = vpack.c.b16 %v766, %v765
        %v799 = vunpack.c.l.b16 %v715
        %v800 = vunpack.c.l.b16 %v716
        %v801 = vunpack.c.l.b16 %v717
        %v802 = vunpack.c.l.b16 %v718
        %v803 = vunpack.c.l.b16 %v719
        %v804 = vunpack.c.l.b16 %v720
        %v805 = vunpack.c.l.b16 %v721
        %v806 = vunpack.c.l.b16 %v722
        %v807 = vunpack.c.l.b16 %v723
        %v808 = vunpack.c.l.b16 %v724
        %v809 = vunpack.c.l.b16 %v725
        %v810 = vunpack.c.l.b16 %v726
        %v811 = vunpack.c.l.b16 %v727
        %v812 = vunpack.c.l.b16 %v728
        %v813 = vunpack.c.l.b16 %v729
        %v814 = vunpack.c.l.b16 %v730
        %v815 = vpack.c.b16 %v800, %v799
        %v816 = vpack.c.b16 %v802, %v801
        %v817 = vpack.c.b16 %v804, %v803
        %v818 = vpack.c.b16 %v806, %v805
        %v819 = vpack.c.b16 %v808, %v807
        %v820 = vpack.c.b16 %v810, %v809
        %v821 = vpack.c.b16 %v812, %v811
        %v822 = vpack.c.b16 %v814, %v813
        %831 = vmatpush.bf16.msra.mxu0 %v822
        %832 = vmatpush.bf16.msra.mxu0 %v821
        %833 = vmatpush.bf16.msra.mxu0 %v820
        %834 = vmatpush.bf16.msra.mxu0 %v819
        %835 = vmatpush.bf16.msra.mxu0 %v818
        %836 = vmatpush.bf16.msra.mxu0 %v817
        %837 = vmatpush.bf16.msra.mxu0 %v816
        %838 = vmatpush.bf16.msra.mxu0 %v815
        %839 = vmatmul.bf16.gmra.mxu0 %v767
        %v840 = vpop.f32.mrf.mxu0
        %v841 = vadd.f32 %v733, %v840
        %v842 = vpop.f32.mrf.mxu0
        %v843 = vadd.f32 %v733, %v842
        %844 = vmatmul.bf16.gmra.mxu0 %v768
        %v845 = vpop.f32.mrf.mxu0
        %v846 = vadd.f32 %v733, %v845
        %v847 = vpop.f32.mrf.mxu0
        %v848 = vadd.f32 %v733, %v847
        %849 = vmatmul.bf16.gmra.mxu0 %v769
        %v850 = vpop.f32.mrf.mxu0
        %v851 = vadd.f32 %v733, %v850
        %v852 = vpop.f32.mrf.mxu0
        %v853 = vadd.f32 %v733, %v852
        %854 = vmatmul.bf16.gmra.mxu0 %v770
        %v855 = vpop.f32.mrf.mxu0
        %v856 = vadd.f32 %v733, %v855
        %v857 = vpop.f32.mrf.mxu0
        %v858 = vadd.f32 %v733, %v857
        %859 = vmatmul.bf16.gmra.mxu0 %v771
        %v860 = vpop.f32.mrf.mxu0
        %v861 = vadd.f32 %v733, %v860
        %v862 = vpop.f32.mrf.mxu0
        %v863 = vadd.f32 %v733, %v862
        %864 = vmatmul.bf16.gmra.mxu0 %v772
        %v865 = vpop.f32.mrf.mxu0
        %v866 = vadd.f32 %v733, %v865
        %v867 = vpop.f32.mrf.mxu0
        %v868 = vadd.f32 %v733, %v867
        %869 = vmatmul.bf16.gmra.mxu0 %v773
        %v870 = vpop.f32.mrf.mxu0
        %v871 = vadd.f32 %v733, %v870
        %v872 = vpop.f32.mrf.mxu0
        %v873 = vadd.f32 %v733, %v872
        %874 = vmatmul.bf16.gmra.mxu0 %v774
        %v875 = vpop.f32.mrf.mxu0
        %v876 = vadd.f32 %v733, %v875
        %v877 = vpop.f32.mrf.mxu0
        %v878 = vadd.f32 %v733, %v877
        %879 = vdwg.mxu0
        %v880 = vpack.c.bf16 %v841, %v841
        %v881 = vpack.c.bf16 %v843, %v843
        %v882 = vpack.c.bf16 %v846, %v846
        %v883 = vpack.c.bf16 %v848, %v848
        %v884 = vpack.c.bf16 %v851, %v851
        %v885 = vpack.c.bf16 %v853, %v853
        %v886 = vpack.c.bf16 %v856, %v856
        %v887 = vpack.c.bf16 %v858, %v858
        %v888 = vpack.c.bf16 %v861, %v861
        %v889 = vpack.c.bf16 %v863, %v863
        %v890 = vpack.c.bf16 %v866, %v866
        %v891 = vpack.c.bf16 %v868, %v868
        %v892 = vpack.c.bf16 %v871, %v871
        %v893 = vpack.c.bf16 %v873, %v873
        %v894 = vpack.c.bf16 %v876, %v876
        %v895 = vpack.c.bf16 %v878, %v878
        %p896 = scmp.eq.s32.totalorder %s44, 0
        // Predicated region
        $region93: #{tpu_custom_call.1} parent=63 // pred_check
          %p897 = pneg %p896
        $region94: #{tpu_custom_call.1} parent=63 // pred_check_branch
          %899 = sbr.rel (%p897) target = $region96
        $region95: #{tpu_custom_call.1} parent=63 // pred_region
          %v900 = vld [vmem:[%s590] sm:$0xf]
          %v901 = vld [vmem:[%s590 + $0x4] sm:$0xf]
          %v902 = vld [vmem:[%s590 + $0x8] sm:$0xf]
          %v903 = vld [vmem:[%s590 + $0xc] sm:$0xf]
          %v904 = vld [vmem:[%s590 + $0x10] sm:$0xf]
          %v905 = vld [vmem:[%s590 + $0x14] sm:$0xf]
          %v906 = vld [vmem:[%s590 + $0x18] sm:$0xf]
          %v907 = vld [vmem:[%s590 + $0x1c] sm:$0xf]
          %v908 = vld [vmem:[%s590 + $0x20] sm:$0xf]
          %v909 = vld [vmem:[%s590 + $0x24] sm:$0xf]
          %v910 = vld [vmem:[%s590 + $0x28] sm:$0xf]
          %v911 = vld [vmem:[%s590 + $0x2c] sm:$0xf]
          %v912 = vld [vmem:[%s590 + $0x30] sm:$0xf]
          %v913 = vld [vmem:[%s590 + $0x34] sm:$0xf]
          %v914 = vld [vmem:[%s590 + $0x38] sm:$0xf]
          %v915 = vld [vmem:[%s590 + $0x3c] sm:$0xf]
          %v916 = vld [vmem:[#allocation13] sm:$0xf]
          %v917 = vld [vmem:[#allocation13 + $0x4] sm:$0xf]
          %v918 = vld [vmem:[#allocation13 + $0x8] sm:$0xf]
          %v919 = vld [vmem:[#allocation13 + $0xc] sm:$0xf]
          %v920 = vld [vmem:[#allocation13 + $0x10] sm:$0xf]
          %v921 = vld [vmem:[#allocation13 + $0x14] sm:$0xf]
          %v922 = vld [vmem:[#allocation13 + $0x18] sm:$0xf]
          %v923 = vld [vmem:[#allocation13 + $0x1c] sm:$0xf]
          %v924 = vld [vmem:[#allocation13 + $0x20] sm:$0xf]
          %v925 = vld [vmem:[#allocation13 + $0x24] sm:$0xf]
          %v926 = vld [vmem:[#allocation13 + $0x28] sm:$0xf]
          %v927 = vld [vmem:[#allocation13 + $0x2c] sm:$0xf]
          %v928 = vld [vmem:[#allocation13 + $0x30] sm:$0xf]
          %v929 = vld [vmem:[#allocation13 + $0x34] sm:$0xf]
          %v930 = vld [vmem:[#allocation13 + $0x38] sm:$0xf]
          %v931 = vld [vmem:[#allocation13 + $0x3c] sm:$0xf]
          %v932 = vld [vmem:[%s692] sm:$0x1]
          %v934 = vperm.slane %v932, 0
          %v952 = vunpack.c.l.b16 %v900
          %v953 = vunpack.c.l.b16 %v901
          %v954 = vunpack.c.l.b16 %v902
          %v955 = vunpack.c.l.b16 %v903
          %v956 = vunpack.c.l.b16 %v904
          %v957 = vunpack.c.l.b16 %v905
          %v958 = vunpack.c.l.b16 %v906
          %v959 = vunpack.c.l.b16 %v907
          %v960 = vunpack.c.l.b16 %v908
          %v961 = vunpack.c.l.b16 %v909
          %v962 = vunpack.c.l.b16 %v910
          %v963 = vunpack.c.l.b16 %v911
          %v964 = vunpack.c.l.b16 %v912
          %v965 = vunpack.c.l.b16 %v913
          %v966 = vunpack.c.l.b16 %v914
          %v967 = vunpack.c.l.b16 %v915
          %v968 = vpack.c.b16 %v953, %v952
          %v969 = vpack.c.b16 %v955, %v954
          %v970 = vpack.c.b16 %v957, %v956
          %v971 = vpack.c.b16 %v959, %v958
          %v972 = vpack.c.b16 %v961, %v960
          %v973 = vpack.c.b16 %v963, %v962
          %v974 = vpack.c.b16 %v965, %v964
          %v975 = vpack.c.b16 %v967, %v966
          %v1000 = vunpack.c.l.b16 %v916
          %v1001 = vunpack.c.l.b16 %v917
          %v1002 = vunpack.c.l.b16 %v918
          %v1003 = vunpack.c.l.b16 %v919
          %v1004 = vunpack.c.l.b16 %v920
          %v1005 = vunpack.c.l.b16 %v921
          %v1006 = vunpack.c.l.b16 %v922
          %v1007 = vunpack.c.l.b16 %v923
          %v1008 = vunpack.c.l.b16 %v924
          %v1009 = vunpack.c.l.b16 %v925
          %v1010 = vunpack.c.l.b16 %v926
          %v1011 = vunpack.c.l.b16 %v927
          %v1012 = vunpack.c.l.b16 %v928
          %v1013 = vunpack.c.l.b16 %v929
          %v1014 = vunpack.c.l.b16 %v930
          %v1015 = vunpack.c.l.b16 %v931
          %v1016 = vpack.c.b16 %v1001, %v1000
          %v1017 = vpack.c.b16 %v1003, %v1002
          %v1018 = vpack.c.b16 %v1005, %v1004
          %v1019 = vpack.c.b16 %v1007, %v1006
          %v1020 = vpack.c.b16 %v1009, %v1008
          %v1021 = vpack.c.b16 %v1011, %v1010
          %v1022 = vpack.c.b16 %v1013, %v1012
          %v1023 = vpack.c.b16 %v1015, %v1014
          %1032 = vmatpush.bf16.msra.mxu0 %v1023
          %1033 = vmatpush.bf16.msra.mxu0 %v1022
          %1034 = vmatpush.bf16.msra.mxu0 %v1021
          %1035 = vmatpush.bf16.msra.mxu0 %v1020
          %1036 = vmatpush.bf16.msra.mxu0 %v1019
          %1037 = vmatpush.bf16.msra.mxu0 %v1018
          %1038 = vmatpush.bf16.msra.mxu0 %v1017
          %1039 = vmatpush.bf16.msra.mxu0 %v1016
          %1040 = vmatmul.bf16.gmra.mxu0 %v968
          %v1041 = vpop.f32.mrf.mxu0
          %v1042 = vadd.f32 %v934, %v1041
          %v1043 = vpop.f32.mrf.mxu0
          %v1044 = vadd.f32 %v934, %v1043
          %1045 = vmatmul.bf16.gmra.mxu0 %v969
          %v1046 = vpop.f32.mrf.mxu0
          %v1047 = vadd.f32 %v934, %v1046
          %v1048 = vpop.f32.mrf.mxu0
          %v1049 = vadd.f32 %v934, %v1048
          %1050 = vmatmul.bf16.gmra.mxu0 %v970
          %v1051 = vpop.f32.mrf.mxu0
          %v1052 = vadd.f32 %v934, %v1051
          %v1053 = vpop.f32.mrf.mxu0
          %v1054 = vadd.f32 %v934, %v1053
          %1055 = vmatmul.bf16.gmra.mxu0 %v971
          %v1056 = vpop.f32.mrf.mxu0
          %v1057 = vadd.f32 %v934, %v1056
          %v1058 = vpop.f32.mrf.mxu0
          %v1059 = vadd.f32 %v934, %v1058
          %1060 = vmatmul.bf16.gmra.mxu0 %v972
          %v1061 = vpop.f32.mrf.mxu0
          %v1062 = vadd.f32 %v934, %v1061
          %v1063 = vpop.f32.mrf.mxu0
          %v1064 = vadd.f32 %v934, %v1063
          %1065 = vmatmul.bf16.gmra.mxu0 %v973
          %v1066 = vpop.f32.mrf.mxu0
          %v1067 = vadd.f32 %v934, %v1066
          %v1068 = vpop.f32.mrf.mxu0
          %v1069 = vadd.f32 %v934, %v1068
          %1070 = vmatmul.bf16.gmra.mxu0 %v974
          %v1071 = vpop.f32.mrf.mxu0
          %v1072 = vadd.f32 %v934, %v1071
          %v1073 = vpop.f32.mrf.mxu0
          %v1074 = vadd.f32 %v934, %v1073
          %1075 = vmatmul.bf16.gmra.mxu0 %v975
          %v1076 = vpop.f32.mrf.mxu0
          %v1077 = vadd.f32 %v934, %v1076
          %v1078 = vpop.f32.mrf.mxu0
          %v1079 = vadd.f32 %v934, %v1078
          %1080 = vdwg.mxu0
          %v1081 = vld [vmem:[%s600] sm:$0xf]
          %v1082 = vld [vmem:[%s600 + $0x4] sm:$0xf]
          %v1083 = vld [vmem:[%s600 + $0x8] sm:$0xf]
          %v1084 = vld [vmem:[%s600 + $0xc] sm:$0xf]
          %v1085 = vld [vmem:[%s600 + $0x10] sm:$0xf]
          %v1086 = vld [vmem:[%s600 + $0x14] sm:$0xf]
          %v1087 = vld [vmem:[%s600 + $0x18] sm:$0xf]
          %v1088 = vld [vmem:[%s600 + $0x1c] sm:$0xf]
          %v1089 = vld [vmem:[%s600 + $0x20] sm:$0xf]
          %v1090 = vld [vmem:[%s600 + $0x24] sm:$0xf]
          %v1091 = vld [vmem:[%s600 + $0x28] sm:$0xf]
          %v1092 = vld [vmem:[%s600 + $0x2c] sm:$0xf]
          %v1093 = vld [vmem:[%s600 + $0x30] sm:$0xf]
          %v1094 = vld [vmem:[%s600 + $0x34] sm:$0xf]
          %v1095 = vld [vmem:[%s600 + $0x38] sm:$0xf]
          %v1096 = vld [vmem:[%s600 + $0x3c] sm:$0xf]
          %v1097 = vld [vmem:[#allocation14] sm:$0xf]
          %v1098 = vld [vmem:[#allocation14 + $0x4] sm:$0xf]
          %v1099 = vld [vmem:[#allocation14 + $0x8] sm:$0xf]
          %v1100 = vld [vmem:[#allocation14 + $0xc] sm:$0xf]
          %v1101 = vld [vmem:[#allocation14 + $0x10] sm:$0xf]
          %v1102 = vld [vmem:[#allocation14 + $0x14] sm:$0xf]
          %v1103 = vld [vmem:[#allocation14 + $0x18] sm:$0xf]
          %v1104 = vld [vmem:[#allocation14 + $0x1c] sm:$0xf]
          %v1105 = vld [vmem:[#allocation14 + $0x20] sm:$0xf]
          %v1106 = vld [vmem:[#allocation14 + $0x24] sm:$0xf]
          %v1107 = vld [vmem:[#allocation14 + $0x28] sm:$0xf]
          %v1108 = vld [vmem:[#allocation14 + $0x2c] sm:$0xf]
          %v1109 = vld [vmem:[#allocation14 + $0x30] sm:$0xf]
          %v1110 = vld [vmem:[#allocation14 + $0x34] sm:$0xf]
          %v1111 = vld [vmem:[#allocation14 + $0x38] sm:$0xf]
          %v1112 = vld [vmem:[#allocation14 + $0x3c] sm:$0xf]
          %v1113 = vld [vmem:[%s695] sm:$0x1]
          %v1115 = vperm.slane %v1113, 0
          %v1133 = vunpack.c.l.b16 %v1081
          %v1134 = vunpack.c.l.b16 %v1082
          %v1135 = vunpack.c.l.b16 %v1083
          %v1136 = vunpack.c.l.b16 %v1084
          %v1137 = vunpack.c.l.b16 %v1085
          %v1138 = vunpack.c.l.b16 %v1086
          %v1139 = vunpack.c.l.b16 %v1087
          %v1140 = vunpack.c.l.b16 %v1088
          %v1141 = vunpack.c.l.b16 %v1089
          %v1142 = vunpack.c.l.b16 %v1090
          %v1143 = vunpack.c.l.b16 %v1091
          %v1144 = vunpack.c.l.b16 %v1092
          %v1145 = vunpack.c.l.b16 %v1093
          %v1146 = vunpack.c.l.b16 %v1094
          %v1147 = vunpack.c.l.b16 %v1095
          %v1148 = vunpack.c.l.b16 %v1096
          %v1149 = vpack.c.b16 %v1134, %v1133
          %v1150 = vpack.c.b16 %v1136, %v1135
          %v1151 = vpack.c.b16 %v1138, %v1137
          %v1152 = vpack.c.b16 %v1140, %v1139
          %v1153 = vpack.c.b16 %v1142, %v1141
          %v1154 = vpack.c.b16 %v1144, %v1143
          %v1155 = vpack.c.b16 %v1146, %v1145
          %v1156 = vpack.c.b16 %v1148, %v1147
          %v1181 = vunpack.c.l.b16 %v1097
          %v1182 = vunpack.c.l.b16 %v1098
          %v1183 = vunpack.c.l.b16 %v1099
          %v1184 = vunpack.c.l.b16 %v1100
          %v1185 = vunpack.c.l.b16 %v1101
          %v1186 = vunpack.c.l.b16 %v1102
          %v1187 = vunpack.c.l.b16 %v1103
          %v1188 = vunpack.c.l.b16 %v1104
          %v1189 = vunpack.c.l.b16 %v1105
          %v1190 = vunpack.c.l.b16 %v1106
          %v1191 = vunpack.c.l.b16 %v1107
          %v1192 = vunpack.c.l.b16 %v1108
          %v1193 = vunpack.c.l.b16 %v1109
          %v1194 = vunpack.c.l.b16 %v1110
          %v1195 = vunpack.c.l.b16 %v1111
          %v1196 = vunpack.c.l.b16 %v1112
          %v1197 = vpack.c.b16 %v1182, %v1181
          %v1198 = vpack.c.b16 %v1184, %v1183
          %v1199 = vpack.c.b16 %v1186, %v1185
          %v1200 = vpack.c.b16 %v1188, %v1187
          %v1201 = vpack.c.b16 %v1190, %v1189
          %v1202 = vpack.c.b16 %v1192, %v1191
          %v1203 = vpack.c.b16 %v1194, %v1193
          %v1204 = vpack.c.b16 %v1196, %v1195
          %1213 = vmatpush.bf16.msra.mxu0 %v1204
          %1214 = vmatpush.bf16.msra.mxu0 %v1203
          %1215 = vmatpush.bf16.msra.mxu0 %v1202
          %1216 = vmatpush.bf16.msra.mxu0 %v1201
          %1217 = vmatpush.bf16.msra.mxu0 %v1200
          %1218 = vmatpush.bf16.msra.mxu0 %v1199
          %1219 = vmatpush.bf16.msra.mxu0 %v1198
          %1220 = vmatpush.bf16.msra.mxu0 %v1197
          %1221 = vmatmul.bf16.gmra.mxu0 %v1149
          %v1222 = vpop.f32.mrf.mxu0
          %v1223 = vadd.f32 %v1115, %v1222
          %v1224 = vpop.f32.mrf.mxu0
          %v1225 = vadd.f32 %v1115, %v1224
          %1226 = vmatmul.bf16.gmra.mxu0 %v1150
          %v1227 = vpop.f32.mrf.mxu0
          %v1228 = vadd.f32 %v1115, %v1227
          %v1229 = vpop.f32.mrf.mxu0
          %v1230 = vadd.f32 %v1115, %v1229
          %1231 = vmatmul.bf16.gmra.mxu0 %v1151
          %v1232 = vpop.f32.mrf.mxu0
          %v1233 = vadd.f32 %v1115, %v1232
          %v1234 = vpop.f32.mrf.mxu0
          %v1235 = vadd.f32 %v1115, %v1234
          %1236 = vmatmul.bf16.gmra.mxu0 %v1152
          %v1237 = vpop.f32.mrf.mxu0
          %v1238 = vadd.f32 %v1115, %v1237
          %v1239 = vpop.f32.mrf.mxu0
          %v1240 = vadd.f32 %v1115, %v1239
          %1241 = vmatmul.bf16.gmra.mxu0 %v1153
          %v1242 = vpop.f32.mrf.mxu0
          %v1243 = vadd.f32 %v1115, %v1242
          %v1244 = vpop.f32.mrf.mxu0
          %v1245 = vadd.f32 %v1115, %v1244
          %1246 = vmatmul.bf16.gmra.mxu0 %v1154
          %v1247 = vpop.f32.mrf.mxu0
          %v1248 = vadd.f32 %v1115, %v1247
          %v1249 = vpop.f32.mrf.mxu0
          %v1250 = vadd.f32 %v1115, %v1249
          %1251 = vmatmul.bf16.gmra.mxu0 %v1155
          %v1252 = vpop.f32.mrf.mxu0
          %v1253 = vadd.f32 %v1115, %v1252
          %v1254 = vpop.f32.mrf.mxu0
          %v1255 = vadd.f32 %v1115, %v1254
          %1256 = vmatmul.bf16.gmra.mxu0 %v1156
          %v1257 = vpop.f32.mrf.mxu0
          %v1258 = vadd.f32 %v1115, %v1257
          %v1259 = vpop.f32.mrf.mxu0
          %v1260 = vadd.f32 %v1115, %v1259
          %1261 = vdwg.mxu0
          %v1262 = vpack.c.bf16 %v1042, %v1042
          %v1263 = vpack.c.bf16 %v1044, %v1044
          %v1264 = vpack.c.bf16 %v1047, %v1047
          %v1265 = vpack.c.bf16 %v1049, %v1049
          %v1266 = vpack.c.bf16 %v1052, %v1052
          %v1267 = vpack.c.bf16 %v1054, %v1054
          %v1268 = vpack.c.bf16 %v1057, %v1057
          %v1269 = vpack.c.bf16 %v1059, %v1059
          %v1270 = vpack.c.bf16 %v1062, %v1062
          %v1271 = vpack.c.bf16 %v1064, %v1064
          %v1272 = vpack.c.bf16 %v1067, %v1067
          %v1273 = vpack.c.bf16 %v1069, %v1069
          %v1274 = vpack.c.bf16 %v1072, %v1072
          %v1275 = vpack.c.bf16 %v1074, %v1074
          %v1276 = vpack.c.bf16 %v1077, %v1077
          %v1277 = vpack.c.bf16 %v1079, %v1079
          %s1278 = smul.u32 %s45, 16
          %s1279 = smul.addr %s1278, 4
          %s1280 = scalar_lea.vmem [#allocation3], %s1279
          %1281 = vst [vmem:[%s1280] sm:$0xf] %v1262
          %1282 = vst [vmem:[%s1280 + $0x4] sm:$0xf] %v1263
          %1283 = vst [vmem:[%s1280 + $0x8] sm:$0xf] %v1264
          %1284 = vst [vmem:[%s1280 + $0xc] sm:$0xf] %v1265
          %1285 = vst [vmem:[%s1280 + $0x10] sm:$0xf] %v1266
          %1286 = vst [vmem:[%s1280 + $0x14] sm:$0xf] %v1267
          %1287 = vst [vmem:[%s1280 + $0x18] sm:$0xf] %v1268
          %1288 = vst [vmem:[%s1280 + $0x1c] sm:$0xf] %v1269
          %1289 = vst [vmem:[%s1280 + $0x20] sm:$0xf] %v1270
          %1290 = vst [vmem:[%s1280 + $0x24] sm:$0xf] %v1271
          %1291 = vst [vmem:[%s1280 + $0x28] sm:$0xf] %v1272
          %1292 = vst [vmem:[%s1280 + $0x2c] sm:$0xf] %v1273
          %1293 = vst [vmem:[%s1280 + $0x30] sm:$0xf] %v1274
          %1294 = vst [vmem:[%s1280 + $0x34] sm:$0xf] %v1275
          %1295 = vst [vmem:[%s1280 + $0x38] sm:$0xf] %v1276
          %1296 = vst [vmem:[%s1280 + $0x3c] sm:$0xf] %v1277
          %v1297 = vpack.c.bf16 %v1223, %v1223
          %v1298 = vpack.c.bf16 %v1225, %v1225
          %v1299 = vpack.c.bf16 %v1228, %v1228
          %v1300 = vpack.c.bf16 %v1230, %v1230
          %v1301 = vpack.c.bf16 %v1233, %v1233
          %v1302 = vpack.c.bf16 %v1235, %v1235
          %v1303 = vpack.c.bf16 %v1238, %v1238
          %v1304 = vpack.c.bf16 %v1240, %v1240
          %v1305 = vpack.c.bf16 %v1243, %v1243
          %v1306 = vpack.c.bf16 %v1245, %v1245
          %v1307 = vpack.c.bf16 %v1248, %v1248
          %v1308 = vpack.c.bf16 %v1250, %v1250
          %v1309 = vpack.c.bf16 %v1253, %v1253
          %v1310 = vpack.c.bf16 %v1255, %v1255
          %v1311 = vpack.c.bf16 %v1258, %v1258
          %v1312 = vpack.c.bf16 %v1260, %v1260
          %s1313 = smul.addr %s1278, 4
          %s1314 = scalar_lea.vmem [#allocation4], %s1313
          %1315 = vst [vmem:[%s1314] sm:$0xf] %v1297
          %1316 = vst [vmem:[%s1314 + $0x4] sm:$0xf] %v1298
          %1317 = vst [vmem:[%s1314 + $0x8] sm:$0xf] %v1299
          %1318 = vst [vmem:[%s1314 + $0xc] sm:$0xf] %v1300
          %1319 = vst [vmem:[%s1314 + $0x10] sm:$0xf] %v1301
          %1320 = vst [vmem:[%s1314 + $0x14] sm:$0xf] %v1302
          %1321 = vst [vmem:[%s1314 + $0x18] sm:$0xf] %v1303
          %1322 = vst [vmem:[%s1314 + $0x1c] sm:$0xf] %v1304
          %1323 = vst [vmem:[%s1314 + $0x20] sm:$0xf] %v1305
          %1324 = vst [vmem:[%s1314 + $0x24] sm:$0xf] %v1306
          %1325 = vst [vmem:[%s1314 + $0x28] sm:$0xf] %v1307
          %1326 = vst [vmem:[%s1314 + $0x2c] sm:$0xf] %v1308
          %1327 = vst [vmem:[%s1314 + $0x30] sm:$0xf] %v1309
          %1328 = vst [vmem:[%s1314 + $0x34] sm:$0xf] %v1310
          %1329 = vst [vmem:[%s1314 + $0x38] sm:$0xf] %v1311
          %1330 = vst [vmem:[%s1314 + $0x3c] sm:$0xf] %v1312
        $region96: #{tpu_custom_call.1} parent=63 // pred_fallthru
          _
        %s1331 = smul.u32 %s45, 16
        %s1332 = smul.addr %s1331, 4
        %s1333 = scalar_lea.vmem [#allocation3], %s1332
        %v1334 = vld [vmem:[%s1333] sm:$0xf]
        %v1335 = vld [vmem:[%s1333 + $0x4] sm:$0xf]
        %v1336 = vld [vmem:[%s1333 + $0x8] sm:$0xf]
        %v1337 = vld [vmem:[%s1333 + $0xc] sm:$0xf]
        %v1338 = vld [vmem:[%s1333 + $0x10] sm:$0xf]
        %v1339 = vld [vmem:[%s1333 + $0x14] sm:$0xf]
        %v1340 = vld [vmem:[%s1333 + $0x18] sm:$0xf]
        %v1341 = vld [vmem:[%s1333 + $0x1c] sm:$0xf]
        %v1342 = vld [vmem:[%s1333 + $0x20] sm:$0xf]
        %v1343 = vld [vmem:[%s1333 + $0x24] sm:$0xf]
        %v1344 = vld [vmem:[%s1333 + $0x28] sm:$0xf]
        %v1345 = vld [vmem:[%s1333 + $0x2c] sm:$0xf]
        %v1346 = vld [vmem:[%s1333 + $0x30] sm:$0xf]
        %v1347 = vld [vmem:[%s1333 + $0x34] sm:$0xf]
        %v1348 = vld [vmem:[%s1333 + $0x38] sm:$0xf]
        %v1349 = vld [vmem:[%s1333 + $0x3c] sm:$0xf]
        %s1350 = smul.addr %s1331, 4
        %s1351 = scalar_lea.vmem [#allocation4], %s1350
        %v1352 = vld [vmem:[%s1351] sm:$0xf]
        %v1353 = vld [vmem:[%s1351 + $0x4] sm:$0xf]
        %v1354 = vld [vmem:[%s1351 + $0x8] sm:$0xf]
        %v1355 = vld [vmem:[%s1351 + $0xc] sm:$0xf]
        %v1356 = vld [vmem:[%s1351 + $0x10] sm:$0xf]
        %v1357 = vld [vmem:[%s1351 + $0x14] sm:$0xf]
        %v1358 = vld [vmem:[%s1351 + $0x18] sm:$0xf]
        %v1359 = vld [vmem:[%s1351 + $0x1c] sm:$0xf]
        %v1360 = vld [vmem:[%s1351 + $0x20] sm:$0xf]
        %v1361 = vld [vmem:[%s1351 + $0x24] sm:$0xf]
        %v1362 = vld [vmem:[%s1351 + $0x28] sm:$0xf]
        %v1363 = vld [vmem:[%s1351 + $0x2c] sm:$0xf]
        %v1364 = vld [vmem:[%s1351 + $0x30] sm:$0xf]
        %v1365 = vld [vmem:[%s1351 + $0x34] sm:$0xf]
        %v1366 = vld [vmem:[%s1351 + $0x38] sm:$0xf]
        %v1367 = vld [vmem:[%s1351 + $0x3c] sm:$0xf]
        %p1368 = scmp.eq.s32.totalorder %s45, 0
        // Predicated region
        $region97: #{tpu_custom_call.1} parent=63 // pred_check
          %p1369 = pneg %p1368
        $region98: #{tpu_custom_call.1} parent=63 // pred_check_branch
          %1371 = sbr.rel (%p1369) target = $region100
        $region99: #{tpu_custom_call.1} parent=63 // pred_region
          %1372 = vst [vmem:[#allocation2] sm:$0xff] 0.0
          %1373 = vst [vmem:[#allocation2 + $0x8] sm:$0xff] 0.0
          %1374 = vst [vmem:[#allocation2 + $0x10] sm:$0xff] 0.0
          %1375 = vst [vmem:[#allocation2 + $0x18] sm:$0xff] 0.0
          %1376 = vst [vmem:[#allocation2 + $0x20] sm:$0xff] 0.0
          %1377 = vst [vmem:[#allocation2 + $0x28] sm:$0xff] 0.0
          %1378 = vst [vmem:[#allocation2 + $0x30] sm:$0xff] 0.0
          %1379 = vst [vmem:[#allocation2 + $0x38] sm:$0xff] 0.0
          %1380 = vst [vmem:[#allocation2 + $0x40] sm:$0xff] 0.0
          %1381 = vst [vmem:[#allocation2 + $0x48] sm:$0xff] 0.0
          %1382 = vst [vmem:[#allocation2 + $0x50] sm:$0xff] 0.0
          %1383 = vst [vmem:[#allocation2 + $0x58] sm:$0xff] 0.0
          %1384 = vst [vmem:[#allocation2 + $0x60] sm:$0xff] 0.0
          %1385 = vst [vmem:[#allocation2 + $0x68] sm:$0xff] 0.0
          %1386 = vst [vmem:[#allocation2 + $0x70] sm:$0xff] 0.0
          %1387 = vst [vmem:[#allocation2 + $0x78] sm:$0xff] 0.0
        $region100: #{tpu_custom_call.1} parent=63 // pred_fallthru
          _
        %v1404 = vunpack.c.l.b16 %v880
        %v1405 = vunpack.c.l.b16 %v881
        %v1406 = vunpack.c.l.b16 %v882
        %v1407 = vunpack.c.l.b16 %v883
        %v1408 = vunpack.c.l.b16 %v884
        %v1409 = vunpack.c.l.b16 %v885
        %v1410 = vunpack.c.l.b16 %v886
        %v1411 = vunpack.c.l.b16 %v887
        %v1412 = vunpack.c.l.b16 %v888
        %v1413 = vunpack.c.l.b16 %v889
        %v1414 = vunpack.c.l.b16 %v890
        %v1415 = vunpack.c.l.b16 %v891
        %v1416 = vunpack.c.l.b16 %v892
        %v1417 = vunpack.c.l.b16 %v893
        %v1418 = vunpack.c.l.b16 %v894
        %v1419 = vunpack.c.l.b16 %v895
        %v1420 = vpack.c.b16 %v1405, %v1404
        %v1421 = vpack.c.b16 %v1407, %v1406
        %v1422 = vpack.c.b16 %v1409, %v1408
        %v1423 = vpack.c.b16 %v1411, %v1410
        %v1424 = vpack.c.b16 %v1413, %v1412
        %v1425 = vpack.c.b16 %v1415, %v1414
        %v1426 = vpack.c.b16 %v1417, %v1416
        %v1427 = vpack.c.b16 %v1419, %v1418
        %v1444 = vunpack.c.l.b16 %v1334
        %v1445 = vunpack.c.l.b16 %v1335
        %v1446 = vunpack.c.l.b16 %v1336
        %v1447 = vunpack.c.l.b16 %v1337
        %v1448 = vunpack.c.l.b16 %v1338
        %v1449 = vunpack.c.l.b16 %v1339
        %v1450 = vunpack.c.l.b16 %v1340
        %v1451 = vunpack.c.l.b16 %v1341
        %v1452 = vunpack.c.l.b16 %v1342
        %v1453 = vunpack.c.l.b16 %v1343
        %v1454 = vunpack.c.l.b16 %v1344
        %v1455 = vunpack.c.l.b16 %v1345
        %v1456 = vunpack.c.l.b16 %v1346
        %v1457 = vunpack.c.l.b16 %v1347
        %v1458 = vunpack.c.l.b16 %v1348
        %v1459 = vunpack.c.l.b16 %v1349
        %v1460 = vpack.c.b16 %v1445, %v1444
        %v1461 = vpack.c.b16 %v1447, %v1446
        %v1462 = vpack.c.b16 %v1449, %v1448
        %v1463 = vpack.c.b16 %v1451, %v1450
        %v1464 = vpack.c.b16 %v1453, %v1452
        %v1465 = vpack.c.b16 %v1455, %v1454
        %v1466 = vpack.c.b16 %v1457, %v1456
        %v1467 = vpack.c.b16 %v1459, %v1458
        %vm1468 = vcmask 261120
        %v1470 = vsel %vm1468, %v1420, 0
        %v1473 = vsel %vm1468, %v1421, 0
        %v1476 = vsel %vm1468, %v1422, 0
        %v1479 = vsel %vm1468, %v1423, 0
        %v1482 = vsel %vm1468, %v1424, 0
        %v1485 = vsel %vm1468, %v1425, 0
        %v1488 = vsel %vm1468, %v1426, 0
        %v1491 = vsel %vm1468, %v1427, 0
        %v1494 = vsel %vm1468, %v1460, 0
        %v1497 = vsel %vm1468, %v1461, 0
        %v1500 = vsel %vm1468, %v1462, 0
        %v1503 = vsel %vm1468, %v1463, 0
        %v1506 = vsel %vm1468, %v1464, 0
        %v1509 = vsel %vm1468, %v1465, 0
        %v1512 = vsel %vm1468, %v1466, 0
        %v1515 = vsel %vm1468, %v1467, 0
        %1517 = vmatpush.bf16.xpose.msra.mxu0 %v1515
        %1518 = vmatpush.bf16.xpose.msra.mxu0 %v1512
        %1519 = vmatpush.bf16.xpose.msra.mxu0 %v1509
        %1520 = vmatpush.bf16.xpose.msra.mxu0 %v1506
        %1521 = vmatpush.bf16.xpose.msra.mxu0 %v1503
        %1522 = vmatpush.bf16.xpose.msra.mxu0 %v1500
        %1523 = vmatpush.bf16.xpose.msra.mxu0 %v1497
        %1524 = vmatpush.bf16.xpose.msra.mxu0 %v1494
        %1525 = vmatmul.bf16.gmra.mxu0 %v1470
        %v1526 = vpop.f32.mrf.mxu0
        %v1527 = vadd.f32 0.0, %v1526
        %v1528 = vpop.f32.mrf.mxu0
        %v1529 = vadd.f32 0.0, %v1528
        %1530 = vmatmul.bf16.gmra.mxu0 %v1473
        %v1531 = vpop.f32.mrf.mxu0
        %v1532 = vadd.f32 0.0, %v1531
        %v1533 = vpop.f32.mrf.mxu0
        %v1534 = vadd.f32 0.0, %v1533
        %1535 = vmatmul.bf16.gmra.mxu0 %v1476
        %v1536 = vpop.f32.mrf.mxu0
        %v1537 = vadd.f32 0.0, %v1536
        %v1538 = vpop.f32.mrf.mxu0
        %v1539 = vadd.f32 0.0, %v1538
        %1540 = vmatmul.bf16.gmra.mxu0 %v1479
        %v1541 = vpop.f32.mrf.mxu0
        %v1542 = vadd.f32 0.0, %v1541
        %v1543 = vpop.f32.mrf.mxu0
        %v1544 = vadd.f32 0.0, %v1543
        %1545 = vmatmul.bf16.gmra.mxu0 %v1482
        %v1546 = vpop.f32.mrf.mxu0
        %v1547 = vadd.f32 0.0, %v1546
        %v1548 = vpop.f32.mrf.mxu0
        %v1549 = vadd.f32 0.0, %v1548
        %1550 = vmatmul.bf16.gmra.mxu0 %v1485
        %v1551 = vpop.f32.mrf.mxu0
        %v1552 = vadd.f32 0.0, %v1551
        %v1553 = vpop.f32.mrf.mxu0
        %v1554 = vadd.f32 0.0, %v1553
        %1555 = vmatmul.bf16.gmra.mxu0 %v1488
        %v1556 = vpop.f32.mrf.mxu0
        %v1557 = vadd.f32 0.0, %v1556
        %v1558 = vpop.f32.mrf.mxu0
        %v1559 = vadd.f32 0.0, %v1558
        %1560 = vmatmul.bf16.gmra.mxu0 %v1491
        %v1561 = vpop.f32.mrf.mxu0
        %v1562 = vadd.f32 0.0, %v1561
        %v1563 = vpop.f32.mrf.mxu0
        %v1564 = vadd.f32 0.0, %v1563
        %1565 = vdwg.mxu0
        %1566 = vmax.xlane.f32.xlu0 %v1527
        %v1567 = vpop.xlane.xlu0 %1566
        %1568 = vmax.xlane.f32.xlu0 %v1529
        %v1569 = vpop.xlane.xlu0 %1568
        %1570 = vmax.xlane.f32.xlu0 %v1532
        %v1571 = vpop.xlane.xlu0 %1570
        %1572 = vmax.xlane.f32.xlu0 %v1534
        %v1573 = vpop.xlane.xlu0 %1572
        %1574 = vmax.xlane.f32.xlu0 %v1537
        %v1575 = vpop.xlane.xlu0 %1574
        %1576 = vmax.xlane.f32.xlu0 %v1539
        %v1577 = vpop.xlane.xlu0 %1576
        %1578 = vmax.xlane.f32.xlu0 %v1542
        %v1579 = vpop.xlane.xlu0 %1578
        %1580 = vmax.xlane.f32.xlu0 %v1544
        %v1581 = vpop.xlane.xlu0 %1580
        %1582 = vmax.xlane.f32.xlu0 %v1547
        %v1583 = vpop.xlane.xlu0 %1582
        %1584 = vmax.xlane.f32.xlu0 %v1549
        %v1585 = vpop.xlane.xlu0 %1584
        %1586 = vmax.xlane.f32.xlu0 %v1552
        %v1587 = vpop.xlane.xlu0 %1586
        %1588 = vmax.xlane.f32.xlu0 %v1554
        %v1589 = vpop.xlane.xlu0 %1588
        %1590 = vmax.xlane.f32.xlu0 %v1557
        %v1591 = vpop.xlane.xlu0 %1590
        %1592 = vmax.xlane.f32.xlu0 %v1559
        %v1593 = vpop.xlane.xlu0 %1592
        %1594 = vmax.xlane.f32.xlu0 %v1562
        %v1595 = vpop.xlane.xlu0 %1594
        %1596 = vmax.xlane.f32.xlu0 %v1564
        %v1597 = vpop.xlane.xlu0 %1596
        %v1598 = vsub.f32 %v1527, %v1567
        %v1599 = vsub.f32 %v1529, %v1569
        %v1600 = vsub.f32 %v1532, %v1571
        %v1601 = vsub.f32 %v1534, %v1573
        %v1602 = vsub.f32 %v1537, %v1575
        %v1603 = vsub.f32 %v1539, %v1577
        %v1604 = vsub.f32 %v1542, %v1579
        %v1605 = vsub.f32 %v1544, %v1581
        %v1606 = vsub.f32 %v1547, %v1583
        %v1607 = vsub.f32 %v1549, %v1585
        %v1608 = vsub.f32 %v1552, %v1587
        %v1609 = vsub.f32 %v1554, %v1589
        %v1610 = vsub.f32 %v1557, %v1591
        %v1611 = vsub.f32 %v1559, %v1593
        %v1612 = vsub.f32 %v1562, %v1595
        %v1613 = vsub.f32 %v1564, %v1597
        %v1614 = vmul.f32 %v1598, 1.442695
        %v1615 = vpow.pop %v1614
        %v1616 = vmul.f32 %v1599, 1.442695
        %v1617 = vpow.pop %v1616
        %v1618 = vmul.f32 %v1600, 1.442695
        %v1619 = vpow.pop %v1618
        %v1620 = vmul.f32 %v1601, 1.442695
        %v1621 = vpow.pop %v1620
        %v1622 = vmul.f32 %v1602, 1.442695
        %v1623 = vpow.pop %v1622
        %v1624 = vmul.f32 %v1603, 1.442695
        %v1625 = vpow.pop %v1624
        %v1626 = vmul.f32 %v1604, 1.442695
        %v1627 = vpow.pop %v1626
        %v1628 = vmul.f32 %v1605, 1.442695
        %v1629 = vpow.pop %v1628
        %v1630 = vmul.f32 %v1606, 1.442695
        %v1631 = vpow.pop %v1630
        %v1632 = vmul.f32 %v1607, 1.442695
        %v1633 = vpow.pop %v1632
        %v1634 = vmul.f32 %v1608, 1.442695
        %v1635 = vpow.pop %v1634
        %v1636 = vmul.f32 %v1609, 1.442695
        %v1637 = vpow.pop %v1636
        %v1638 = vmul.f32 %v1610, 1.442695
        %v1639 = vpow.pop %v1638
        %v1640 = vmul.f32 %v1611, 1.442695
        %v1641 = vpow.pop %v1640
        %v1642 = vmul.f32 %v1612, 1.442695
        %v1643 = vpow.pop %v1642
        %v1644 = vmul.f32 %v1613, 1.442695
        %v1645 = vpow.pop %v1644
        %1646 = vadd.xlane.f32.xlu0 %v1615
        %v1647 = vpop.xlane.xlu0 %1646
        %1648 = vadd.xlane.f32.xlu0 %v1617
        %v1649 = vpop.xlane.xlu0 %1648
        %1650 = vadd.xlane.f32.xlu0 %v1619
        %v1651 = vpop.xlane.xlu0 %1650
        %1652 = vadd.xlane.f32.xlu0 %v1621
        %v1653 = vpop.xlane.xlu0 %1652
        %1654 = vadd.xlane.f32.xlu0 %v1623
        %v1655 = vpop.xlane.xlu0 %1654
        %1656 = vadd.xlane.f32.xlu0 %v1625
        %v1657 = vpop.xlane.xlu0 %1656
        %1658 = vadd.xlane.f32.xlu0 %v1627
        %v1659 = vpop.xlane.xlu0 %1658
        %1660 = vadd.xlane.f32.xlu0 %v1629
        %v1661 = vpop.xlane.xlu0 %1660
        %1662 = vadd.xlane.f32.xlu0 %v1631
        %v1663 = vpop.xlane.xlu0 %1662
        %1664 = vadd.xlane.f32.xlu0 %v1633
        %v1665 = vpop.xlane.xlu0 %1664
        %1666 = vadd.xlane.f32.xlu0 %v1635
        %v1667 = vpop.xlane.xlu0 %1666
        %1668 = vadd.xlane.f32.xlu0 %v1637
        %v1669 = vpop.xlane.xlu0 %1668
        %1670 = vadd.xlane.f32.xlu0 %v1639
        %v1671 = vpop.xlane.xlu0 %1670
        %1672 = vadd.xlane.f32.xlu0 %v1641
        %v1673 = vpop.xlane.xlu0 %1672
        %1674 = vadd.xlane.f32.xlu0 %v1643
        %v1675 = vpop.xlane.xlu0 %1674
        %1676 = vadd.xlane.f32.xlu0 %v1645
        %v1677 = vpop.xlane.xlu0 %1676
        %v1678 = vrcp.pop %v1647
        %v1679 = vrcp.pop %v1649
        %v1680 = vrcp.pop %v1651
        %v1681 = vrcp.pop %v1653
        %v1682 = vrcp.pop %v1655
        %v1683 = vrcp.pop %v1657
        %v1684 = vrcp.pop %v1659
        %v1685 = vrcp.pop %v1661
        %v1686 = vrcp.pop %v1663
        %v1687 = vrcp.pop %v1665
        %v1688 = vrcp.pop %v1667
        %v1689 = vrcp.pop %v1669
        %v1690 = vrcp.pop %v1671
        %v1691 = vrcp.pop %v1673
        %v1692 = vrcp.pop %v1675
        %v1693 = vrcp.pop %v1677
        %v1694 = vmul.f32 %v1615, %v1678
        %v1695 = vmul.f32 %v1617, %v1679
        %v1696 = vmul.f32 %v1619, %v1680
        %v1697 = vmul.f32 %v1621, %v1681
        %v1698 = vmul.f32 %v1623, %v1682
        %v1699 = vmul.f32 %v1625, %v1683
        %v1700 = vmul.f32 %v1627, %v1684
        %v1701 = vmul.f32 %v1629, %v1685
        %v1702 = vmul.f32 %v1631, %v1686
        %v1703 = vmul.f32 %v1633, %v1687
        %v1704 = vmul.f32 %v1635, %v1688
        %v1705 = vmul.f32 %v1637, %v1689
        %v1706 = vmul.f32 %v1639, %v1690
        %v1707 = vmul.f32 %v1641, %v1691
        %v1708 = vmul.f32 %v1643, %v1692
        %v1709 = vmul.f32 %v1645, %v1693
        %1710 = vst [vmem:[%s685] sm:$0xff] %v1694
        %1711 = vst [vmem:[%s685 + $0x8] sm:$0xff] %v1695
        %1712 = vst [vmem:[%s685 + $0x10] sm:$0xff] %v1696
        %1713 = vst [vmem:[%s685 + $0x18] sm:$0xff] %v1697
        %1714 = vst [vmem:[%s685 + $0x20] sm:$0xff] %v1698
        %1715 = vst [vmem:[%s685 + $0x28] sm:$0xff] %v1699
        %1716 = vst [vmem:[%s685 + $0x30] sm:$0xff] %v1700
        %1717 = vst [vmem:[%s685 + $0x38] sm:$0xff] %v1701
        %1718 = vst [vmem:[%s685 + $0x40] sm:$0xff] %v1702
        %1719 = vst [vmem:[%s685 + $0x48] sm:$0xff] %v1703
        %1720 = vst [vmem:[%s685 + $0x50] sm:$0xff] %v1704
        %1721 = vst [vmem:[%s685 + $0x58] sm:$0xff] %v1705
        %1722 = vst [vmem:[%s685 + $0x60] sm:$0xff] %v1706
        %1723 = vst [vmem:[%s685 + $0x68] sm:$0xff] %v1707
        %1724 = vst [vmem:[%s685 + $0x70] sm:$0xff] %v1708
        %1725 = vst [vmem:[%s685 + $0x78] sm:$0xff] %v1709
        %v1726 = vpack.c.bf16 %v1695, %v1694
        %v1727 = vpack.c.bf16 %v1697, %v1696
        %v1728 = vpack.c.bf16 %v1699, %v1698
        %v1729 = vpack.c.bf16 %v1701, %v1700
        %v1730 = vpack.c.bf16 %v1703, %v1702
        %v1731 = vpack.c.bf16 %v1705, %v1704
        %v1732 = vpack.c.bf16 %v1707, %v1706
        %v1733 = vpack.c.bf16 %v1709, %v1708
        %v1750 = vunpack.c.l.b16 %v1352
        %v1751 = vunpack.c.l.b16 %v1353
        %v1752 = vunpack.c.l.b16 %v1354
        %v1753 = vunpack.c.l.b16 %v1355
        %v1754 = vunpack.c.l.b16 %v1356
        %v1755 = vunpack.c.l.b16 %v1357
        %v1756 = vunpack.c.l.b16 %v1358
        %v1757 = vunpack.c.l.b16 %v1359
        %v1758 = vunpack.c.l.b16 %v1360
        %v1759 = vunpack.c.l.b16 %v1361
        %v1760 = vunpack.c.l.b16 %v1362
        %v1761 = vunpack.c.l.b16 %v1363
        %v1762 = vunpack.c.l.b16 %v1364
        %v1763 = vunpack.c.l.b16 %v1365
        %v1764 = vunpack.c.l.b16 %v1366
        %v1765 = vunpack.c.l.b16 %v1367
        %v1766 = vpack.c.b16 %v1751, %v1750
        %v1767 = vpack.c.b16 %v1753, %v1752
        %v1768 = vpack.c.b16 %v1755, %v1754
        %v1769 = vpack.c.b16 %v1757, %v1756
        %v1770 = vpack.c.b16 %v1759, %v1758
        %v1771 = vpack.c.b16 %v1761, %v1760
        %v1772 = vpack.c.b16 %v1763, %v1762
        %v1773 = vpack.c.b16 %v1765, %v1764
        %1782 = vmatpush.bf16.msra.mxu0 %v1773
        %1783 = vmatpush.bf16.msra.mxu0 %v1772
        %1784 = vmatpush.bf16.msra.mxu0 %v1771
        %1785 = vmatpush.bf16.msra.mxu0 %v1770
        %1786 = vmatpush.bf16.msra.mxu0 %v1769
        %1787 = vmatpush.bf16.msra.mxu0 %v1768
        %1788 = vmatpush.bf16.msra.mxu0 %v1767
        %1789 = vmatpush.bf16.msra.mxu0 %v1766
        %1790 = vmatmul.bf16.gmra.mxu0 %v1726
        %v1791 = vpop.f32.mrf.mxu0
        %v1792 = vadd.f32 0.0, %v1791
        %v1793 = vpop.f32.mrf.mxu0
        %v1794 = vadd.f32 0.0, %v1793
        %1795 = vmatmul.bf16.gmra.mxu0 %v1727
        %v1796 = vpop.f32.mrf.mxu0
        %v1797 = vadd.f32 0.0, %v1796
        %v1798 = vpop.f32.mrf.mxu0
        %v1799 = vadd.f32 0.0, %v1798
        %1800 = vmatmul.bf16.gmra.mxu0 %v1728
        %v1801 = vpop.f32.mrf.mxu0
        %v1802 = vadd.f32 0.0, %v1801
        %v1803 = vpop.f32.mrf.mxu0
        %v1804 = vadd.f32 0.0, %v1803
        %1805 = vmatmul.bf16.gmra.mxu0 %v1729
        %v1806 = vpop.f32.mrf.mxu0
        %v1807 = vadd.f32 0.0, %v1806
        %v1808 = vpop.f32.mrf.mxu0
        %v1809 = vadd.f32 0.0, %v1808
        %1810 = vmatmul.bf16.gmra.mxu0 %v1730
        %v1811 = vpop.f32.mrf.mxu0
        %v1812 = vadd.f32 0.0, %v1811
        %v1813 = vpop.f32.mrf.mxu0
        %v1814 = vadd.f32 0.0, %v1813
        %1815 = vmatmul.bf16.gmra.mxu0 %v1731
        %v1816 = vpop.f32.mrf.mxu0
        %v1817 = vadd.f32 0.0, %v1816
        %v1818 = vpop.f32.mrf.mxu0
        %v1819 = vadd.f32 0.0, %v1818
        %1820 = vmatmul.bf16.gmra.mxu0 %v1732
        %v1821 = vpop.f32.mrf.mxu0
        %v1822 = vadd.f32 0.0, %v1821
        %v1823 = vpop.f32.mrf.mxu0
        %v1824 = vadd.f32 0.0, %v1823
        %1825 = vmatmul.bf16.gmra.mxu0 %v1733
        %v1826 = vpop.f32.mrf.mxu0
        %v1827 = vadd.f32 0.0, %v1826
        %v1828 = vpop.f32.mrf.mxu0
        %v1829 = vadd.f32 0.0, %v1828
        %1830 = vdwg.mxu0
        %v1831 = vpack.c.bf16 %v1792, %v1792
        %v1832 = vpack.c.bf16 %v1794, %v1794
        %v1833 = vpack.c.bf16 %v1797, %v1797
        %v1834 = vpack.c.bf16 %v1799, %v1799
        %v1835 = vpack.c.bf16 %v1802, %v1802
        %v1836 = vpack.c.bf16 %v1804, %v1804
        %v1837 = vpack.c.bf16 %v1807, %v1807
        %v1838 = vpack.c.bf16 %v1809, %v1809
        %v1839 = vpack.c.bf16 %v1812, %v1812
        %v1840 = vpack.c.bf16 %v1814, %v1814
        %v1841 = vpack.c.bf16 %v1817, %v1817
        %v1842 = vpack.c.bf16 %v1819, %v1819
        %v1843 = vpack.c.bf16 %v1822, %v1822
        %v1844 = vpack.c.bf16 %v1824, %v1824
        %v1845 = vpack.c.bf16 %v1827, %v1827
        %v1846 = vpack.c.bf16 %v1829, %v1829
        %1847 = vrot.lane.b32.xlu0 %v1420, 96
        %v1848 = vpop.permute.xlu0 %1847
        %1849 = vrot.lane.b32.xlu0 %v1421, 96
        %v1850 = vpop.permute.xlu0 %1849
        %1851 = vrot.lane.b32.xlu0 %v1422, 96
        %v1852 = vpop.permute.xlu0 %1851
        %1853 = vrot.lane.b32.xlu0 %v1423, 96
        %v1854 = vpop.permute.xlu0 %1853
        %1855 = vrot.lane.b32.xlu0 %v1424, 96
        %v1856 = vpop.permute.xlu0 %1855
        %1857 = vrot.lane.b32.xlu0 %v1425, 96
        %v1858 = vpop.permute.xlu0 %1857
        %1859 = vrot.lane.b32.xlu0 %v1426, 96
        %v1860 = vpop.permute.xlu0 %1859
        %1861 = vrot.lane.b32.xlu0 %v1427, 96
        %v1862 = vpop.permute.xlu0 %1861
        %1863 = vrot.lane.b32.xlu0 %v1460, 96
        %v1864 = vpop.permute.xlu0 %1863
        %1865 = vrot.lane.b32.xlu0 %v1461, 96
        %v1866 = vpop.permute.xlu0 %1865
        %1867 = vrot.lane.b32.xlu0 %v1462, 96
        %v1868 = vpop.permute.xlu0 %1867
        %1869 = vrot.lane.b32.xlu0 %v1463, 96
        %v1870 = vpop.permute.xlu0 %1869
        %1871 = vrot.lane.b32.xlu0 %v1464, 96
        %v1872 = vpop.permute.xlu0 %1871
        %1873 = vrot.lane.b32.xlu0 %v1465, 96
        %v1874 = vpop.permute.xlu0 %1873
        %1875 = vrot.lane.b32.xlu0 %v1466, 96
        %v1876 = vpop.permute.xlu0 %1875
        %1877 = vrot.lane.b32.xlu0 %v1467, 96
        %v1878 = vpop.permute.xlu0 %1877
        %v1880 = vsel %vm1468, %v1848, 0
        %v1883 = vsel %vm1468, %v1850, 0
        %v1886 = vsel %vm1468, %v1852, 0
        %v1889 = vsel %vm1468, %v1854, 0
        %v1892 = vsel %vm1468, %v1856, 0
        %v1895 = vsel %vm1468, %v1858, 0
        %v1898 = vsel %vm1468, %v1860, 0
        %v1901 = vsel %vm1468, %v1862, 0
        %v1904 = vsel %vm1468, %v1864, 0
        %v1907 = vsel %vm1468, %v1866, 0
        %v1910 = vsel %vm1468, %v1868, 0
        %v1913 = vsel %vm1468, %v1870, 0
        %v1916 = vsel %vm1468, %v1872, 0
        %v1919 = vsel %vm1468, %v1874, 0
        %v1922 = vsel %vm1468, %v1876, 0
        %v1925 = vsel %vm1468, %v1878, 0
        %1927 = vmatpush.bf16.xpose.msra.mxu0 %v1925
        %1928 = vmatpush.bf16.xpose.msra.mxu0 %v1922
        %1929 = vmatpush.bf16.xpose.msra.mxu0 %v1919
        %1930 = vmatpush.bf16.xpose.msra.mxu0 %v1916
        %1931 = vmatpush.bf16.xpose.msra.mxu0 %v1913
        %1932 = vmatpush.bf16.xpose.msra.mxu0 %v1910
        %1933 = vmatpush.bf16.xpose.msra.mxu0 %v1907
        %1934 = vmatpush.bf16.xpose.msra.mxu0 %v1904
        %1935 = vmatmul.bf16.gmra.mxu0 %v1880
        %v1936 = vpop.f32.mrf.mxu0
        %v1937 = vadd.f32 0.0, %v1936
        %v1938 = vpop.f32.mrf.mxu0
        %v1939 = vadd.f32 0.0, %v1938
        %1940 = vmatmul.bf16.gmra.mxu0 %v1883
        %v1941 = vpop.f32.mrf.mxu0
        %v1942 = vadd.f32 0.0, %v1941
        %v1943 = vpop.f32.mrf.mxu0
        %v1944 = vadd.f32 0.0, %v1943
        %1945 = vmatmul.bf16.gmra.mxu0 %v1886
        %v1946 = vpop.f32.mrf.mxu0
        %v1947 = vadd.f32 0.0, %v1946
        %v1948 = vpop.f32.mrf.mxu0
        %v1949 = vadd.f32 0.0, %v1948
        %1950 = vmatmul.bf16.gmra.mxu0 %v1889
        %v1951 = vpop.f32.mrf.mxu0
        %v1952 = vadd.f32 0.0, %v1951
        %v1953 = vpop.f32.mrf.mxu0
        %v1954 = vadd.f32 0.0, %v1953
        %1955 = vmatmul.bf16.gmra.mxu0 %v1892
        %v1956 = vpop.f32.mrf.mxu0
        %v1957 = vadd.f32 0.0, %v1956
        %v1958 = vpop.f32.mrf.mxu0
        %v1959 = vadd.f32 0.0, %v1958
        %1960 = vmatmul.bf16.gmra.mxu0 %v1895
        %v1961 = vpop.f32.mrf.mxu0
        %v1962 = vadd.f32 0.0, %v1961
        %v1963 = vpop.f32.mrf.mxu0
        %v1964 = vadd.f32 0.0, %v1963
        %1965 = vmatmul.bf16.gmra.mxu0 %v1898
        %v1966 = vpop.f32.mrf.mxu0
        %v1967 = vadd.f32 0.0, %v1966
        %v1968 = vpop.f32.mrf.mxu0
        %v1969 = vadd.f32 0.0, %v1968
        %1970 = vmatmul.bf16.gmra.mxu0 %v1901
        %v1971 = vpop.f32.mrf.mxu0
        %v1972 = vadd.f32 0.0, %v1971
        %v1973 = vpop.f32.mrf.mxu0
        %v1974 = vadd.f32 0.0, %v1973
        %1975 = vdwg.mxu0
        %1976 = vmax.xlane.f32.xlu0 %v1937
        %v1977 = vpop.xlane.xlu0 %1976
        %1978 = vmax.xlane.f32.xlu0 %v1939
        %v1979 = vpop.xlane.xlu0 %1978
        %1980 = vmax.xlane.f32.xlu0 %v1942
        %v1981 = vpop.xlane.xlu0 %1980
        %1982 = vmax.xlane.f32.xlu0 %v1944
        %v1983 = vpop.xlane.xlu0 %1982
        %1984 = vmax.xlane.f32.xlu0 %v1947
        %v1985 = vpop.xlane.xlu0 %1984
        %1986 = vmax.xlane.f32.xlu0 %v1949
        %v1987 = vpop.xlane.xlu0 %1986
        %1988 = vmax.xlane.f32.xlu0 %v1952
        %v1989 = vpop.xlane.xlu0 %1988
        %1990 = vmax.xlane.f32.xlu0 %v1954
        %v1991 = vpop.xlane.xlu0 %1990
        %1992 = vmax.xlane.f32.xlu0 %v1957
        %v1993 = vpop.xlane.xlu0 %1992
        %1994 = vmax.xlane.f32.xlu0 %v1959
        %v1995 = vpop.xlane.xlu0 %1994
        %1996 = vmax.xlane.f32.xlu0 %v1962
        %v1997 = vpop.xlane.xlu0 %1996
        %1998 = vmax.xlane.f32.xlu0 %v1964
        %v1999 = vpop.xlane.xlu0 %1998
        %2000 = vmax.xlane.f32.xlu0 %v1967
        %v2001 = vpop.xlane.xlu0 %2000
        %2002 = vmax.xlane.f32.xlu0 %v1969
        %v2003 = vpop.xlane.xlu0 %2002
        %2004 = vmax.xlane.f32.xlu0 %v1972
        %v2005 = vpop.xlane.xlu0 %2004
        %2006 = vmax.xlane.f32.xlu0 %v1974
        %v2007 = vpop.xlane.xlu0 %2006
        %v2008 = vsub.f32 %v1937, %v1977
        %v2009 = vsub.f32 %v1939, %v1979
        %v2010 = vsub.f32 %v1942, %v1981
        %v2011 = vsub.f32 %v1944, %v1983
        %v2012 = vsub.f32 %v1947, %v1985
        %v2013 = vsub.f32 %v1949, %v1987
        %v2014 = vsub.f32 %v1952, %v1989
        %v2015 = vsub.f32 %v1954, %v1991
        %v2016 = vsub.f32 %v1957, %v1993
        %v2017 = vsub.f32 %v1959, %v1995
        %v2018 = vsub.f32 %v1962, %v1997
        %v2019 = vsub.f32 %v1964, %v1999
        %v2020 = vsub.f32 %v1967, %v2001
        %v2021 = vsub.f32 %v1969, %v2003
        %v2022 = vsub.f32 %v1972, %v2005
        %v2023 = vsub.f32 %v1974, %v2007
        %v2024 = vmul.f32 %v2008, 1.442695
        %v2025 = vpow.pop %v2024
        %v2026 = vmul.f32 %v2009, 1.442695
        %v2027 = vpow.pop %v2026
        %v2028 = vmul.f32 %v2010, 1.442695
        %v2029 = vpow.pop %v2028
        %v2030 = vmul.f32 %v2011, 1.442695
        %v2031 = vpow.pop %v2030
        %v2032 = vmul.f32 %v2012, 1.442695
        %v2033 = vpow.pop %v2032
        %v2034 = vmul.f32 %v2013, 1.442695
        %v2035 = vpow.pop %v2034
        %v2036 = vmul.f32 %v2014, 1.442695
        %v2037 = vpow.pop %v2036
        %v2038 = vmul.f32 %v2015, 1.442695
        %v2039 = vpow.pop %v2038
        %v2040 = vmul.f32 %v2016, 1.442695
        %v2041 = vpow.pop %v2040
        %v2042 = vmul.f32 %v2017, 1.442695
        %v2043 = vpow.pop %v2042
        %v2044 = vmul.f32 %v2018, 1.442695
        %v2045 = vpow.pop %v2044
        %v2046 = vmul.f32 %v2019, 1.442695
        %v2047 = vpow.pop %v2046
        %v2048 = vmul.f32 %v2020, 1.442695
        %v2049 = vpow.pop %v2048
        %v2050 = vmul.f32 %v2021, 1.442695
        %v2051 = vpow.pop %v2050
        %v2052 = vmul.f32 %v2022, 1.442695
        %v2053 = vpow.pop %v2052
        %v2054 = vmul.f32 %v2023, 1.442695
        %v2055 = vpow.pop %v2054
        %2056 = vadd.xlane.f32.xlu0 %v2025
        %v2057 = vpop.xlane.xlu0 %2056
        %2058 = vadd.xlane.f32.xlu0 %v2027
        %v2059 = vpop.xlane.xlu0 %2058
        %2060 = vadd.xlane.f32.xlu0 %v2029
        %v2061 = vpop.xlane.xlu0 %2060
        %2062 = vadd.xlane.f32.xlu0 %v2031
        %v2063 = vpop.xlane.xlu0 %2062
        %2064 = vadd.xlane.f32.xlu0 %v2033
        %v2065 = vpop.xlane.xlu0 %2064
        %2066 = vadd.xlane.f32.xlu0 %v2035
        %v2067 = vpop.xlane.xlu0 %2066
        %2068 = vadd.xlane.f32.xlu0 %v2037
        %v2069 = vpop.xlane.xlu0 %2068
        %2070 = vadd.xlane.f32.xlu0 %v2039
        %v2071 = vpop.xlane.xlu0 %2070
        %2072 = vadd.xlane.f32.xlu0 %v2041
        %v2073 = vpop.xlane.xlu0 %2072
        %2074 = vadd.xlane.f32.xlu0 %v2043
        %v2075 = vpop.xlane.xlu0 %2074
        %2076 = vadd.xlane.f32.xlu0 %v2045
        %v2077 = vpop.xlane.xlu0 %2076
        %2078 = vadd.xlane.f32.xlu0 %v2047
        %v2079 = vpop.xlane.xlu0 %2078
        %2080 = vadd.xlane.f32.xlu0 %v2049
        %v2081 = vpop.xlane.xlu0 %2080
        %2082 = vadd.xlane.f32.xlu0 %v2051
        %v2083 = vpop.xlane.xlu0 %2082
        %2084 = vadd.xlane.f32.xlu0 %v2053
        %v2085 = vpop.xlane.xlu0 %2084
        %2086 = vadd.xlane.f32.xlu0 %v2055
        %v2087 = vpop.xlane.xlu0 %2086
        %v2088 = vrcp.pop %v2057
        %v2089 = vrcp.pop %v2059
        %v2090 = vrcp.pop %v2061
        %v2091 = vrcp.pop %v2063
        %v2092 = vrcp.pop %v2065
        %v2093 = vrcp.pop %v2067
        %v2094 = vrcp.pop %v2069
        %v2095 = vrcp.pop %v2071
        %v2096 = vrcp.pop %v2073
        %v2097 = vrcp.pop %v2075
        %v2098 = vrcp.pop %v2077
        %v2099 = vrcp.pop %v2079
        %v2100 = vrcp.pop %v2081
        %v2101 = vrcp.pop %v2083
        %v2102 = vrcp.pop %v2085
        %v2103 = vrcp.pop %v2087
        %v2104 = vmul.f32 %v2025, %v2088
        %v2105 = vmul.f32 %v2027, %v2089
        %v2106 = vmul.f32 %v2029, %v2090
        %v2107 = vmul.f32 %v2031, %v2091
        %v2108 = vmul.f32 %v2033, %v2092
        %v2109 = vmul.f32 %v2035, %v2093
        %v2110 = vmul.f32 %v2037, %v2094
        %v2111 = vmul.f32 %v2039, %v2095
        %v2112 = vmul.f32 %v2041, %v2096
        %v2113 = vmul.f32 %v2043, %v2097
        %v2114 = vmul.f32 %v2045, %v2098
        %v2115 = vmul.f32 %v2047, %v2099
        %v2116 = vmul.f32 %v2049, %v2100
        %v2117 = vmul.f32 %v2051, %v2101
        %v2118 = vmul.f32 %v2053, %v2102
        %v2119 = vmul.f32 %v2055, %v2103
        %s2120 = scalar_lea.vmem %s685, 128 [#allocation18]
        %2121 = vst [vmem:[%s2120] sm:$0xff] %v2104
        %2122 = vst [vmem:[%s2120 + $0x8] sm:$0xff] %v2105
        %2123 = vst [vmem:[%s2120 + $0x10] sm:$0xff] %v2106
        %2124 = vst [vmem:[%s2120 + $0x18] sm:$0xff] %v2107
        %2125 = vst [vmem:[%s2120 + $0x20] sm:$0xff] %v2108
        %2126 = vst [vmem:[%s2120 + $0x28] sm:$0xff] %v2109
        %2127 = vst [vmem:[%s2120 + $0x30] sm:$0xff] %v2110
        %2128 = vst [vmem:[%s2120 + $0x38] sm:$0xff] %v2111
        %2129 = vst [vmem:[%s2120 + $0x40] sm:$0xff] %v2112
        %2130 = vst [vmem:[%s2120 + $0x48] sm:$0xff] %v2113
        %2131 = vst [vmem:[%s2120 + $0x50] sm:$0xff] %v2114
        %2132 = vst [vmem:[%s2120 + $0x58] sm:$0xff] %v2115
        %2133 = vst [vmem:[%s2120 + $0x60] sm:$0xff] %v2116
        %2134 = vst [vmem:[%s2120 + $0x68] sm:$0xff] %v2117
        %2135 = vst [vmem:[%s2120 + $0x70] sm:$0xff] %v2118
        %2136 = vst [vmem:[%s2120 + $0x78] sm:$0xff] %v2119
        %v2137 = vpack.c.bf16 %v2105, %v2104
        %v2138 = vpack.c.bf16 %v2107, %v2106
        %v2139 = vpack.c.bf16 %v2109, %v2108
        %v2140 = vpack.c.bf16 %v2111, %v2110
        %v2141 = vpack.c.bf16 %v2113, %v2112
        %v2142 = vpack.c.bf16 %v2115, %v2114
        %v2143 = vpack.c.bf16 %v2117, %v2116
        %v2144 = vpack.c.bf16 %v2119, %v2118
        %2145 = vrot.lane.b32.xlu0 %v1766, 96
        %v2146 = vpop.permute.xlu0 %2145
        %2147 = vrot.lane.b32.xlu0 %v1767, 96
        %v2148 = vpop.permute.xlu0 %2147
        %2149 = vrot.lane.b32.xlu0 %v1768, 96
        %v2150 = vpop.permute.xlu0 %2149
        %2151 = vrot.lane.b32.xlu0 %v1769, 96
        %v2152 = vpop.permute.xlu0 %2151
        %2153 = vrot.lane.b32.xlu0 %v1770, 96
        %v2154 = vpop.permute.xlu0 %2153
        %2155 = vrot.lane.b32.xlu0 %v1771, 96
        %v2156 = vpop.permute.xlu0 %2155
        %2157 = vrot.lane.b32.xlu0 %v1772, 96
        %v2158 = vpop.permute.xlu0 %2157
        %2159 = vrot.lane.b32.xlu0 %v1773, 96
        %v2160 = vpop.permute.xlu0 %2159
        %2169 = vmatpush.bf16.msra.mxu0 %v2160
        %2170 = vmatpush.bf16.msra.mxu0 %v2158
        %2171 = vmatpush.bf16.msra.mxu0 %v2156
        %2172 = vmatpush.bf16.msra.mxu0 %v2154
        %2173 = vmatpush.bf16.msra.mxu0 %v2152
        %2174 = vmatpush.bf16.msra.mxu0 %v2150
        %2175 = vmatpush.bf16.msra.mxu0 %v2148
        %2176 = vmatpush.bf16.msra.mxu0 %v2146
        %2177 = vmatmul.bf16.gmra.mxu0 %v2137
        %v2178 = vpop.f32.mrf.mxu0
        %v2179 = vadd.f32 0.0, %v2178
        %v2180 = vpop.f32.mrf.mxu0
        %v2181 = vadd.f32 0.0, %v2180
        %2182 = vmatmul.bf16.gmra.mxu0 %v2138
        %v2183 = vpop.f32.mrf.mxu0
        %v2184 = vadd.f32 0.0, %v2183
        %v2185 = vpop.f32.mrf.mxu0
        %v2186 = vadd.f32 0.0, %v2185
        %2187 = vmatmul.bf16.gmra.mxu0 %v2139
        %v2188 = vpop.f32.mrf.mxu0
        %v2189 = vadd.f32 0.0, %v2188
        %v2190 = vpop.f32.mrf.mxu0
        %v2191 = vadd.f32 0.0, %v2190
        %2192 = vmatmul.bf16.gmra.mxu0 %v2140
        %v2193 = vpop.f32.mrf.mxu0
        %v2194 = vadd.f32 0.0, %v2193
        %v2195 = vpop.f32.mrf.mxu0
        %v2196 = vadd.f32 0.0, %v2195
        %2197 = vmatmul.bf16.gmra.mxu0 %v2141
        %v2198 = vpop.f32.mrf.mxu0
        %v2199 = vadd.f32 0.0, %v2198
        %v2200 = vpop.f32.mrf.mxu0
        %v2201 = vadd.f32 0.0, %v2200
        %2202 = vmatmul.bf16.gmra.mxu0 %v2142
        %v2203 = vpop.f32.mrf.mxu0
        %v2204 = vadd.f32 0.0, %v2203
        %v2205 = vpop.f32.mrf.mxu0
        %v2206 = vadd.f32 0.0, %v2205
        %2207 = vmatmul.bf16.gmra.mxu0 %v2143
        %v2208 = vpop.f32.mrf.mxu0
        %v2209 = vadd.f32 0.0, %v2208
        %v2210 = vpop.f32.mrf.mxu0
        %v2211 = vadd.f32 0.0, %v2210
        %2212 = vmatmul.bf16.gmra.mxu0 %v2144
        %v2213 = vpop.f32.mrf.mxu0
        %v2214 = vadd.f32 0.0, %v2213
        %v2215 = vpop.f32.mrf.mxu0
        %v2216 = vadd.f32 0.0, %v2215
        %2217 = vdwg.mxu0
        %v2218 = vpack.c.bf16 %v2179, %v2179
        %v2219 = vpack.c.bf16 %v2181, %v2181
        %v2220 = vpack.c.bf16 %v2184, %v2184
        %v2221 = vpack.c.bf16 %v2186, %v2186
        %v2222 = vpack.c.bf16 %v2189, %v2189
        %v2223 = vpack.c.bf16 %v2191, %v2191
        %v2224 = vpack.c.bf16 %v2194, %v2194
        %v2225 = vpack.c.bf16 %v2196, %v2196
        %v2226 = vpack.c.bf16 %v2199, %v2199
        %v2227 = vpack.c.bf16 %v2201, %v2201
        %v2228 = vpack.c.bf16 %v2204, %v2204
        %v2229 = vpack.c.bf16 %v2206, %v2206
        %v2230 = vpack.c.bf16 %v2209, %v2209
        %v2231 = vpack.c.bf16 %v2211, %v2211
        %v2232 = vpack.c.bf16 %v2214, %v2214
        %v2233 = vpack.c.bf16 %v2216, %v2216
        %2234 = vrot.lane.b32.xlu0 %v1420, 64
        %v2235 = vpop.permute.xlu0 %2234
        %2236 = vrot.lane.b32.xlu0 %v1421, 64
        %v2237 = vpop.permute.xlu0 %2236
        %2238 = vrot.lane.b32.xlu0 %v1422, 64
        %v2239 = vpop.permute.xlu0 %2238
        %2240 = vrot.lane.b32.xlu0 %v1423, 64
        %v2241 = vpop.permute.xlu0 %2240
        %2242 = vrot.lane.b32.xlu0 %v1424, 64
        %v2243 = vpop.permute.xlu0 %2242
        %2244 = vrot.lane.b32.xlu0 %v1425, 64
        %v2245 = vpop.permute.xlu0 %2244
        %2246 = vrot.lane.b32.xlu0 %v1426, 64
        %v2247 = vpop.permute.xlu0 %2246
        %2248 = vrot.lane.b32.xlu0 %v1427, 64
        %v2249 = vpop.permute.xlu0 %2248
        %2250 = vrot.lane.b32.xlu0 %v1460, 64
        %v2251 = vpop.permute.xlu0 %2250
        %2252 = vrot.lane.b32.xlu0 %v1461, 64
        %v2253 = vpop.permute.xlu0 %2252
        %2254 = vrot.lane.b32.xlu0 %v1462, 64
        %v2255 = vpop.permute.xlu0 %2254
        %2256 = vrot.lane.b32.xlu0 %v1463, 64
        %v2257 = vpop.permute.xlu0 %2256
        %2258 = vrot.lane.b32.xlu0 %v1464, 64
        %v2259 = vpop.permute.xlu0 %2258
        %2260 = vrot.lane.b32.xlu0 %v1465, 64
        %v2261 = vpop.permute.xlu0 %2260
        %2262 = vrot.lane.b32.xlu0 %v1466, 64
        %v2263 = vpop.permute.xlu0 %2262
        %2264 = vrot.lane.b32.xlu0 %v1467, 64
        %v2265 = vpop.permute.xlu0 %2264
        %v2267 = vsel %vm1468, %v2235, 0
        %v2270 = vsel %vm1468, %v2237, 0
        %v2273 = vsel %vm1468, %v2239, 0
        %v2276 = vsel %vm1468, %v2241, 0
        %v2279 = vsel %vm1468, %v2243, 0
        %v2282 = vsel %vm1468, %v2245, 0
        %v2285 = vsel %vm1468, %v2247, 0
        %v2288 = vsel %vm1468, %v2249, 0
        %v2291 = vsel %vm1468, %v2251, 0
        %v2294 = vsel %vm1468, %v2253, 0
        %v2297 = vsel %vm1468, %v2255, 0
        %v2300 = vsel %vm1468, %v2257, 0
        %v2303 = vsel %vm1468, %v2259, 0
        %v2306 = vsel %vm1468, %v2261, 0
        %v2309 = vsel %vm1468, %v2263, 0
        %v2312 = vsel %vm1468, %v2265, 0
        %2314 = vmatpush.bf16.xpose.msra.mxu0 %v2312
        %2315 = vmatpush.bf16.xpose.msra.mxu0 %v2309
        %2316 = vmatpush.bf16.xpose.msra.mxu0 %v2306
        %2317 = vmatpush.bf16.xpose.msra.mxu0 %v2303
        %2318 = vmatpush.bf16.xpose.msra.mxu0 %v2300
        %2319 = vmatpush.bf16.xpose.msra.mxu0 %v2297
        %2320 = vmatpush.bf16.xpose.msra.mxu0 %v2294
        %2321 = vmatpush.bf16.xpose.msra.mxu0 %v2291
        %2322 = vmatmul.bf16.gmra.mxu0 %v2267
        %v2323 = vpop.f32.mrf.mxu0
        %v2324 = vadd.f32 0.0, %v2323
        %v2325 = vpop.f32.mrf.mxu0
        %v2326 = vadd.f32 0.0, %v2325
        %2327 = vmatmul.bf16.gmra.mxu0 %v2270
        %v2328 = vpop.f32.mrf.mxu0
        %v2329 = vadd.f32 0.0, %v2328
        %v2330 = vpop.f32.mrf.mxu0
        %v2331 = vadd.f32 0.0, %v2330
        %2332 = vmatmul.bf16.gmra.mxu0 %v2273
        %v2333 = vpop.f32.mrf.mxu0
        %v2334 = vadd.f32 0.0, %v2333
        %v2335 = vpop.f32.mrf.mxu0
        %v2336 = vadd.f32 0.0, %v2335
        %2337 = vmatmul.bf16.gmra.mxu0 %v2276
        %v2338 = vpop.f32.mrf.mxu0
        %v2339 = vadd.f32 0.0, %v2338
        %v2340 = vpop.f32.mrf.mxu0
        %v2341 = vadd.f32 0.0, %v2340
        %2342 = vmatmul.bf16.gmra.mxu0 %v2279
        %v2343 = vpop.f32.mrf.mxu0
        %v2344 = vadd.f32 0.0, %v2343
        %v2345 = vpop.f32.mrf.mxu0
        %v2346 = vadd.f32 0.0, %v2345
        %2347 = vmatmul.bf16.gmra.mxu0 %v2282
        %v2348 = vpop.f32.mrf.mxu0
        %v2349 = vadd.f32 0.0, %v2348
        %v2350 = vpop.f32.mrf.mxu0
        %v2351 = vadd.f32 0.0, %v2350
        %2352 = vmatmul.bf16.gmra.mxu0 %v2285
        %v2353 = vpop.f32.mrf.mxu0
        %v2354 = vadd.f32 0.0, %v2353
        %v2355 = vpop.f32.mrf.mxu0
        %v2356 = vadd.f32 0.0, %v2355
        %2357 = vmatmul.bf16.gmra.mxu0 %v2288
        %v2358 = vpop.f32.mrf.mxu0
        %v2359 = vadd.f32 0.0, %v2358
        %v2360 = vpop.f32.mrf.mxu0
        %v2361 = vadd.f32 0.0, %v2360
        %2362 = vdwg.mxu0
        %2363 = vmax.xlane.f32.xlu0 %v2324
        %v2364 = vpop.xlane.xlu0 %2363
        %2365 = vmax.xlane.f32.xlu0 %v2326
        %v2366 = vpop.xlane.xlu0 %2365
        %2367 = vmax.xlane.f32.xlu0 %v2329
        %v2368 = vpop.xlane.xlu0 %2367
        %2369 = vmax.xlane.f32.xlu0 %v2331
        %v2370 = vpop.xlane.xlu0 %2369
        %2371 = vmax.xlane.f32.xlu0 %v2334
        %v2372 = vpop.xlane.xlu0 %2371
        %2373 = vmax.xlane.f32.xlu0 %v2336
        %v2374 = vpop.xlane.xlu0 %2373
        %2375 = vmax.xlane.f32.xlu0 %v2339
        %v2376 = vpop.xlane.xlu0 %2375
        %2377 = vmax.xlane.f32.xlu0 %v2341
        %v2378 = vpop.xlane.xlu0 %2377
        %2379 = vmax.xlane.f32.xlu0 %v2344
        %v2380 = vpop.xlane.xlu0 %2379
        %2381 = vmax.xlane.f32.xlu0 %v2346
        %v2382 = vpop.xlane.xlu0 %2381
        %2383 = vmax.xlane.f32.xlu0 %v2349
        %v2384 = vpop.xlane.xlu0 %2383
        %2385 = vmax.xlane.f32.xlu0 %v2351
        %v2386 = vpop.xlane.xlu0 %2385
        %2387 = vmax.xlane.f32.xlu0 %v2354
        %v2388 = vpop.xlane.xlu0 %2387
        %2389 = vmax.xlane.f32.xlu0 %v2356
        %v2390 = vpop.xlane.xlu0 %2389
        %2391 = vmax.xlane.f32.xlu0 %v2359
        %v2392 = vpop.xlane.xlu0 %2391
        %2393 = vmax.xlane.f32.xlu0 %v2361
        %v2394 = vpop.xlane.xlu0 %2393
        %v2395 = vsub.f32 %v2324, %v2364
        %v2396 = vsub.f32 %v2326, %v2366
        %v2397 = vsub.f32 %v2329, %v2368
        %v2398 = vsub.f32 %v2331, %v2370
        %v2399 = vsub.f32 %v2334, %v2372
        %v2400 = vsub.f32 %v2336, %v2374
        %v2401 = vsub.f32 %v2339, %v2376
        %v2402 = vsub.f32 %v2341, %v2378
        %v2403 = vsub.f32 %v2344, %v2380
        %v2404 = vsub.f32 %v2346, %v2382
        %v2405 = vsub.f32 %v2349, %v2384
        %v2406 = vsub.f32 %v2351, %v2386
        %v2407 = vsub.f32 %v2354, %v2388
        %v2408 = vsub.f32 %v2356, %v2390
        %v2409 = vsub.f32 %v2359, %v2392
        %v2410 = vsub.f32 %v2361, %v2394
        %v2411 = vmul.f32 %v2395, 1.442695
        %v2412 = vpow.pop %v2411
        %v2413 = vmul.f32 %v2396, 1.442695
        %v2414 = vpow.pop %v2413
        %v2415 = vmul.f32 %v2397, 1.442695
        %v2416 = vpow.pop %v2415
        %v2417 = vmul.f32 %v2398, 1.442695
        %v2418 = vpow.pop %v2417
        %v2419 = vmul.f32 %v2399, 1.442695
        %v2420 = vpow.pop %v2419
        %v2421 = vmul.f32 %v2400, 1.442695
        %v2422 = vpow.pop %v2421
        %v2423 = vmul.f32 %v2401, 1.442695
        %v2424 = vpow.pop %v2423
        %v2425 = vmul.f32 %v2402, 1.442695
        %v2426 = vpow.pop %v2425
        %v2427 = vmul.f32 %v2403, 1.442695
        %v2428 = vpow.pop %v2427
        %v2429 = vmul.f32 %v2404, 1.442695
        %v2430 = vpow.pop %v2429
        %v2431 = vmul.f32 %v2405, 1.442695
        %v2432 = vpow.pop %v2431
        %v2433 = vmul.f32 %v2406, 1.442695
        %v2434 = vpow.pop %v2433
        %v2435 = vmul.f32 %v2407, 1.442695
        %v2436 = vpow.pop %v2435
        %v2437 = vmul.f32 %v2408, 1.442695
        %v2438 = vpow.pop %v2437
        %v2439 = vmul.f32 %v2409, 1.442695
        %v2440 = vpow.pop %v2439
        %v2441 = vmul.f32 %v2410, 1.442695
        %v2442 = vpow.pop %v2441
        %2443 = vadd.xlane.f32.xlu0 %v2412
        %v2444 = vpop.xlane.xlu0 %2443
        %2445 = vadd.xlane.f32.xlu0 %v2414
        %v2446 = vpop.xlane.xlu0 %2445
        %2447 = vadd.xlane.f32.xlu0 %v2416
        %v2448 = vpop.xlane.xlu0 %2447
        %2449 = vadd.xlane.f32.xlu0 %v2418
        %v2450 = vpop.xlane.xlu0 %2449
        %2451 = vadd.xlane.f32.xlu0 %v2420
        %v2452 = vpop.xlane.xlu0 %2451
        %2453 = vadd.xlane.f32.xlu0 %v2422
        %v2454 = vpop.xlane.xlu0 %2453
        %2455 = vadd.xlane.f32.xlu0 %v2424
        %v2456 = vpop.xlane.xlu0 %2455
        %2457 = vadd.xlane.f32.xlu0 %v2426
        %v2458 = vpop.xlane.xlu0 %2457
        %2459 = vadd.xlane.f32.xlu0 %v2428
        %v2460 = vpop.xlane.xlu0 %2459
        %2461 = vadd.xlane.f32.xlu0 %v2430
        %v2462 = vpop.xlane.xlu0 %2461
        %2463 = vadd.xlane.f32.xlu0 %v2432
        %v2464 = vpop.xlane.xlu0 %2463
        %2465 = vadd.xlane.f32.xlu0 %v2434
        %v2466 = vpop.xlane.xlu0 %2465
        %2467 = vadd.xlane.f32.xlu0 %v2436
        %v2468 = vpop.xlane.xlu0 %2467
        %2469 = vadd.xlane.f32.xlu0 %v2438
        %v2470 = vpop.xlane.xlu0 %2469
        %2471 = vadd.xlane.f32.xlu0 %v2440
        %v2472 = vpop.xlane.xlu0 %2471
        %2473 = vadd.xlane.f32.xlu0 %v2442
        %v2474 = vpop.xlane.xlu0 %2473
        %v2475 = vrcp.pop %v2444
        %v2476 = vrcp.pop %v2446
        %v2477 = vrcp.pop %v2448
        %v2478 = vrcp.pop %v2450
        %v2479 = vrcp.pop %v2452
        %v2480 = vrcp.pop %v2454
        %v2481 = vrcp.pop %v2456
        %v2482 = vrcp.pop %v2458
        %v2483 = vrcp.pop %v2460
        %v2484 = vrcp.pop %v2462
        %v2485 = vrcp.pop %v2464
        %v2486 = vrcp.pop %v2466
        %v2487 = vrcp.pop %v2468
        %v2488 = vrcp.pop %v2470
        %v2489 = vrcp.pop %v2472
        %v2490 = vrcp.pop %v2474
        %v2491 = vmul.f32 %v2412, %v2475
        %v2492 = vmul.f32 %v2414, %v2476
        %v2493 = vmul.f32 %v2416, %v2477
        %v2494 = vmul.f32 %v2418, %v2478
        %v2495 = vmul.f32 %v2420, %v2479
        %v2496 = vmul.f32 %v2422, %v2480
        %v2497 = vmul.f32 %v2424, %v2481
        %v2498 = vmul.f32 %v2426, %v2482
        %v2499 = vmul.f32 %v2428, %v2483
        %v2500 = vmul.f32 %v2430, %v2484
        %v2501 = vmul.f32 %v2432, %v2485
        %v2502 = vmul.f32 %v2434, %v2486
        %v2503 = vmul.f32 %v2436, %v2487
        %v2504 = vmul.f32 %v2438, %v2488
        %v2505 = vmul.f32 %v2440, %v2489
        %v2506 = vmul.f32 %v2442, %v2490
        %s2507 = scalar_lea.vmem %s685, 256 [#allocation18]
        %2508 = vst [vmem:[%s2507] sm:$0xff] %v2491
        %2509 = vst [vmem:[%s2507 + $0x8] sm:$0xff] %v2492
        %2510 = vst [vmem:[%s2507 + $0x10] sm:$0xff] %v2493
        %2511 = vst [vmem:[%s2507 + $0x18] sm:$0xff] %v2494
        %2512 = vst [vmem:[%s2507 + $0x20] sm:$0xff] %v2495
        %2513 = vst [vmem:[%s2507 + $0x28] sm:$0xff] %v2496
        %2514 = vst [vmem:[%s2507 + $0x30] sm:$0xff] %v2497
        %2515 = vst [vmem:[%s2507 + $0x38] sm:$0xff] %v2498
        %2516 = vst [vmem:[%s2507 + $0x40] sm:$0xff] %v2499
        %2517 = vst [vmem:[%s2507 + $0x48] sm:$0xff] %v2500
        %2518 = vst [vmem:[%s2507 + $0x50] sm:$0xff] %v2501
        %2519 = vst [vmem:[%s2507 + $0x58] sm:$0xff] %v2502
        %2520 = vst [vmem:[%s2507 + $0x60] sm:$0xff] %v2503
        %2521 = vst [vmem:[%s2507 + $0x68] sm:$0xff] %v2504
        %2522 = vst [vmem:[%s2507 + $0x70] sm:$0xff] %v2505
        %2523 = vst [vmem:[%s2507 + $0x78] sm:$0xff] %v2506
        %v2524 = vpack.c.bf16 %v2492, %v2491
        %v2525 = vpack.c.bf16 %v2494, %v2493
        %v2526 = vpack.c.bf16 %v2496, %v2495
        %v2527 = vpack.c.bf16 %v2498, %v2497
        %v2528 = vpack.c.bf16 %v2500, %v2499
        %v2529 = vpack.c.bf16 %v2502, %v2501
        %v2530 = vpack.c.bf16 %v2504, %v2503
        %v2531 = vpack.c.bf16 %v2506, %v2505
        %2532 = vrot.lane.b32.xlu0 %v1766, 64
        %v2533 = vpop.permute.xlu0 %2532
        %2534 = vrot.lane.b32.xlu0 %v1767, 64
        %v2535 = vpop.permute.xlu0 %2534
        %2536 = vrot.lane.b32.xlu0 %v1768, 64
        %v2537 = vpop.permute.xlu0 %2536
        %2538 = vrot.lane.b32.xlu0 %v1769, 64
        %v2539 = vpop.permute.xlu0 %2538
        %2540 = vrot.lane.b32.xlu0 %v1770, 64
        %v2541 = vpop.permute.xlu0 %2540
        %2542 = vrot.lane.b32.xlu0 %v1771, 64
        %v2543 = vpop.permute.xlu0 %2542
        %2544 = vrot.lane.b32.xlu0 %v1772, 64
        %v2545 = vpop.permute.xlu0 %2544
        %2546 = vrot.lane.b32.xlu0 %v1773, 64
        %v2547 = vpop.permute.xlu0 %2546
        %2556 = vmatpush.bf16.msra.mxu0 %v2547
        %2557 = vmatpush.bf16.msra.mxu0 %v2545
        %2558 = vmatpush.bf16.msra.mxu0 %v2543
        %2559 = vmatpush.bf16.msra.mxu0 %v2541
        %2560 = vmatpush.bf16.msra.mxu0 %v2539
        %2561 = vmatpush.bf16.msra.mxu0 %v2537
        %2562 = vmatpush.bf16.msra.mxu0 %v2535
        %2563 = vmatpush.bf16.msra.mxu0 %v2533
        %2564 = vmatmul.bf16.gmra.mxu0 %v2524
        %v2565 = vpop.f32.mrf.mxu0
        %v2566 = vadd.f32 0.0, %v2565
        %v2567 = vpop.f32.mrf.mxu0
        %v2568 = vadd.f32 0.0, %v2567
        %2569 = vmatmul.bf16.gmra.mxu0 %v2525
        %v2570 = vpop.f32.mrf.mxu0
        %v2571 = vadd.f32 0.0, %v2570
        %v2572 = vpop.f32.mrf.mxu0
        %v2573 = vadd.f32 0.0, %v2572
        %2574 = vmatmul.bf16.gmra.mxu0 %v2526
        %v2575 = vpop.f32.mrf.mxu0
        %v2576 = vadd.f32 0.0, %v2575
        %v2577 = vpop.f32.mrf.mxu0
        %v2578 = vadd.f32 0.0, %v2577
        %2579 = vmatmul.bf16.gmra.mxu0 %v2527
        %v2580 = vpop.f32.mrf.mxu0
        %v2581 = vadd.f32 0.0, %v2580
        %v2582 = vpop.f32.mrf.mxu0
        %v2583 = vadd.f32 0.0, %v2582
        %2584 = vmatmul.bf16.gmra.mxu0 %v2528
        %v2585 = vpop.f32.mrf.mxu0
        %v2586 = vadd.f32 0.0, %v2585
        %v2587 = vpop.f32.mrf.mxu0
        %v2588 = vadd.f32 0.0, %v2587
        %2589 = vmatmul.bf16.gmra.mxu0 %v2529
        %v2590 = vpop.f32.mrf.mxu0
        %v2591 = vadd.f32 0.0, %v2590
        %v2592 = vpop.f32.mrf.mxu0
        %v2593 = vadd.f32 0.0, %v2592
        %2594 = vmatmul.bf16.gmra.mxu0 %v2530
        %v2595 = vpop.f32.mrf.mxu0
        %v2596 = vadd.f32 0.0, %v2595
        %v2597 = vpop.f32.mrf.mxu0
        %v2598 = vadd.f32 0.0, %v2597
        %2599 = vmatmul.bf16.gmra.mxu0 %v2531
        %v2600 = vpop.f32.mrf.mxu0
        %v2601 = vadd.f32 0.0, %v2600
        %v2602 = vpop.f32.mrf.mxu0
        %v2603 = vadd.f32 0.0, %v2602
        %2604 = vdwg.mxu0
        %v2605 = vpack.c.bf16 %v2566, %v2566
        %v2606 = vpack.c.bf16 %v2568, %v2568
        %v2607 = vpack.c.bf16 %v2571, %v2571
        %v2608 = vpack.c.bf16 %v2573, %v2573
        %v2609 = vpack.c.bf16 %v2576, %v2576
        %v2610 = vpack.c.bf16 %v2578, %v2578
        %v2611 = vpack.c.bf16 %v2581, %v2581
        %v2612 = vpack.c.bf16 %v2583, %v2583
        %v2613 = vpack.c.bf16 %v2586, %v2586
        %v2614 = vpack.c.bf16 %v2588, %v2588
        %v2615 = vpack.c.bf16 %v2591, %v2591
        %v2616 = vpack.c.bf16 %v2593, %v2593
        %v2617 = vpack.c.bf16 %v2596, %v2596
        %v2618 = vpack.c.bf16 %v2598, %v2598
        %v2619 = vpack.c.bf16 %v2601, %v2601
        %v2620 = vpack.c.bf16 %v2603, %v2603
        %2621 = vrot.lane.b32.xlu0 %v1420, 32
        %v2622 = vpop.permute.xlu0 %2621
        %2623 = vrot.lane.b32.xlu0 %v1421, 32
        %v2624 = vpop.permute.xlu0 %2623
        %2625 = vrot.lane.b32.xlu0 %v1422, 32
        %v2626 = vpop.permute.xlu0 %2625
        %2627 = vrot.lane.b32.xlu0 %v1423, 32
        %v2628 = vpop.permute.xlu0 %2627
        %2629 = vrot.lane.b32.xlu0 %v1424, 32
        %v2630 = vpop.permute.xlu0 %2629
        %2631 = vrot.lane.b32.xlu0 %v1425, 32
        %v2632 = vpop.permute.xlu0 %2631
        %2633 = vrot.lane.b32.xlu0 %v1426, 32
        %v2634 = vpop.permute.xlu0 %2633
        %2635 = vrot.lane.b32.xlu0 %v1427, 32
        %v2636 = vpop.permute.xlu0 %2635
        %2637 = vrot.lane.b32.xlu0 %v1460, 32
        %v2638 = vpop.permute.xlu0 %2637
        %2639 = vrot.lane.b32.xlu0 %v1461, 32
        %v2640 = vpop.permute.xlu0 %2639
        %2641 = vrot.lane.b32.xlu0 %v1462, 32
        %v2642 = vpop.permute.xlu0 %2641
        %2643 = vrot.lane.b32.xlu0 %v1463, 32
        %v2644 = vpop.permute.xlu0 %2643
        %2645 = vrot.lane.b32.xlu0 %v1464, 32
        %v2646 = vpop.permute.xlu0 %2645
        %2647 = vrot.lane.b32.xlu0 %v1465, 32
        %v2648 = vpop.permute.xlu0 %2647
        %2649 = vrot.lane.b32.xlu0 %v1466, 32
        %v2650 = vpop.permute.xlu0 %2649
        %2651 = vrot.lane.b32.xlu0 %v1467, 32
        %v2652 = vpop.permute.xlu0 %2651
        %v2654 = vsel %vm1468, %v2622, 0
        %v2657 = vsel %vm1468, %v2624, 0
        %v2660 = vsel %vm1468, %v2626, 0
        %v2663 = vsel %vm1468, %v2628, 0
        %v2666 = vsel %vm1468, %v2630, 0
        %v2669 = vsel %vm1468, %v2632, 0
        %v2672 = vsel %vm1468, %v2634, 0
        %v2675 = vsel %vm1468, %v2636, 0
        %v2678 = vsel %vm1468, %v2638, 0
        %v2681 = vsel %vm1468, %v2640, 0
        %v2684 = vsel %vm1468, %v2642, 0
        %v2687 = vsel %vm1468, %v2644, 0
        %v2690 = vsel %vm1468, %v2646, 0
        %v2693 = vsel %vm1468, %v2648, 0
        %v2696 = vsel %vm1468, %v2650, 0
        %v2699 = vsel %vm1468, %v2652, 0
        %2701 = vmatpush.bf16.xpose.msra.mxu0 %v2699
        %2702 = vmatpush.bf16.xpose.msra.mxu0 %v2696
        %2703 = vmatpush.bf16.xpose.msra.mxu0 %v2693
        %2704 = vmatpush.bf16.xpose.msra.mxu0 %v2690
        %2705 = vmatpush.bf16.xpose.msra.mxu0 %v2687
        %2706 = vmatpush.bf16.xpose.msra.mxu0 %v2684
        %2707 = vmatpush.bf16.xpose.msra.mxu0 %v2681
        %2708 = vmatpush.bf16.xpose.msra.mxu0 %v2678
        %2709 = vmatmul.bf16.gmra.mxu0 %v2654
        %v2710 = vpop.f32.mrf.mxu0
        %v2711 = vadd.f32 0.0, %v2710
        %v2712 = vpop.f32.mrf.mxu0
        %v2713 = vadd.f32 0.0, %v2712
        %2714 = vmatmul.bf16.gmra.mxu0 %v2657
        %v2715 = vpop.f32.mrf.mxu0
        %v2716 = vadd.f32 0.0, %v2715
        %v2717 = vpop.f32.mrf.mxu0
        %v2718 = vadd.f32 0.0, %v2717
        %2719 = vmatmul.bf16.gmra.mxu0 %v2660
        %v2720 = vpop.f32.mrf.mxu0
        %v2721 = vadd.f32 0.0, %v2720
        %v2722 = vpop.f32.mrf.mxu0
        %v2723 = vadd.f32 0.0, %v2722
        %2724 = vmatmul.bf16.gmra.mxu0 %v2663
        %v2725 = vpop.f32.mrf.mxu0
        %v2726 = vadd.f32 0.0, %v2725
        %v2727 = vpop.f32.mrf.mxu0
        %v2728 = vadd.f32 0.0, %v2727
        %2729 = vmatmul.bf16.gmra.mxu0 %v2666
        %v2730 = vpop.f32.mrf.mxu0
        %v2731 = vadd.f32 0.0, %v2730
        %v2732 = vpop.f32.mrf.mxu0
        %v2733 = vadd.f32 0.0, %v2732
        %2734 = vmatmul.bf16.gmra.mxu0 %v2669
        %v2735 = vpop.f32.mrf.mxu0
        %v2736 = vadd.f32 0.0, %v2735
        %v2737 = vpop.f32.mrf.mxu0
        %v2738 = vadd.f32 0.0, %v2737
        %2739 = vmatmul.bf16.gmra.mxu0 %v2672
        %v2740 = vpop.f32.mrf.mxu0
        %v2741 = vadd.f32 0.0, %v2740
        %v2742 = vpop.f32.mrf.mxu0
        %v2743 = vadd.f32 0.0, %v2742
        %2744 = vmatmul.bf16.gmra.mxu0 %v2675
        %v2745 = vpop.f32.mrf.mxu0
        %v2746 = vadd.f32 0.0, %v2745
        %v2747 = vpop.f32.mrf.mxu0
        %v2748 = vadd.f32 0.0, %v2747
        %2749 = vdwg.mxu0
        %2750 = vmax.xlane.f32.xlu0 %v2711
        %v2751 = vpop.xlane.xlu0 %2750
        %2752 = vmax.xlane.f32.xlu0 %v2713
        %v2753 = vpop.xlane.xlu0 %2752
        %2754 = vmax.xlane.f32.xlu0 %v2716
        %v2755 = vpop.xlane.xlu0 %2754
        %2756 = vmax.xlane.f32.xlu0 %v2718
        %v2757 = vpop.xlane.xlu0 %2756
        %2758 = vmax.xlane.f32.xlu0 %v2721
        %v2759 = vpop.xlane.xlu0 %2758
        %2760 = vmax.xlane.f32.xlu0 %v2723
        %v2761 = vpop.xlane.xlu0 %2760
        %2762 = vmax.xlane.f32.xlu0 %v2726
        %v2763 = vpop.xlane.xlu0 %2762
        %2764 = vmax.xlane.f32.xlu0 %v2728
        %v2765 = vpop.xlane.xlu0 %2764
        %2766 = vmax.xlane.f32.xlu0 %v2731
        %v2767 = vpop.xlane.xlu0 %2766
        %2768 = vmax.xlane.f32.xlu0 %v2733
        %v2769 = vpop.xlane.xlu0 %2768
        %2770 = vmax.xlane.f32.xlu0 %v2736
        %v2771 = vpop.xlane.xlu0 %2770
        %2772 = vmax.xlane.f32.xlu0 %v2738
        %v2773 = vpop.xlane.xlu0 %2772
        %2774 = vmax.xlane.f32.xlu0 %v2741
        %v2775 = vpop.xlane.xlu0 %2774
        %2776 = vmax.xlane.f32.xlu0 %v2743
        %v2777 = vpop.xlane.xlu0 %2776
        %2778 = vmax.xlane.f32.xlu0 %v2746
        %v2779 = vpop.xlane.xlu0 %2778
        %2780 = vmax.xlane.f32.xlu0 %v2748
        %v2781 = vpop.xlane.xlu0 %2780
        %v2782 = vsub.f32 %v2711, %v2751
        %v2783 = vsub.f32 %v2713, %v2753
        %v2784 = vsub.f32 %v2716, %v2755
        %v2785 = vsub.f32 %v2718, %v2757
        %v2786 = vsub.f32 %v2721, %v2759
        %v2787 = vsub.f32 %v2723, %v2761
        %v2788 = vsub.f32 %v2726, %v2763
        %v2789 = vsub.f32 %v2728, %v2765
        %v2790 = vsub.f32 %v2731, %v2767
        %v2791 = vsub.f32 %v2733, %v2769
        %v2792 = vsub.f32 %v2736, %v2771
        %v2793 = vsub.f32 %v2738, %v2773
        %v2794 = vsub.f32 %v2741, %v2775
        %v2795 = vsub.f32 %v2743, %v2777
        %v2796 = vsub.f32 %v2746, %v2779
        %v2797 = vsub.f32 %v2748, %v2781
        %v2798 = vmul.f32 %v2782, 1.442695
        %v2799 = vpow.pop %v2798
        %v2800 = vmul.f32 %v2783, 1.442695
        %v2801 = vpow.pop %v2800
        %v2802 = vmul.f32 %v2784, 1.442695
        %v2803 = vpow.pop %v2802
        %v2804 = vmul.f32 %v2785, 1.442695
        %v2805 = vpow.pop %v2804
        %v2806 = vmul.f32 %v2786, 1.442695
        %v2807 = vpow.pop %v2806
        %v2808 = vmul.f32 %v2787, 1.442695
        %v2809 = vpow.pop %v2808
        %v2810 = vmul.f32 %v2788, 1.442695
        %v2811 = vpow.pop %v2810
        %v2812 = vmul.f32 %v2789, 1.442695
        %v2813 = vpow.pop %v2812
        %v2814 = vmul.f32 %v2790, 1.442695
        %v2815 = vpow.pop %v2814
        %v2816 = vmul.f32 %v2791, 1.442695
        %v2817 = vpow.pop %v2816
        %v2818 = vmul.f32 %v2792, 1.442695
        %v2819 = vpow.pop %v2818
        %v2820 = vmul.f32 %v2793, 1.442695
        %v2821 = vpow.pop %v2820
        %v2822 = vmul.f32 %v2794, 1.442695
        %v2823 = vpow.pop %v2822
        %v2824 = vmul.f32 %v2795, 1.442695
        %v2825 = vpow.pop %v2824
        %v2826 = vmul.f32 %v2796, 1.442695
        %v2827 = vpow.pop %v2826
        %v2828 = vmul.f32 %v2797, 1.442695
        %v2829 = vpow.pop %v2828
        %2830 = vadd.xlane.f32.xlu0 %v2799
        %v2831 = vpop.xlane.xlu0 %2830
        %2832 = vadd.xlane.f32.xlu0 %v2801
        %v2833 = vpop.xlane.xlu0 %2832
        %2834 = vadd.xlane.f32.xlu0 %v2803
        %v2835 = vpop.xlane.xlu0 %2834
        %2836 = vadd.xlane.f32.xlu0 %v2805
        %v2837 = vpop.xlane.xlu0 %2836
        %2838 = vadd.xlane.f32.xlu0 %v2807
        %v2839 = vpop.xlane.xlu0 %2838
        %2840 = vadd.xlane.f32.xlu0 %v2809
        %v2841 = vpop.xlane.xlu0 %2840
        %2842 = vadd.xlane.f32.xlu0 %v2811
        %v2843 = vpop.xlane.xlu0 %2842
        %2844 = vadd.xlane.f32.xlu0 %v2813
        %v2845 = vpop.xlane.xlu0 %2844
        %2846 = vadd.xlane.f32.xlu0 %v2815
        %v2847 = vpop.xlane.xlu0 %2846
        %2848 = vadd.xlane.f32.xlu0 %v2817
        %v2849 = vpop.xlane.xlu0 %2848
        %2850 = vadd.xlane.f32.xlu0 %v2819
        %v2851 = vpop.xlane.xlu0 %2850
        %2852 = vadd.xlane.f32.xlu0 %v2821
        %v2853 = vpop.xlane.xlu0 %2852
        %2854 = vadd.xlane.f32.xlu0 %v2823
        %v2855 = vpop.xlane.xlu0 %2854
        %2856 = vadd.xlane.f32.xlu0 %v2825
        %v2857 = vpop.xlane.xlu0 %2856
        %2858 = vadd.xlane.f32.xlu0 %v2827
        %v2859 = vpop.xlane.xlu0 %2858
        %2860 = vadd.xlane.f32.xlu0 %v2829
        %v2861 = vpop.xlane.xlu0 %2860
        %v2862 = vrcp.pop %v2831
        %v2863 = vrcp.pop %v2833
        %v2864 = vrcp.pop %v2835
        %v2865 = vrcp.pop %v2837
        %v2866 = vrcp.pop %v2839
        %v2867 = vrcp.pop %v2841
        %v2868 = vrcp.pop %v2843
        %v2869 = vrcp.pop %v2845
        %v2870 = vrcp.pop %v2847
        %v2871 = vrcp.pop %v2849
        %v2872 = vrcp.pop %v2851
        %v2873 = vrcp.pop %v2853
        %v2874 = vrcp.pop %v2855
        %v2875 = vrcp.pop %v2857
        %v2876 = vrcp.pop %v2859
        %v2877 = vrcp.pop %v2861
        %v2878 = vmul.f32 %v2799, %v2862
        %v2879 = vmul.f32 %v2801, %v2863
        %v2880 = vmul.f32 %v2803, %v2864
        %v2881 = vmul.f32 %v2805, %v2865
        %v2882 = vmul.f32 %v2807, %v2866
        %v2883 = vmul.f32 %v2809, %v2867
        %v2884 = vmul.f32 %v2811, %v2868
        %v2885 = vmul.f32 %v2813, %v2869
        %v2886 = vmul.f32 %v2815, %v2870
        %v2887 = vmul.f32 %v2817, %v2871
        %v2888 = vmul.f32 %v2819, %v2872
        %v2889 = vmul.f32 %v2821, %v2873
        %v2890 = vmul.f32 %v2823, %v2874
        %v2891 = vmul.f32 %v2825, %v2875
        %v2892 = vmul.f32 %v2827, %v2876
        %v2893 = vmul.f32 %v2829, %v2877
        %s2894 = scalar_lea.vmem %s685, 384 [#allocation18]
        %2895 = vst [vmem:[%s2894] sm:$0xff] %v2878
        %2896 = vst [vmem:[%s2894 + $0x8] sm:$0xff] %v2879
        %2897 = vst [vmem:[%s2894 + $0x10] sm:$0xff] %v2880
        %2898 = vst [vmem:[%s2894 + $0x18] sm:$0xff] %v2881
        %2899 = vst [vmem:[%s2894 + $0x20] sm:$0xff] %v2882
        %2900 = vst [vmem:[%s2894 + $0x28] sm:$0xff] %v2883
        %2901 = vst [vmem:[%s2894 + $0x30] sm:$0xff] %v2884
        %2902 = vst [vmem:[%s2894 + $0x38] sm:$0xff] %v2885
        %2903 = vst [vmem:[%s2894 + $0x40] sm:$0xff] %v2886
        %2904 = vst [vmem:[%s2894 + $0x48] sm:$0xff] %v2887
        %2905 = vst [vmem:[%s2894 + $0x50] sm:$0xff] %v2888
        %2906 = vst [vmem:[%s2894 + $0x58] sm:$0xff] %v2889
        %2907 = vst [vmem:[%s2894 + $0x60] sm:$0xff] %v2890
        %2908 = vst [vmem:[%s2894 + $0x68] sm:$0xff] %v2891
        %2909 = vst [vmem:[%s2894 + $0x70] sm:$0xff] %v2892
        %2910 = vst [vmem:[%s2894 + $0x78] sm:$0xff] %v2893
        %v2911 = vpack.c.bf16 %v2879, %v2878
        %v2912 = vpack.c.bf16 %v2881, %v2880
        %v2913 = vpack.c.bf16 %v2883, %v2882
        %v2914 = vpack.c.bf16 %v2885, %v2884
        %v2915 = vpack.c.bf16 %v2887, %v2886
        %v2916 = vpack.c.bf16 %v2889, %v2888
        %v2917 = vpack.c.bf16 %v2891, %v2890
        %v2918 = vpack.c.bf16 %v2893, %v2892
        %2919 = vrot.lane.b32.xlu0 %v1766, 32
        %v2920 = vpop.permute.xlu0 %2919
        %2921 = vrot.lane.b32.xlu0 %v1767, 32
        %v2922 = vpop.permute.xlu0 %2921
        %2923 = vrot.lane.b32.xlu0 %v1768, 32
        %v2924 = vpop.permute.xlu0 %2923
        %2925 = vrot.lane.b32.xlu0 %v1769, 32
        %v2926 = vpop.permute.xlu0 %2925
        %2927 = vrot.lane.b32.xlu0 %v1770, 32
        %v2928 = vpop.permute.xlu0 %2927
        %2929 = vrot.lane.b32.xlu0 %v1771, 32
        %v2930 = vpop.permute.xlu0 %2929
        %2931 = vrot.lane.b32.xlu0 %v1772, 32
        %v2932 = vpop.permute.xlu0 %2931
        %2933 = vrot.lane.b32.xlu0 %v1773, 32
        %v2934 = vpop.permute.xlu0 %2933
        %2943 = vmatpush.bf16.msra.mxu0 %v2934
        %2944 = vmatpush.bf16.msra.mxu0 %v2932
        %2945 = vmatpush.bf16.msra.mxu0 %v2930
        %2946 = vmatpush.bf16.msra.mxu0 %v2928
        %2947 = vmatpush.bf16.msra.mxu0 %v2926
        %2948 = vmatpush.bf16.msra.mxu0 %v2924
        %2949 = vmatpush.bf16.msra.mxu0 %v2922
        %2950 = vmatpush.bf16.msra.mxu0 %v2920
        %2951 = vmatmul.bf16.gmra.mxu0 %v2911
        %v2952 = vpop.f32.mrf.mxu0
        %v2953 = vadd.f32 0.0, %v2952
        %v2954 = vpop.f32.mrf.mxu0
        %v2955 = vadd.f32 0.0, %v2954
        %2956 = vmatmul.bf16.gmra.mxu0 %v2912
        %v2957 = vpop.f32.mrf.mxu0
        %v2958 = vadd.f32 0.0, %v2957
        %v2959 = vpop.f32.mrf.mxu0
        %v2960 = vadd.f32 0.0, %v2959
        %2961 = vmatmul.bf16.gmra.mxu0 %v2913
        %v2962 = vpop.f32.mrf.mxu0
        %v2963 = vadd.f32 0.0, %v2962
        %v2964 = vpop.f32.mrf.mxu0
        %v2965 = vadd.f32 0.0, %v2964
        %2966 = vmatmul.bf16.gmra.mxu0 %v2914
        %v2967 = vpop.f32.mrf.mxu0
        %v2968 = vadd.f32 0.0, %v2967
        %v2969 = vpop.f32.mrf.mxu0
        %v2970 = vadd.f32 0.0, %v2969
        %2971 = vmatmul.bf16.gmra.mxu0 %v2915
        %v2972 = vpop.f32.mrf.mxu0
        %v2973 = vadd.f32 0.0, %v2972
        %v2974 = vpop.f32.mrf.mxu0
        %v2975 = vadd.f32 0.0, %v2974
        %2976 = vmatmul.bf16.gmra.mxu0 %v2916
        %v2977 = vpop.f32.mrf.mxu0
        %v2978 = vadd.f32 0.0, %v2977
        %v2979 = vpop.f32.mrf.mxu0
        %v2980 = vadd.f32 0.0, %v2979
        %2981 = vmatmul.bf16.gmra.mxu0 %v2917
        %v2982 = vpop.f32.mrf.mxu0
        %v2983 = vadd.f32 0.0, %v2982
        %v2984 = vpop.f32.mrf.mxu0
        %v2985 = vadd.f32 0.0, %v2984
        %2986 = vmatmul.bf16.gmra.mxu0 %v2918
        %v2987 = vpop.f32.mrf.mxu0
        %v2988 = vadd.f32 0.0, %v2987
        %v2989 = vpop.f32.mrf.mxu0
        %v2990 = vadd.f32 0.0, %v2989
        %2991 = vdwg.mxu0
        %v2992 = vpack.c.bf16 %v2953, %v2953
        %v2993 = vpack.c.bf16 %v2955, %v2955
        %v2994 = vpack.c.bf16 %v2958, %v2958
        %v2995 = vpack.c.bf16 %v2960, %v2960
        %v2996 = vpack.c.bf16 %v2963, %v2963
        %v2997 = vpack.c.bf16 %v2965, %v2965
        %v2998 = vpack.c.bf16 %v2968, %v2968
        %v2999 = vpack.c.bf16 %v2970, %v2970
        %v3000 = vpack.c.bf16 %v2973, %v2973
        %v3001 = vpack.c.bf16 %v2975, %v2975
        %v3002 = vpack.c.bf16 %v2978, %v2978
        %v3003 = vpack.c.bf16 %v2980, %v2980
        %v3004 = vpack.c.bf16 %v2983, %v2983
        %v3005 = vpack.c.bf16 %v2985, %v2985
        %v3006 = vpack.c.bf16 %v2988, %v2988
        %v3007 = vpack.c.bf16 %v2990, %v2990
        %v3024 = vunpack.c.l.b16 %v1831
        %v3025 = vunpack.c.l.b16 %v1832
        %v3026 = vunpack.c.l.b16 %v1833
        %v3027 = vunpack.c.l.b16 %v1834
        %v3028 = vunpack.c.l.b16 %v1835
        %v3029 = vunpack.c.l.b16 %v1836
        %v3030 = vunpack.c.l.b16 %v1837
        %v3031 = vunpack.c.l.b16 %v1838
        %v3032 = vunpack.c.l.b16 %v1839
        %v3033 = vunpack.c.l.b16 %v1840
        %v3034 = vunpack.c.l.b16 %v1841
        %v3035 = vunpack.c.l.b16 %v1842
        %v3036 = vunpack.c.l.b16 %v1843
        %v3037 = vunpack.c.l.b16 %v1844
        %v3038 = vunpack.c.l.b16 %v1845
        %v3039 = vunpack.c.l.b16 %v1846
        %v3040 = vpack.c.b16 %v3025, %v3024
        %v3041 = vpack.c.b16 %v3027, %v3026
        %v3042 = vpack.c.b16 %v3029, %v3028
        %v3043 = vpack.c.b16 %v3031, %v3030
        %v3044 = vpack.c.b16 %v3033, %v3032
        %v3045 = vpack.c.b16 %v3035, %v3034
        %v3046 = vpack.c.b16 %v3037, %v3036
        %v3047 = vpack.c.b16 %v3039, %v3038
        %v3064 = vunpack.c.l.b16 %v2218
        %v3065 = vunpack.c.l.b16 %v2219
        %v3066 = vunpack.c.l.b16 %v2220
        %v3067 = vunpack.c.l.b16 %v2221
        %v3068 = vunpack.c.l.b16 %v2222
        %v3069 = vunpack.c.l.b16 %v2223
        %v3070 = vunpack.c.l.b16 %v2224
        %v3071 = vunpack.c.l.b16 %v2225
        %v3072 = vunpack.c.l.b16 %v2226
        %v3073 = vunpack.c.l.b16 %v2227
        %v3074 = vunpack.c.l.b16 %v2228
        %v3075 = vunpack.c.l.b16 %v2229
        %v3076 = vunpack.c.l.b16 %v2230
        %v3077 = vunpack.c.l.b16 %v2231
        %v3078 = vunpack.c.l.b16 %v2232
        %v3079 = vunpack.c.l.b16 %v2233
        %v3080 = vpack.c.b16 %v3065, %v3064
        %v3081 = vpack.c.b16 %v3067, %v3066
        %v3082 = vpack.c.b16 %v3069, %v3068
        %v3083 = vpack.c.b16 %v3071, %v3070
        %v3084 = vpack.c.b16 %v3073, %v3072
        %v3085 = vpack.c.b16 %v3075, %v3074
        %v3086 = vpack.c.b16 %v3077, %v3076
        %v3087 = vpack.c.b16 %v3079, %v3078
        %3088 = vrot.lane.b32.xlu0 %v3080, 32
        %v3089 = vpop.permute.xlu0 %3088
        %3090 = vrot.lane.b32.xlu0 %v3081, 32
        %v3091 = vpop.permute.xlu0 %3090
        %3092 = vrot.lane.b32.xlu0 %v3082, 32
        %v3093 = vpop.permute.xlu0 %3092
        %3094 = vrot.lane.b32.xlu0 %v3083, 32
        %v3095 = vpop.permute.xlu0 %3094
        %3096 = vrot.lane.b32.xlu0 %v3084, 32
        %v3097 = vpop.permute.xlu0 %3096
        %3098 = vrot.lane.b32.xlu0 %v3085, 32
        %v3099 = vpop.permute.xlu0 %3098
        %3100 = vrot.lane.b32.xlu0 %v3086, 32
        %v3101 = vpop.permute.xlu0 %3100
        %3102 = vrot.lane.b32.xlu0 %v3087, 32
        %v3103 = vpop.permute.xlu0 %3102
        %v3120 = vunpack.c.l.b16 %v2605
        %v3121 = vunpack.c.l.b16 %v2606
        %v3122 = vunpack.c.l.b16 %v2607
        %v3123 = vunpack.c.l.b16 %v2608
        %v3124 = vunpack.c.l.b16 %v2609
        %v3125 = vunpack.c.l.b16 %v2610
        %v3126 = vunpack.c.l.b16 %v2611
        %v3127 = vunpack.c.l.b16 %v2612
        %v3128 = vunpack.c.l.b16 %v2613
        %v3129 = vunpack.c.l.b16 %v2614
        %v3130 = vunpack.c.l.b16 %v2615
        %v3131 = vunpack.c.l.b16 %v2616
        %v3132 = vunpack.c.l.b16 %v2617
        %v3133 = vunpack.c.l.b16 %v2618
        %v3134 = vunpack.c.l.b16 %v2619
        %v3135 = vunpack.c.l.b16 %v2620
        %v3136 = vpack.c.b16 %v3121, %v3120
        %v3137 = vpack.c.b16 %v3123, %v3122
        %v3138 = vpack.c.b16 %v3125, %v3124
        %v3139 = vpack.c.b16 %v3127, %v3126
        %v3140 = vpack.c.b16 %v3129, %v3128
        %v3141 = vpack.c.b16 %v3131, %v3130
        %v3142 = vpack.c.b16 %v3133, %v3132
        %v3143 = vpack.c.b16 %v3135, %v3134
        %3144 = vrot.lane.b32.xlu0 %v3136, 64
        %v3145 = vpop.permute.xlu0 %3144
        %3146 = vrot.lane.b32.xlu0 %v3137, 64
        %v3147 = vpop.permute.xlu0 %3146
        %3148 = vrot.lane.b32.xlu0 %v3138, 64
        %v3149 = vpop.permute.xlu0 %3148
        %3150 = vrot.lane.b32.xlu0 %v3139, 64
        %v3151 = vpop.permute.xlu0 %3150
        %3152 = vrot.lane.b32.xlu0 %v3140, 64
        %v3153 = vpop.permute.xlu0 %3152
        %3154 = vrot.lane.b32.xlu0 %v3141, 64
        %v3155 = vpop.permute.xlu0 %3154
        %3156 = vrot.lane.b32.xlu0 %v3142, 64
        %v3157 = vpop.permute.xlu0 %3156
        %3158 = vrot.lane.b32.xlu0 %v3143, 64
        %v3159 = vpop.permute.xlu0 %3158
        %v3176 = vunpack.c.l.b16 %v2992
        %v3177 = vunpack.c.l.b16 %v2993
        %v3178 = vunpack.c.l.b16 %v2994
        %v3179 = vunpack.c.l.b16 %v2995
        %v3180 = vunpack.c.l.b16 %v2996
        %v3181 = vunpack.c.l.b16 %v2997
        %v3182 = vunpack.c.l.b16 %v2998
        %v3183 = vunpack.c.l.b16 %v2999
        %v3184 = vunpack.c.l.b16 %v3000
        %v3185 = vunpack.c.l.b16 %v3001
        %v3186 = vunpack.c.l.b16 %v3002
        %v3187 = vunpack.c.l.b16 %v3003
        %v3188 = vunpack.c.l.b16 %v3004
        %v3189 = vunpack.c.l.b16 %v3005
        %v3190 = vunpack.c.l.b16 %v3006
        %v3191 = vunpack.c.l.b16 %v3007
        %v3192 = vpack.c.b16 %v3177, %v3176
        %v3193 = vpack.c.b16 %v3179, %v3178
        %v3194 = vpack.c.b16 %v3181, %v3180
        %v3195 = vpack.c.b16 %v3183, %v3182
        %v3196 = vpack.c.b16 %v3185, %v3184
        %v3197 = vpack.c.b16 %v3187, %v3186
        %v3198 = vpack.c.b16 %v3189, %v3188
        %v3199 = vpack.c.b16 %v3191, %v3190
        %3200 = vrot.lane.b32.xlu0 %v3192, 96
        %v3201 = vpop.permute.xlu0 %3200
        %3202 = vrot.lane.b32.xlu0 %v3193, 96
        %v3203 = vpop.permute.xlu0 %3202
        %3204 = vrot.lane.b32.xlu0 %v3194, 96
        %v3205 = vpop.permute.xlu0 %3204
        %3206 = vrot.lane.b32.xlu0 %v3195, 96
        %v3207 = vpop.permute.xlu0 %3206
        %3208 = vrot.lane.b32.xlu0 %v3196, 96
        %v3209 = vpop.permute.xlu0 %3208
        %3210 = vrot.lane.b32.xlu0 %v3197, 96
        %v3211 = vpop.permute.xlu0 %3210
        %3212 = vrot.lane.b32.xlu0 %v3198, 96
        %v3213 = vpop.permute.xlu0 %3212
        %3214 = vrot.lane.b32.xlu0 %v3199, 96
        %v3215 = vpop.permute.xlu0 %3214
        %v3218 = vsel %vm1468, %v3040, %v3089
        %v3221 = vsel %vm1468, %v3041, %v3091
        %v3224 = vsel %vm1468, %v3042, %v3093
        %v3227 = vsel %vm1468, %v3043, %v3095
        %v3230 = vsel %vm1468, %v3044, %v3097
        %v3233 = vsel %vm1468, %v3045, %v3099
        %v3236 = vsel %vm1468, %v3046, %v3101
        %v3239 = vsel %vm1468, %v3047, %v3103
        %vm3240 = vcmask 523264
        %v3242 = vsel %vm3240, %v3218, %v3145
        %v3244 = vsel %vm3240, %v3221, %v3147
        %v3246 = vsel %vm3240, %v3224, %v3149
        %v3248 = vsel %vm3240, %v3227, %v3151
        %v3250 = vsel %vm3240, %v3230, %v3153
        %v3252 = vsel %vm3240, %v3233, %v3155
        %v3254 = vsel %vm3240, %v3236, %v3157
        %v3256 = vsel %vm3240, %v3239, %v3159
        %vm3257 = vcmask 785408
        %v3259 = vsel %vm3257, %v3242, %v3201
        %v3262 = vsel %vm3257, %v3244, %v3203
        %v3265 = vsel %vm3257, %v3246, %v3205
        %v3268 = vsel %vm3257, %v3248, %v3207
        %v3271 = vsel %vm3257, %v3250, %v3209
        %v3274 = vsel %vm3257, %v3252, %v3211
        %v3277 = vsel %vm3257, %v3254, %v3213
        %v3280 = vsel %vm3257, %v3256, %v3215
        %v3282 = vld [vmem:[#allocation2] sm:$0xff]
        %v3283 = vld [vmem:[#allocation2 + $0x8] sm:$0xff]
        %v3284 = vld [vmem:[#allocation2 + $0x10] sm:$0xff]
        %v3285 = vld [vmem:[#allocation2 + $0x18] sm:$0xff]
        %v3286 = vld [vmem:[#allocation2 + $0x20] sm:$0xff]
        %v3287 = vld [vmem:[#allocation2 + $0x28] sm:$0xff]
        %v3288 = vld [vmem:[#allocation2 + $0x30] sm:$0xff]
        %v3289 = vld [vmem:[#allocation2 + $0x38] sm:$0xff]
        %v3290 = vld [vmem:[#allocation2 + $0x40] sm:$0xff]
        %v3291 = vld [vmem:[#allocation2 + $0x48] sm:$0xff]
        %v3292 = vld [vmem:[#allocation2 + $0x50] sm:$0xff]
        %v3293 = vld [vmem:[#allocation2 + $0x58] sm:$0xff]
        %v3294 = vld [vmem:[#allocation2 + $0x60] sm:$0xff]
        %v3295 = vld [vmem:[#allocation2 + $0x68] sm:$0xff]
        %v3296 = vld [vmem:[#allocation2 + $0x70] sm:$0xff]
        %v3297 = vld [vmem:[#allocation2 + $0x78] sm:$0xff]
        %v3298 = vld [vmem:[#allocation16] sm:$0xf]
        %v3299 = vld [vmem:[#allocation16 + $0x4] sm:$0xf]
        %v3300 = vld [vmem:[#allocation16 + $0x8] sm:$0xf]
        %v3301 = vld [vmem:[#allocation16 + $0xc] sm:$0xf]
        %v3302 = vld [vmem:[#allocation16 + $0x10] sm:$0xf]
        %v3303 = vld [vmem:[#allocation16 + $0x14] sm:$0xf]
        %v3304 = vld [vmem:[#allocation16 + $0x18] sm:$0xf]
        %v3305 = vld [vmem:[#allocation16 + $0x1c] sm:$0xf]
        %v3306 = vld [vmem:[#allocation16 + $0x20] sm:$0xf]
        %v3307 = vld [vmem:[#allocation16 + $0x24] sm:$0xf]
        %v3308 = vld [vmem:[#allocation16 + $0x28] sm:$0xf]
        %v3309 = vld [vmem:[#allocation16 + $0x2c] sm:$0xf]
        %v3310 = vld [vmem:[#allocation16 + $0x30] sm:$0xf]
        %v3311 = vld [vmem:[#allocation16 + $0x34] sm:$0xf]
        %v3312 = vld [vmem:[#allocation16 + $0x38] sm:$0xf]
        %v3313 = vld [vmem:[#allocation16 + $0x3c] sm:$0xf]
        %v3330 = vunpack.c.l.b16 %v3298
        %v3331 = vunpack.c.l.b16 %v3299
        %v3332 = vunpack.c.l.b16 %v3300
        %v3333 = vunpack.c.l.b16 %v3301
        %v3334 = vunpack.c.l.b16 %v3302
        %v3335 = vunpack.c.l.b16 %v3303
        %v3336 = vunpack.c.l.b16 %v3304
        %v3337 = vunpack.c.l.b16 %v3305
        %v3338 = vunpack.c.l.b16 %v3306
        %v3339 = vunpack.c.l.b16 %v3307
        %v3340 = vunpack.c.l.b16 %v3308
        %v3341 = vunpack.c.l.b16 %v3309
        %v3342 = vunpack.c.l.b16 %v3310
        %v3343 = vunpack.c.l.b16 %v3311
        %v3344 = vunpack.c.l.b16 %v3312
        %v3345 = vunpack.c.l.b16 %v3313
        %v3346 = vpack.c.b16 %v3331, %v3330
        %v3347 = vpack.c.b16 %v3333, %v3332
        %v3348 = vpack.c.b16 %v3335, %v3334
        %v3349 = vpack.c.b16 %v3337, %v3336
        %v3350 = vpack.c.b16 %v3339, %v3338
        %v3351 = vpack.c.b16 %v3341, %v3340
        %v3352 = vpack.c.b16 %v3343, %v3342
        %v3353 = vpack.c.b16 %v3345, %v3344
        %3362 = vmatpush.bf16.msra.mxu0 %v3353
        %3363 = vmatpush.bf16.msra.mxu0 %v3352
        %3364 = vmatpush.bf16.msra.mxu0 %v3351
        %3365 = vmatpush.bf16.msra.mxu0 %v3350
        %3366 = vmatpush.bf16.msra.mxu0 %v3349
        %3367 = vmatpush.bf16.msra.mxu0 %v3348
        %3368 = vmatpush.bf16.msra.mxu0 %v3347
        %3369 = vmatpush.bf16.msra.mxu0 %v3346
        %3370 = vmatmul.bf16.gmra.mxu0 %v3259
        %v3371 = vpop.f32.mrf.mxu0
        %v3372 = vadd.f32 0.0, %v3371
        %v3373 = vpop.f32.mrf.mxu0
        %v3374 = vadd.f32 0.0, %v3373
        %3375 = vmatmul.bf16.gmra.mxu0 %v3262
        %v3376 = vpop.f32.mrf.mxu0
        %v3377 = vadd.f32 0.0, %v3376
        %v3378 = vpop.f32.mrf.mxu0
        %v3379 = vadd.f32 0.0, %v3378
        %3380 = vmatmul.bf16.gmra.mxu0 %v3265
        %v3381 = vpop.f32.mrf.mxu0
        %v3382 = vadd.f32 0.0, %v3381
        %v3383 = vpop.f32.mrf.mxu0
        %v3384 = vadd.f32 0.0, %v3383
        %3385 = vmatmul.bf16.gmra.mxu0 %v3268
        %v3386 = vpop.f32.mrf.mxu0
        %v3387 = vadd.f32 0.0, %v3386
        %v3388 = vpop.f32.mrf.mxu0
        %v3389 = vadd.f32 0.0, %v3388
        %3390 = vmatmul.bf16.gmra.mxu0 %v3271
        %v3391 = vpop.f32.mrf.mxu0
        %v3392 = vadd.f32 0.0, %v3391
        %v3393 = vpop.f32.mrf.mxu0
        %v3394 = vadd.f32 0.0, %v3393
        %3395 = vmatmul.bf16.gmra.mxu0 %v3274
        %v3396 = vpop.f32.mrf.mxu0
        %v3397 = vadd.f32 0.0, %v3396
        %v3398 = vpop.f32.mrf.mxu0
        %v3399 = vadd.f32 0.0, %v3398
        %3400 = vmatmul.bf16.gmra.mxu0 %v3277
        %v3401 = vpop.f32.mrf.mxu0
        %v3402 = vadd.f32 0.0, %v3401
        %v3403 = vpop.f32.mrf.mxu0
        %v3404 = vadd.f32 0.0, %v3403
        %3405 = vmatmul.bf16.gmra.mxu0 %v3280
        %v3406 = vpop.f32.mrf.mxu0
        %v3407 = vadd.f32 0.0, %v3406
        %v3408 = vpop.f32.mrf.mxu0
        %v3409 = vadd.f32 0.0, %v3408
        %3410 = vdwg.mxu0
        %v3411 = vadd.f32 %v3282, %v3372
        %v3412 = vadd.f32 %v3283, %v3374
        %v3413 = vadd.f32 %v3284, %v3377
        %v3414 = vadd.f32 %v3285, %v3379
        %v3415 = vadd.f32 %v3286, %v3382
        %v3416 = vadd.f32 %v3287, %v3384
        %v3417 = vadd.f32 %v3288, %v3387
        %v3418 = vadd.f32 %v3289, %v3389
        %v3419 = vadd.f32 %v3290, %v3392
        %v3420 = vadd.f32 %v3291, %v3394
        %v3421 = vadd.f32 %v3292, %v3397
        %v3422 = vadd.f32 %v3293, %v3399
        %v3423 = vadd.f32 %v3294, %v3402
        %v3424 = vadd.f32 %v3295, %v3404
        %v3425 = vadd.f32 %v3296, %v3407
        %v3426 = vadd.f32 %v3297, %v3409
        %3427 = vst [vmem:[#allocation2] sm:$0xff] %v3411
        %3428 = vst [vmem:[#allocation2 + $0x8] sm:$0xff] %v3412
        %3429 = vst [vmem:[#allocation2 + $0x10] sm:$0xff] %v3413
        %3430 = vst [vmem:[#allocation2 + $0x18] sm:$0xff] %v3414
        %3431 = vst [vmem:[#allocation2 + $0x20] sm:$0xff] %v3415
        %3432 = vst [vmem:[#allocation2 + $0x28] sm:$0xff] %v3416
        %3433 = vst [vmem:[#allocation2 + $0x30] sm:$0xff] %v3417
        %3434 = vst [vmem:[#allocation2 + $0x38] sm:$0xff] %v3418
        %3435 = vst [vmem:[#allocation2 + $0x40] sm:$0xff] %v3419
        %3436 = vst [vmem:[#allocation2 + $0x48] sm:$0xff] %v3420
        %3437 = vst [vmem:[#allocation2 + $0x50] sm:$0xff] %v3421
        %3438 = vst [vmem:[#allocation2 + $0x58] sm:$0xff] %v3422
        %3439 = vst [vmem:[#allocation2 + $0x60] sm:$0xff] %v3423
        %3440 = vst [vmem:[#allocation2 + $0x68] sm:$0xff] %v3424
        %3441 = vst [vmem:[#allocation2 + $0x70] sm:$0xff] %v3425
        %3442 = vst [vmem:[#allocation2 + $0x78] sm:$0xff] %v3426
        // Predicated region
        $region101: #{tpu_custom_call.1} parent=63 // pred_check
          %p3443 = pneg %p1368
        $region102: #{tpu_custom_call.1} parent=63 // pred_check_branch
          %3445 = sbr.rel (%p3443) target = $region104
        $region103: #{tpu_custom_call.1} parent=63 // pred_region
          %v3446 = vld [vmem:[#allocation2] sm:$0xff]
          %v3447 = vld [vmem:[#allocation2 + $0x8] sm:$0xff]
          %v3448 = vld [vmem:[#allocation2 + $0x10] sm:$0xff]
          %v3449 = vld [vmem:[#allocation2 + $0x18] sm:$0xff]
          %v3450 = vld [vmem:[#allocation2 + $0x20] sm:$0xff]
          %v3451 = vld [vmem:[#allocation2 + $0x28] sm:$0xff]
          %v3452 = vld [vmem:[#allocation2 + $0x30] sm:$0xff]
          %v3453 = vld [vmem:[#allocation2 + $0x38] sm:$0xff]
          %v3454 = vld [vmem:[#allocation2 + $0x40] sm:$0xff]
          %v3455 = vld [vmem:[#allocation2 + $0x48] sm:$0xff]
          %v3456 = vld [vmem:[#allocation2 + $0x50] sm:$0xff]
          %v3457 = vld [vmem:[#allocation2 + $0x58] sm:$0xff]
          %v3458 = vld [vmem:[#allocation2 + $0x60] sm:$0xff]
          %v3459 = vld [vmem:[#allocation2 + $0x68] sm:$0xff]
          %v3460 = vld [vmem:[#allocation2 + $0x70] sm:$0xff]
          %v3461 = vld [vmem:[#allocation2 + $0x78] sm:$0xff]
          %v3462 = vld [vmem:[%s10] sm:$0x1]
          %v3464 = vperm.slane %v3462, 0
          %v3466 = vadd.f32 %v3446, %v3464
          %v3467 = vadd.f32 %v3447, %v3464
          %v3468 = vadd.f32 %v3448, %v3464
          %v3469 = vadd.f32 %v3449, %v3464
          %v3470 = vadd.f32 %v3450, %v3464
          %v3471 = vadd.f32 %v3451, %v3464
          %v3472 = vadd.f32 %v3452, %v3464
          %v3473 = vadd.f32 %v3453, %v3464
          %v3474 = vadd.f32 %v3454, %v3464
          %v3475 = vadd.f32 %v3455, %v3464
          %v3476 = vadd.f32 %v3456, %v3464
          %v3477 = vadd.f32 %v3457, %v3464
          %v3478 = vadd.f32 %v3458, %v3464
          %v3479 = vadd.f32 %v3459, %v3464
          %v3480 = vadd.f32 %v3460, %v3464
          %v3481 = vadd.f32 %v3461, %v3464
          %3482 = vst [vmem:[%s678] sm:$0xff] %v3466
          %3483 = vst [vmem:[%s678 + $0x8] sm:$0xff] %v3467
          %3484 = vst [vmem:[%s678 + $0x10] sm:$0xff] %v3468
          %3485 = vst [vmem:[%s678 + $0x18] sm:$0xff] %v3469
          %3486 = vst [vmem:[%s678 + $0x20] sm:$0xff] %v3470
          %3487 = vst [vmem:[%s678 + $0x28] sm:$0xff] %v3471
          %3488 = vst [vmem:[%s678 + $0x30] sm:$0xff] %v3472
          %3489 = vst [vmem:[%s678 + $0x38] sm:$0xff] %v3473
          %3490 = vst [vmem:[%s678 + $0x40] sm:$0xff] %v3474
          %3491 = vst [vmem:[%s678 + $0x48] sm:$0xff] %v3475
          %3492 = vst [vmem:[%s678 + $0x50] sm:$0xff] %v3476
          %3493 = vst [vmem:[%s678 + $0x58] sm:$0xff] %v3477
          %3494 = vst [vmem:[%s678 + $0x60] sm:$0xff] %v3478
          %3495 = vst [vmem:[%s678 + $0x68] sm:$0xff] %v3479
          %3496 = vst [vmem:[%s678 + $0x70] sm:$0xff] %v3480
          %3497 = vst [vmem:[%s678 + $0x78] sm:$0xff] %v3481
        $region104: #{tpu_custom_call.1} parent=63 // pred_fallthru
          _
        %s3498 = sand.u32 %s350, 1
        %s3499 = scalar_lea.sflag [#allocation7], %s3498
        %s3500 = sand.u32 %s350, 1
        %s3501 = smul.addr %s3500, 128
        %s3502 = scalar_lea.vmem [#allocation17], %s3501
        %s3503 = sand.u32 %s380, 1
        %s3504 = scalar_lea.sflag [#allocation19], %s3503
        %s3505 = sand.u32 %s380, 1
        %s3506 = smul.addr %s3505, 512
        %s3507 = scalar_lea.vmem [#allocation18], %s3506
        // Predicated region
        $region105: #{tpu_custom_call.1} parent=63 // pred_check
          %p3508 = pneg %p360
        $region106: #{tpu_custom_call.1} parent=63 // pred_check_branch
          %3510 = sbr.rel (%p3508) target = $region108
        $region107: #{tpu_custom_call.1} parent=63 // pred_region
          %s3511 = smul.u32 16, %s44
          %3513 = vsyncadd %s3499, 0
          %s3514 = smul.addr %s43, 16
          %s3515 = sadd.s32 %s3511, %s3514
          %s3516 = smul.addr %s3515, 8
          %s3517 = scalar_lea.hbm %s11, %s3516
          %s3518 = sshll.u32 %s3502, 4
          %s3519 = int_to_ptr.vmem [resolvable:$true] %s3518
          %s3520 = sshll.u32 %s3517, 4
          %s3521 = int_to_ptr.hbm [resolvable:$true] %s3520
          %3526 = dma.vmem_to_hbm [thread:$0]  %s3519, 2048, %s3521, %s3499, 128, 128, 8
        $region108: #{tpu_custom_call.1} parent=63 // pred_fallthru
          _
        // Predicated region
        $region109: #{tpu_custom_call.1} parent=63 // pred_check
          %p3527 = pneg %p390
        $region110: #{tpu_custom_call.1} parent=63 // pred_check_branch
          %3529 = sbr.rel (%p3527) target = $region112
        $region111: #{tpu_custom_call.1} parent=63 // pred_region
          %s3530 = smul.u32 4, %s45
          %s3531 = smul.u32 16, %s44
          %3533 = vsyncadd %s3504, 0
          %s3534 = smul.addr %s3530, 16
          %s3535 = sadd.s32 %s3531, %s3534
          %s3536 = smul.addr %s43, 64
          %s3537 = sadd.s32 %s3535, %s3536
          %s3538 = smul.addr %s3537, 8
          %s3539 = scalar_lea.hbm %s12, %s3538
          %s3540 = sshll.u32 %s3507, 4
          %s3541 = int_to_ptr.vmem [resolvable:$true] %s3540
          %s3542 = sshll.u32 %s3539, 4
          %s3543 = int_to_ptr.hbm [resolvable:$true] %s3542
          %3548 = dma.vmem_to_hbm [thread:$0]  %s3541, 8192, %s3543, %s3504, 128, 128, 8
        $region112: #{tpu_custom_call.1} parent=63 // pred_fallthru
          _
      $region64: #{tpu_custom_call.1} parent=5 // pred_fallthru
        _
      %p3549 = scmp.le.s32.totalorder 2, %s33
      // Predicated region
      $region113: #{tpu_custom_call.1} parent=5 // pred_check
        %p3550 = pneg %p3549
      $region114: #{tpu_custom_call.1} parent=5 // pred_check_branch
        %3552 = sbr.rel (%p3550) target = $region116
      $region115: #{tpu_custom_call.1} parent=5 // pred_region
        %s3553 = ssub.s32 %s33, 2
        // Predicated region
        $region117: #{tpu_custom_call.1} parent=115 // pred_check
          %p3554 = pneg %p366
        $region118: #{tpu_custom_call.1} parent=115 // pred_check_branch
          %3556 = sbr.rel (%p3554) target = $region120
        $region119: #{tpu_custom_call.1} parent=115 // pred_region
          %s3557 = sand.u32 %s351, 1
          %s3558 = scalar_lea.sflag [#allocation7], %s3557
          %s3559 = sand.u32 %s351, 1
          %s3560 = smul.addr %s3559, 128
          %s3561 = scalar_lea.vmem [#allocation17], %s3560
          %3563 = dma.done %s3558, 2048
        $region120: #{tpu_custom_call.1} parent=115 // pred_fallthru
          _
        // Predicated region
        $region121: #{tpu_custom_call.1} parent=115 // pred_check
          %p3564 = pneg %p396
        $region122: #{tpu_custom_call.1} parent=115 // pred_check_branch
          %3566 = sbr.rel (%p3564) target = $region124
        $region123: #{tpu_custom_call.1} parent=115 // pred_region
          %s3567 = sand.u32 %s381, 1
          %s3568 = scalar_lea.sflag [#allocation19], %s3567
          %s3569 = sand.u32 %s381, 1
          %s3570 = smul.addr %s3569, 512
          %s3571 = scalar_lea.vmem [#allocation18], %s3570
          %3573 = dma.done %s3568, 8192
        $region124: #{tpu_custom_call.1} parent=115 // pred_fallthru
          _
      $region116: #{tpu_custom_call.1} parent=5 // pred_fallthru
        _
    $region6: #{tpu_custom_call.1} parent=1 // loop_footer
      %s37 = sadd.s32 1, %s33
    $region7: #{tpu_custom_call.1} parent=1 // loop_footer_branch
      %32 = sbr.rel target = $region3
    $region8: #{tpu_custom_call.1} parent=1 // loop_exit
      _
    %3574 = vsyncpa [#allocation6], 1
    %s3575 = scalar_lea.sflag [#allocation6], 1
    %3576 = vsyncpa %s3575, 1
    %3577 = vsyncpa [#allocation9], 1
    %s3578 = scalar_lea.sflag [#allocation9], 1
    %3579 = vsyncpa %s3578, 1
    %3580 = vsyncpa [#allocation12], 1
    %3581 = vsyncpa [#allocation15], 1
    %3582 = vsyncpa [#allocation7], 1
    %s3583 = scalar_lea.sflag [#allocation7], 1
    %3584 = vsyncpa %s3583, 1
    %3585 = vsyncpa [#allocation19], 1
    %s3586 = scalar_lea.sflag [#allocation19], 1
    %3587 = vsyncpa %s3586, 1

</llo_original>
